<compile_context>
chip_gen: v7x
topology: tpu7x:2x2x1
jax: 0.10.0
libtpu: 0.0.40
codegen_flags: <defaults>
</compile_context>

<pallas_src>
import numpy as np
import jax
import jax.numpy as jnp
from jax import lax
from jax.experimental import pallas as pl
from jax.experimental.pallas import tpu as pltpu

# ---------------------------------------------------------------------------
# Static marching-cubes style tables (plain numpy, built once at import time)
# ---------------------------------------------------------------------------

_CORNERS = np.array(
    [(0, 0, 0), (1, 0, 0), (1, 1, 0), (0, 1, 0),
     (0, 0, 1), (1, 0, 1), (1, 1, 1), (0, 1, 1)], dtype=np.int32)
_EDGES = [(0, 1), (1, 2), (2, 3), (3, 0),
          (4, 5), (5, 6), (6, 7), (7, 4),
          (0, 4), (1, 5), (2, 6), (3, 7)]


def _corner_index(coord):
    for i, c in enumerate(_CORNERS):
        if tuple(int(v) for v in c) == tuple(int(v) for v in coord):
            return i
    raise ValueError(coord)


def _edge_of(corner, axis):
    """Index (0..11) of the cube edge incident to `corner` along `axis`."""
    other = list(_CORNERS[corner])
    other[axis] ^= 1
    o = _corner_index(other)
    for e, (a, b) in enumerate(_EDGES):
        if {a, b} == {corner, o}:
            return e
    raise ValueError((corner, axis))


def _build_topologies():
    def code(cs):
        return int(sum(1 << int(c) for c in cs))

    def tri_single(v):
        return [[_edge_of(v, 0), _edge_of(v, 1), _edge_of(v, 2)]]

    def tri_pair(u, v):
        d = int(np.nonzero(_CORNERS[u] != _CORNERS[v])[0][0])
        d1, d2 = [a for a in range(3) if a != d]
        q = [_edge_of(v, d1), _edge_of(u, d1), _edge_of(u, d2), _edge_of(v, d2)]
        return [[q[0], q[1], q[2]], [q[0], q[2], q[3]]]

    def tri_face(axis, val):
        face = [c for c in range(8) if _CORNERS[c][axis] == val]
        cyc, rest = [face[0]], face[1:]
        while rest:
            cur = cyc[-1]
            nxt = next(c for c in rest
                       if int(np.abs(_CORNERS[c] - _CORNERS[cur]).sum()) == 1)
            cyc.append(nxt)
            rest.remove(nxt)
        q = [_edge_of(c, axis) for c in cyc]
        return [[q[0], q[1], q[2]], [q[0], q[2], q[3]]]

    entries = {0: [], 255: []}
    for v in range(8):
        entries[code([v])] = tri_single(v)
        entries[255 ^ code([v])] = tri_single(v)
    for (u, v) in _EDGES:
        entries[code([u, v])] = tri_pair(u, v)
        entries[255 ^ code([u, v])] = tri_pair(u, v)
    for axis in range(3):
        for val in (0, 1):
            face = [c for c in range(8) if _CORNERS[c][axis] == val]
            entries[code(face)] = tri_face(axis, val)
    codes = sorted(entries.keys())
    assert len(codes) == 48, len(codes)
    return codes, [entries[c] for c in codes]


T = 48          # number of accepted topologies  (output width)
MAXT = 2        # max triangles per accepted topology (padded slots)
NT = MAXT * T   # flattened (triangle-slot, topology) axis, slot-major

_CODES, _TRIS = _build_topologies()

_TRI_EDGE = np.zeros((MAXT, T, 3), np.int32)
_TRI_VALID = np.zeros((MAXT, T), np.bool_)
for _t, _tris in enumerate(_TRIS):
    for _j, _tri in enumerate(_tris):
        _TRI_EDGE[_j, _t] = _tri
        _TRI_VALID[_j, _t] = True
_TOPO_HAS_TRI = np.array([1.0 if len(tr) > 0 else 0.0 for tr in _TRIS], np.float32)

# per cube-edge: (base grid-vertex offset within the cell, axis of the edge)
_EDGE_BASE = []
for (_a, _b) in _EDGES:
    _ca, _cb = _CORNERS[_a], _CORNERS[_b]
    _axis = int(np.nonzero(_ca != _cb)[0][0])
    _base = _ca if _ca[_axis] < _cb[_axis] else _cb
    _EDGE_BASE.append((int(_base[0]), int(_base[1]), int(_base[2]), _axis))

_FAR = 1.0e6    # sentinel position for padded (invalid) triangle slots
_EPS = 1.0e-12

# kernel tiling constants
CB = 8          # cells per grid step
PC = 128        # points per chunk (DMA granularity, lane-aligned)
PSUB = 8        # points per inner iteration (sublane axis)
NC = 35         # precomputed per-slot constant rows (see column map below)

# triangle-constant column map (rows of the per-cell constant block):
#  0:3 A | 3:6 B | 6:9 C | 9:12 n | 12 inv_nn | 13:16 n x e1 | 16:19 n x e3 |
#  19:22 n x e4 | 22:25 e1 | 25:28 e3 | 28:31 e4 | 31 inv|e1|^2 | 32 inv|e3|^2 |
#  33 inv|e4|^2 | 34 valid(nn>eps)


# ---------------------------------------------------------------------------
# Wrapper-side precompute: offsets -> per-cell per-slot triangle constants
# ---------------------------------------------------------------------------

def _triangle_constants(offset):
    """offset (3, W+1, H+1, D+1) -> (cells, NT, NC) fused triangle constants."""
    W = offset.shape[1] - 1
    H = offset.shape[2] - 1
    D = offset.shape[3] - 1

    xs = jnp.arange(W, dtype=jnp.float32)
    ys = jnp.arange(H, dtype=jnp.float32)
    zs = jnp.arange(D, dtype=jnp.float32)

    verts = []
    for e in range(12):
        bx, by, bz, a = _EDGE_BASE[e]
        # static slice instead of an advanced-index gather
        off_e = lax.slice(offset, (a, bx, by, bz),
                          (a + 1, bx + W, by + H, bz + D))[0]          # (W, H, D)
        gx = jnp.broadcast_to((xs + bx)[:, None, None], (W, H, D))
        gy = jnp.broadcast_to((ys + by)[None, :, None], (W, H, D))
        gz = jnp.broadcast_to((zs + bz)[None, None, :], (W, H, D))
        if a == 0:
            gx = gx + 0.5 + off_e
        elif a == 1:
            gy = gy + 0.5 + off_e
        else:
            gz = gz + 0.5 + off_e
        verts.append(jnp.stack([gx, gy, gz], axis=-1))
    verts = jnp.stack(verts, axis=3).reshape(W * H * D, 12, 3)          # (cells, 12, 3)

    idx = _TRI_EDGE.reshape(NT, 3)
    valid = jnp.asarray(_TRI_VALID.reshape(NT))
    A = verts[:, idx[:, 0], :]
    B = verts[:, idx[:, 1], :]
    C = verts[:, idx[:, 2], :]
    m = valid[None, :, None]
    A = jnp.where(m, A, _FAR)
    B = jnp.where(m, B, _FAR)
    C = jnp.where(m, C, _FAR)

    e1 = B - A
    e2 = C - A
    e3 = C - B
    e4 = A - C
    n = jnp.cross(e1, e2)
    nn = jnp.sum(n * n, axis=-1, keepdims=True)
    inv_nn = 1.0 / jnp.maximum(nn, _EPS)
    m1 = jnp.cross(n, e1)
    m2 = jnp.cross(n, e3)
    m3 = jnp.cross(n, e4)
    d1 = jnp.sum(e1 * e1, axis=-1, keepdims=True)
    d3 = jnp.sum(e3 * e3, axis=-1, keepdims=True)
    d4 = jnp.sum(e4 * e4, axis=-1, keepdims=True)
    inv_d1 = 1.0 / jnp.maximum(d1, _EPS)
    inv_d3 = 1.0 / jnp.maximum(d3, _EPS)
    inv_d4 = 1.0 / jnp.maximum(d4, _EPS)
    vld = (nn > _EPS).astype(jnp.float32)

    tc = jnp.concatenate([A, B, C, n, inv_nn, m1, m2, m3, e1, e3, e4,
                          inv_d1, inv_d3, inv_d4, vld], axis=-1)        # (cells, NT, NC)
    return tc, (W, H, D)


# ---------------------------------------------------------------------------
# Pallas kernel
# ---------------------------------------------------------------------------

def _pt_tri_kernel(c0_ref, nch_ref, tri_ref, pts_ref, o_ref):
    """Per grid step: CB cells x one point chunk of PC points (skipped if unused)."""
    cb = pl.program_id(0)
    j = pl.program_id(1)

    @pl.when(j == 0)
    def _():
        o_ref[...] = jnp.zeros_like(o_ref)

    @pl.when(j < nch_ref[cb])
    def _():
        for ci in range(CB):
            base = ci * NC

            def row(k):
                r = base + k
                return tri_ref[r:r + 1, :]                      # (1, NT) static row

            ax, ay, az = row(0), row(1), row(2)
            bx, by, bz = row(3), row(4), row(5)
            cx, cy, cz = row(6), row(7), row(8)
            nx, ny, nz = row(9), row(10), row(11)
            inn = row(12)
            m1x, m1y, m1z = row(13), row(14), row(15)
            m2x, m2y, m2z = row(16), row(17), row(18)
            m3x, m3y, m3z = row(19), row(20), row(21)
            e1x, e1y, e1z = row(22), row(23), row(24)
            e3x, e3y, e3z = row(25), row(26), row(27)
            e4x, e4y, e4z = row(28), row(29), row(30)
            id1, id3, id4 = row(31), row(32), row(33)
            vld = row(34) > 0.5                                  # (1, NT) bool

            cell_f = (cb * CB + ci).astype(jnp.float32)

            def body(s, acc):
                off = pl.multiple_of(s * PSUB, PSUB)
                pblk = pts_ref[pl.ds(off, PSUB), :]              # (PSUB, 4)
                px = pblk[:, 0:1]
                py = pblk[:, 1:2]
                pz = pblk[:, 2:3]
                inside = (pblk[:, 3:4] == cell_f).astype(jnp.float32)   # (PSUB, 1)

                # vectors from triangle corners to points -> (PSUB, NT)
                wx, wy, wz = px - ax, py - ay, pz - az
                ux, uy, uz = px - bx, py - by, pz - bz
                vx, vy, vz = px - cx, py - cy, pz - cz

                wn = wx * nx + wy * ny + wz * nz
                plane = wn * wn * inn                            # squared plane distance

                # same-side tests via precomputed n x e
                s1 = wx * m1x + wy * m1y + wz * m1z
                s2 = ux * m2x + uy * m2y + uz * m2z
                s3 = vx * m3x + vy * m3y + vz * m3z
                in_tri = (s1 >= 0.0) & (s2 >= 0.0) & (s3 >= 0.0) & vld

                def seg(qx, qy, qz, ex, ey, ez, idd):
                    t = jnp.clip((qx * ex + qy * ey + qz * ez) * idd, 0.0, 1.0)
                    rx = qx - t * ex
                    ry = qy - t * ey
                    rz = qz - t * ez
                    return rx * rx + ry * ry + rz * rz

                ed = jnp.minimum(
                    seg(wx, wy, wz, e1x, e1y, e1z, id1),
                    jnp.minimum(seg(ux, uy, uz, e3x, e3y, e3z, id3),
                                seg(vx, vy, vz, e4x, e4y, e4z, id4)))

                d2 = jnp.where(in_tri, plane, ed)                # (PSUB, NT)
                # min over the two triangle slots (slot-major layout), then one sqrt
                d2min = jnp.minimum(d2[:, 0:T], d2[:, T:NT])     # (PSUB, T)
                return acc + jnp.sqrt(d2min) * inside

            acc = lax.fori_loop(0, PC // PSUB, body,
                                jnp.zeros((PSUB, T), jnp.float32))
            o_ref[ci:ci + 1, :] += jnp.sum(acc, axis=0, keepdims=True)


# ---------------------------------------------------------------------------
# Wrapper: bucketing, scalar prefetch bookkeeping and pallas_call
# ---------------------------------------------------------------------------

def point_triangle_distance(offset, points):
    """Forward of PointTriangleDistance: returns distances_full [W*H*D, 48]."""
    offset = offset.astype(jnp.float32)
    points = points.astype(jnp.float32)

    tc, (W, H, D) = _triangle_constants(offset)                  # (cells, NT, NC)
    cells = W * H * D
    cells_pad = ((cells + CB - 1) // CB) * CB
    nblk = cells_pad // CB

    tc = jnp.pad(tc, ((0, cells_pad - cells), (0, 0), (0, 0)))
    # per-cell constant rows on sublanes, triangle slots on lanes
    tri_flat = jnp.transpose(tc, (0, 2, 1)).reshape(cells_pad * NC, NT)

    # ---- bucket points by cell ------------------------------------------
    n = points.shape[0]
    n_pad = max(PC, ((n + PC - 1) // PC) * PC)
    nchunks = n_pad // PC

    fl = jnp.floor(points)
    ii = fl.astype(jnp.int32)
    ok = ((fl[:, 0] >= 0.0) & (ii[:, 0] < W) &
          (fl[:, 1] >= 0.0) & (ii[:, 1] < H) &
          (fl[:, 2] >= 0.0) & (ii[:, 2] < D))
    cid = ii[:, 0] * (H * D) + ii[:, 1] * D + ii[:, 2]
    cid = jnp.where(ok, cid, cells_pad).astype(jnp.int32)        # sentinel sorts last

    order = jnp.argsort(cid)
    p_sorted = points[order]
    c_sorted = cid[order]

    p_sorted = jnp.pad(p_sorted, ((0, n_pad - n), (0, 0)))
    c_sorted = jnp.pad(c_sorted, ((0, n_pad - n),), constant_values=cells_pad)
    pts_flat = jnp.concatenate(
        [p_sorted, c_sorted[:, None].astype(jnp.float32)], axis=1)      # (n_pad, 4)

    # per cell-block sorted-point ranges -> first chunk index + chunk count
    bounds = jnp.arange(nblk + 1, dtype=jnp.int32) * CB
    edges = jnp.searchsorted(c_sorted, bounds, side="left").astype(jnp.int32)
    lo, hi = edges[:-1], edges[1:]
    has = hi > lo
    chunk0 = jnp.where(has, lo // PC, 0).astype(jnp.int32)
    nch = jnp.where(has, (hi - 1) // PC - lo // PC + 1, 0).astype(jnp.int32)

    # ---- pallas call ------------------------------------------------------
    def tri_map(cb, j, c0_ref, nch_ref):
        return (cb, 0)

    def pts_map(cb, j, c0_ref, nch_ref):
        last = jnp.maximum(nch_ref[cb] - 1, 0)
        return (c0_ref[cb] + jnp.minimum(j, last), 0)

    def out_map(cb, j, c0_ref, nch_ref):
        return (cb, 0)

    out = pl.pallas_call(
        _pt_tri_kernel,
        out_shape=jax.ShapeDtypeStruct((cells_pad, T), jnp.float32),
        grid_spec=pltpu.PrefetchScalarGridSpec(
            num_scalar_prefetch=2,
            grid=(nblk, nchunks),
            in_specs=[
                pl.BlockSpec((CB * NC, NT), tri_map),
                pl.BlockSpec((PC, 4), pts_map),
            ],
            out_specs=pl.BlockSpec((CB, T), out_map),
        ),
        compiler_params=pltpu.CompilerParams(
            dimension_semantics=("parallel", "arbitrary")),
    )(chunk0, nch, tri_flat, pts_flat)

    topo_mask = jnp.asarray(_TOPO_HAS_TRI)[None, :]              # zero empty topologies
    return out[:cells] * topo_mask


# ---------------------------------------------------------------------------
# Demo / smoke test
# ---------------------------------------------------------------------------

if __name__ == "__main__":
    key = jax.random.PRNGKey(0)
    k_off, k_pts = jax.random.split(key)

    # offset grid (W+1, H+1, D+1) = (5, 5, 5)  ->  4*4*4 = 64 cells; 50 points
    W1 = H1 = D1 = 5
    n_points = 50

    offset = 0.2 * jax.random.normal(k_off, (3, W1, H1, D1), dtype=jnp.float32)
    points = jax.random.uniform(k_pts, (n_points, 3), dtype=jnp.float32,
                                minval=0.0, maxval=float(W1 - 1))

    fn = jax.jit(point_triangle_distance)
    dist = jax.block_until_ready(fn(offset, points))

    assert dist.shape == ((W1 - 1) * (H1 - 1) * (D1 - 1), T), dist.shape
    assert bool(jnp.isfinite(dist).all())
    assert bool((dist >= 0.0).all())
    print("KERNEL_OK")
</pallas_src>

<mosaic_0001>
module attributes {stable_mosaic.version = 11 : i64} {
  func.func @_pt_tri_kernel(%arg0: i32, %arg1: i32, %arg2: memref<8xi32, #tpu.memory_space<smem>>, %arg3: memref<8xi32, #tpu.memory_space<smem>>, %arg4: memref<280x96xf32, #tpu.memory_space<vmem>>, %arg5: memref<128x4xf32, #tpu.memory_space<vmem>>, %arg6: memref<8x48xf32, #tpu.memory_space<vmem>>) attributes {dimension_semantics = [#tpu.dimension_semantics<parallel>, #tpu.dimension_semantics<arbitrary>], iteration_bounds = array<i64: 8, 1>, scalar_prefetch = 2 : i64, scratch_operands = 0 : i64, tpu.core_type = #tpu.core_type<tc>, window_params = [{transform_indices = @transform_0, window_bounds = array<i64: 280, 96>}, {transform_indices = @transform_1, window_bounds = array<i64: 128, 4>}, {transform_indices = @transform_2, window_bounds = array<i64: 8, 48>}]} {
    %c0_i32 = arith.constant 0 : i32
    %0 = arith.cmpi eq, %arg1, %c0_i32 : i32
    %1 = arith.extui %0 : i1 to i32
    %c0_i32_0 = arith.constant 0 : i32
    %2 = arith.cmpi ne, %1, %c0_i32_0 : i32
    scf.if %2 {
      %cst = arith.constant 0.000000e+00 : f32
      %8 = vector.broadcast %cst : f32 to vector<8x48xf32>
      %c0 = arith.constant 0 : index
      %c0_2 = arith.constant 0 : index
      %9 = vector.load %arg6[%c0, %c0_2] : memref<8x48xf32, #tpu.memory_space<vmem>>, vector<8x48xf32>
      tpu.vector_store %arg6[%c0, %c0_2], %8 {strides = array<i32>} : memref<8x48xf32, #tpu.memory_space<vmem>>, vector<8x48xf32>,
    } else {
    }
    %3 = arith.index_cast %arg0 : i32 to index
    %4 = memref.load %arg3[%3] : memref<8xi32, #tpu.memory_space<smem>>
    %5 = arith.cmpi slt, %arg1, %4 : i32
    %6 = arith.extui %5 : i1 to i32
    %c0_i32_1 = arith.constant 0 : i32
    %7 = arith.cmpi ne, %6, %c0_i32_1 : i32
    scf.if %7 {
      %c0 = arith.constant 0 : index
      %c0_2 = arith.constant 0 : index
      %8 = vector.load %arg4[%c0, %c0_2] : memref<280x96xf32, #tpu.memory_space<vmem>>, vector<1x96xf32>
      %c1 = arith.constant 1 : index
      %c0_3 = arith.constant 0 : index
      %9 = vector.load %arg4[%c1, %c0_3] : memref<280x96xf32, #tpu.memory_space<vmem>>, vector<1x96xf32>
      %c2 = arith.constant 2 : index
      %c0_4 = arith.constant 0 : index
      %10 = vector.load %arg4[%c2, %c0_4] : memref<280x96xf32, #tpu.memory_space<vmem>>, vector<1x96xf32>
      %c3 = arith.constant 3 : index
      %c0_5 = arith.constant 0 : index
      %11 = vector.load %arg4[%c3, %c0_5] : memref<280x96xf32, #tpu.memory_space<vmem>>, vector<1x96xf32>
      %c4 = arith.constant 4 : index
      %c0_6 = arith.constant 0 : index
      %12 = vector.load %arg4[%c4, %c0_6] : memref<280x96xf32, #tpu.memory_space<vmem>>, vector<1x96xf32>
      %c5 = arith.constant 5 : index
      %c0_7 = arith.constant 0 : index
      %13 = vector.load %arg4[%c5, %c0_7] : memref<280x96xf32, #tpu.memory_space<vmem>>, vector<1x96xf32>
      %c6 = arith.constant 6 : index
      %c0_8 = arith.constant 0 : index
      %14 = vector.load %arg4[%c6, %c0_8] : memref<280x96xf32, #tpu.memory_space<vmem>>, vector<1x96xf32>
      %c7 = arith.constant 7 : index
      %c0_9 = arith.constant 0 : index
      %15 = vector.load %arg4[%c7, %c0_9] : memref<280x96xf32, #tpu.memory_space<vmem>>, vector<1x96xf32>
      %c8 = arith.constant 8 : index
      %c0_10 = arith.constant 0 : index
      %16 = vector.load %arg4[%c8, %c0_10] : memref<280x96xf32, #tpu.memory_space<vmem>>, vector<1x96xf32>
      %c9 = arith.constant 9 : index
      %c0_11 = arith.constant 0 : index
      %17 = vector.load %arg4[%c9, %c0_11] : memref<280x96xf32, #tpu.memory_space<vmem>>, vector<1x96xf32>
      %c10 = arith.constant 10 : index
      %c0_12 = arith.constant 0 : index
      %18 = vector.load %arg4[%c10, %c0_12] : memref<280x96xf32, #tpu.memory_space<vmem>>, vector<1x96xf32>
      %c11 = arith.constant 11 : index
      %c0_13 = arith.constant 0 : index
      %19 = vector.load %arg4[%c11, %c0_13] : memref<280x96xf32, #tpu.memory_space<vmem>>, vector<1x96xf32>
      %c12 = arith.constant 12 : index
      %c0_14 = arith.constant 0 : index
      %20 = vector.load %arg4[%c12, %c0_14] : memref<280x96xf32, #tpu.memory_space<vmem>>, vector<1x96xf32>
      %c13 = arith.constant 13 : index
      %c0_15 = arith.constant 0 : index
      %21 = vector.load %arg4[%c13, %c0_15] : memref<280x96xf32, #tpu.memory_space<vmem>>, vector<1x96xf32>
      %c14 = arith.constant 14 : index
      %c0_16 = arith.constant 0 : index
      %22 = vector.load %arg4[%c14, %c0_16] : memref<280x96xf32, #tpu.memory_space<vmem>>, vector<1x96xf32>
      %c15 = arith.constant 15 : index
      %c0_17 = arith.constant 0 : index
      %23 = vector.load %arg4[%c15, %c0_17] : memref<280x96xf32, #tpu.memory_space<vmem>>, vector<1x96xf32>
      %c16 = arith.constant 16 : index
      %c0_18 = arith.constant 0 : index
      %24 = vector.load %arg4[%c16, %c0_18] : memref<280x96xf32, #tpu.memory_space<vmem>>, vector<1x96xf32>
      %c17 = arith.constant 17 : index
      %c0_19 = arith.constant 0 : index
      %25 = vector.load %arg4[%c17, %c0_19] : memref<280x96xf32, #tpu.memory_space<vmem>>, vector<1x96xf32>
      %c18 = arith.constant 18 : index
      %c0_20 = arith.constant 0 : index
      %26 = vector.load %arg4[%c18, %c0_20] : memref<280x96xf32, #tpu.memory_space<vmem>>, vector<1x96xf32>
      %c19 = arith.constant 19 : index
      %c0_21 = arith.constant 0 : index
      %27 = vector.load %arg4[%c19, %c0_21] : memref<280x96xf32, #tpu.memory_space<vmem>>, vector<1x96xf32>
      %c20 = arith.constant 20 : index
      %c0_22 = arith.constant 0 : index
      %28 = vector.load %arg4[%c20, %c0_22] : memref<280x96xf32, #tpu.memory_space<vmem>>, vector<1x96xf32>
      %c21 = arith.constant 21 : index
      %c0_23 = arith.constant 0 : index
      %29 = vector.load %arg4[%c21, %c0_23] : memref<280x96xf32, #tpu.memory_space<vmem>>, vector<1x96xf32>
      %c22 = arith.constant 22 : index
      %c0_24 = arith.constant 0 : index
      %30 = vector.load %arg4[%c22, %c0_24] : memref<280x96xf32, #tpu.memory_space<vmem>>, vector<1x96xf32>
      %c23 = arith.constant 23 : index
      %c0_25 = arith.constant 0 : index
      %31 = vector.load %arg4[%c23, %c0_25] : memref<280x96xf32, #tpu.memory_space<vmem>>, vector<1x96xf32>
      %c24 = arith.constant 24 : index
      %c0_26 = arith.constant 0 : index
      %32 = vector.load %arg4[%c24, %c0_26] : memref<280x96xf32, #tpu.memory_space<vmem>>, vector<1x96xf32>
      %c25 = arith.constant 25 : index
      %c0_27 = arith.constant 0 : index
      %33 = vector.load %arg4[%c25, %c0_27] : memref<280x96xf32, #tpu.memory_space<vmem>>, vector<1x96xf32>
      %c26 = arith.constant 26 : index
      %c0_28 = arith.constant 0 : index
      %34 = vector.load %arg4[%c26, %c0_28] : memref<280x96xf32, #tpu.memory_space<vmem>>, vector<1x96xf32>
      %c27 = arith.constant 27 : index
      %c0_29 = arith.constant 0 : index
      %35 = vector.load %arg4[%c27, %c0_29] : memref<280x96xf32, #tpu.memory_space<vmem>>, vector<1x96xf32>
      %c28 = arith.constant 28 : index
      %c0_30 = arith.constant 0 : index
      %36 = vector.load %arg4[%c28, %c0_30] : memref<280x96xf32, #tpu.memory_space<vmem>>, vector<1x96xf32>
      %c29 = arith.constant 29 : index
      %c0_31 = arith.constant 0 : index
      %37 = vector.load %arg4[%c29, %c0_31] : memref<280x96xf32, #tpu.memory_space<vmem>>, vector<1x96xf32>
      %c30 = arith.constant 30 : index
      %c0_32 = arith.constant 0 : index
      %38 = vector.load %arg4[%c30, %c0_32] : memref<280x96xf32, #tpu.memory_space<vmem>>, vector<1x96xf32>
      %c31 = arith.constant 31 : index
      %c0_33 = arith.constant 0 : index
      %39 = vector.load %arg4[%c31, %c0_33] : memref<280x96xf32, #tpu.memory_space<vmem>>, vector<1x96xf32>
      %c32 = arith.constant 32 : index
      %c0_34 = arith.constant 0 : index
      %40 = vector.load %arg4[%c32, %c0_34] : memref<280x96xf32, #tpu.memory_space<vmem>>, vector<1x96xf32>
      %c33 = arith.constant 33 : index
      %c0_35 = arith.constant 0 : index
      %41 = vector.load %arg4[%c33, %c0_35] : memref<280x96xf32, #tpu.memory_space<vmem>>, vector<1x96xf32>
      %c34 = arith.constant 34 : index
      %c0_36 = arith.constant 0 : index
      %42 = vector.load %arg4[%c34, %c0_36] : memref<280x96xf32, #tpu.memory_space<vmem>>, vector<1x96xf32>
      %cst = arith.constant 5.000000e-01 : f32
      %43 = vector.broadcast %cst : f32 to vector<1x96xf32>
      %44 = arith.cmpf ogt, %42, %43 : vector<1x96xf32>
      %c8_i32 = arith.constant 8 : i32
      %45 = arith.muli %arg0, %c8_i32 : i32
      %c0_i32_37 = arith.constant 0 : i32
      %46 = arith.addi %45, %c0_i32_37 : i32
      %47 = arith.sitofp %46 : i32 to f32
      %cst_38 = arith.constant 0.000000e+00 : f32
      %48 = vector.broadcast %cst_38 : f32 to vector<8x48xf32>
      %c0_i32_39 = arith.constant 0 : i32
      %c16_i32 = arith.constant 16 : i32
      %49 = arith.addi %c0_i32_39, %c16_i32 : i32
      %c1_i32 = arith.constant 1 : i32
      %50 = scf.for %arg7 = %c0_i32_39 to %49 step %c1_i32 iter_args(%arg8 = %48) -> (vector<8x48xf32>)  : i32 {
        %c8_i32_376 = arith.constant 8 : i32
        %392 = arith.muli %arg7, %c8_i32_376 : i32
        %393 = tpu.assume_multiple %392, 8 : i32
        %394 = arith.index_cast %393 : i32 to index
        %c0_377 = arith.constant 0 : index
        %395 = vector.load %arg5[%394, %c0_377] : memref<128x4xf32, #tpu.memory_space<vmem>>, vector<8x4xf32>
        %396 = vector.extract_strided_slice %395 {offsets = [0, 0], sizes = [8, 1], strides = [1, 1]} : vector<8x4xf32> to vector<8x1xf32>
        %397 = vector.extract_strided_slice %395 {offsets = [0, 1], sizes = [8, 1], strides = [1, 1]} : vector<8x4xf32> to vector<8x1xf32>
        %398 = vector.extract_strided_slice %395 {offsets = [0, 2], sizes = [8, 1], strides = [1, 1]} : vector<8x4xf32> to vector<8x1xf32>
        %399 = vector.extract_strided_slice %395 {offsets = [0, 3], sizes = [8, 1], strides = [1, 1]} : vector<8x4xf32> to vector<8x1xf32>
        %400 = vector.broadcast %47 : f32 to vector<8x1xf32>
        %401 = arith.cmpf oeq, %399, %400 : vector<8x1xf32>
        %402 = arith.extui %401 : vector<8x1xi1> to vector<8x1xi32>
        %403 = arith.sitofp %402 : vector<8x1xi32> to vector<8x1xf32>
        %404 = vector.broadcast %396 : vector<8x1xf32> to vector<8x96xf32>
        %405 = vector.broadcast %8 : vector<1x96xf32> to vector<8x96xf32>
        %406 = arith.subf %404, %405 : vector<8x96xf32>
        %407 = vector.broadcast %397 : vector<8x1xf32> to vector<8x96xf32>
        %408 = vector.broadcast %9 : vector<1x96xf32> to vector<8x96xf32>
        %409 = arith.subf %407, %408 : vector<8x96xf32>
        %410 = vector.broadcast %398 : vector<8x1xf32> to vector<8x96xf32>
        %411 = vector.broadcast %10 : vector<1x96xf32> to vector<8x96xf32>
        %412 = arith.subf %410, %411 : vector<8x96xf32>
        %413 = vector.broadcast %396 : vector<8x1xf32> to vector<8x96xf32>
        %414 = vector.broadcast %11 : vector<1x96xf32> to vector<8x96xf32>
        %415 = arith.subf %413, %414 : vector<8x96xf32>
        %416 = vector.broadcast %397 : vector<8x1xf32> to vector<8x96xf32>
        %417 = vector.broadcast %12 : vector<1x96xf32> to vector<8x96xf32>
        %418 = arith.subf %416, %417 : vector<8x96xf32>
        %419 = vector.broadcast %398 : vector<8x1xf32> to vector<8x96xf32>
        %420 = vector.broadcast %13 : vector<1x96xf32> to vector<8x96xf32>
        %421 = arith.subf %419, %420 : vector<8x96xf32>
        %422 = vector.broadcast %396 : vector<8x1xf32> to vector<8x96xf32>
        %423 = vector.broadcast %14 : vector<1x96xf32> to vector<8x96xf32>
        %424 = arith.subf %422, %423 : vector<8x96xf32>
        %425 = vector.broadcast %397 : vector<8x1xf32> to vector<8x96xf32>
        %426 = vector.broadcast %15 : vector<1x96xf32> to vector<8x96xf32>
        %427 = arith.subf %425, %426 : vector<8x96xf32>
        %428 = vector.broadcast %398 : vector<8x1xf32> to vector<8x96xf32>
        %429 = vector.broadcast %16 : vector<1x96xf32> to vector<8x96xf32>
        %430 = arith.subf %428, %429 : vector<8x96xf32>
        %431 = vector.broadcast %17 : vector<1x96xf32> to vector<8x96xf32>
        %432 = arith.mulf %406, %431 : vector<8x96xf32>
        %433 = vector.broadcast %18 : vector<1x96xf32> to vector<8x96xf32>
        %434 = arith.mulf %409, %433 : vector<8x96xf32>
        %435 = arith.addf %432, %434 : vector<8x96xf32>
        %436 = vector.broadcast %19 : vector<1x96xf32> to vector<8x96xf32>
        %437 = arith.mulf %412, %436 : vector<8x96xf32>
        %438 = arith.addf %435, %437 : vector<8x96xf32>
        %439 = arith.mulf %438, %438 : vector<8x96xf32>
        %440 = vector.broadcast %20 : vector<1x96xf32> to vector<8x96xf32>
        %441 = arith.mulf %439, %440 : vector<8x96xf32>
        %442 = vector.broadcast %21 : vector<1x96xf32> to vector<8x96xf32>
        %443 = arith.mulf %406, %442 : vector<8x96xf32>
        %444 = vector.broadcast %22 : vector<1x96xf32> to vector<8x96xf32>
        %445 = arith.mulf %409, %444 : vector<8x96xf32>
        %446 = arith.addf %443, %445 : vector<8x96xf32>
        %447 = vector.broadcast %23 : vector<1x96xf32> to vector<8x96xf32>
        %448 = arith.mulf %412, %447 : vector<8x96xf32>
        %449 = arith.addf %446, %448 : vector<8x96xf32>
        %450 = vector.broadcast %24 : vector<1x96xf32> to vector<8x96xf32>
        %451 = arith.mulf %415, %450 : vector<8x96xf32>
        %452 = vector.broadcast %25 : vector<1x96xf32> to vector<8x96xf32>
        %453 = arith.mulf %418, %452 : vector<8x96xf32>
        %454 = arith.addf %451, %453 : vector<8x96xf32>
        %455 = vector.broadcast %26 : vector<1x96xf32> to vector<8x96xf32>
        %456 = arith.mulf %421, %455 : vector<8x96xf32>
        %457 = arith.addf %454, %456 : vector<8x96xf32>
        %458 = vector.broadcast %27 : vector<1x96xf32> to vector<8x96xf32>
        %459 = arith.mulf %424, %458 : vector<8x96xf32>
        %460 = vector.broadcast %28 : vector<1x96xf32> to vector<8x96xf32>
        %461 = arith.mulf %427, %460 : vector<8x96xf32>
        %462 = arith.addf %459, %461 : vector<8x96xf32>
        %463 = vector.broadcast %29 : vector<1x96xf32> to vector<8x96xf32>
        %464 = arith.mulf %430, %463 : vector<8x96xf32>
        %465 = arith.addf %462, %464 : vector<8x96xf32>
        %cst_378 = arith.constant 0.000000e+00 : f32
        %466 = vector.broadcast %cst_378 : f32 to vector<8x96xf32>
        %467 = arith.cmpf oge, %449, %466 : vector<8x96xf32>
        %cst_379 = arith.constant 0.000000e+00 : f32
        %468 = vector.broadcast %cst_379 : f32 to vector<8x96xf32>
        %469 = arith.cmpf oge, %457, %468 : vector<8x96xf32>
        %470 = arith.andi %467, %469 : vector<8x96xi1>
        %cst_380 = arith.constant 0.000000e+00 : f32
        %471 = vector.broadcast %cst_380 : f32 to vector<8x96xf32>
        %472 = arith.cmpf oge, %465, %471 : vector<8x96xf32>
        %473 = arith.andi %470, %472 : vector<8x96xi1>
        %474 = vector.broadcast %44 : vector<1x96xi1> to vector<8x96xi1>
        %475 = arith.andi %473, %474 : vector<8x96xi1>
        %476 = vector.broadcast %30 : vector<1x96xf32> to vector<8x96xf32>
        %477 = arith.mulf %406, %476 : vector<8x96xf32>
        %478 = vector.broadcast %31 : vector<1x96xf32> to vector<8x96xf32>
        %479 = arith.mulf %409, %478 : vector<8x96xf32>
        %480 = arith.addf %477, %479 : vector<8x96xf32>
        %481 = vector.broadcast %32 : vector<1x96xf32> to vector<8x96xf32>
        %482 = arith.mulf %412, %481 : vector<8x96xf32>
        %483 = arith.addf %480, %482 : vector<8x96xf32>
        %484 = vector.broadcast %39 : vector<1x96xf32> to vector<8x96xf32>
        %485 = arith.mulf %483, %484 : vector<8x96xf32>
        %cst_381 = arith.constant 0.000000e+00 : f32
        %cst_382 = arith.constant 1.000000e+00 : f32
        %486 = vector.broadcast %cst_381 : f32 to vector<8x96xf32>
        %487 = arith.maximumf %486, %485 : vector<8x96xf32>
        %488 = vector.broadcast %cst_382 : f32 to vector<8x96xf32>
        %489 = arith.minimumf %488, %487 : vector<8x96xf32>
        %490 = vector.broadcast %30 : vector<1x96xf32> to vector<8x96xf32>
        %491 = arith.mulf %489, %490 : vector<8x96xf32>
        %492 = arith.subf %406, %491 : vector<8x96xf32>
        %493 = vector.broadcast %31 : vector<1x96xf32> to vector<8x96xf32>
        %494 = arith.mulf %489, %493 : vector<8x96xf32>
        %495 = arith.subf %409, %494 : vector<8x96xf32>
        %496 = vector.broadcast %32 : vector<1x96xf32> to vector<8x96xf32>
        %497 = arith.mulf %489, %496 : vector<8x96xf32>
        %498 = arith.subf %412, %497 : vector<8x96xf32>
        %499 = arith.mulf %492, %492 : vector<8x96xf32>
        %500 = arith.mulf %495, %495 : vector<8x96xf32>
        %501 = arith.addf %499, %500 : vector<8x96xf32>
        %502 = arith.mulf %498, %498 : vector<8x96xf32>
        %503 = arith.addf %501, %502 : vector<8x96xf32>
        %504 = vector.broadcast %33 : vector<1x96xf32> to vector<8x96xf32>
        %505 = arith.mulf %415, %504 : vector<8x96xf32>
        %506 = vector.broadcast %34 : vector<1x96xf32> to vector<8x96xf32>
        %507 = arith.mulf %418, %506 : vector<8x96xf32>
        %508 = arith.addf %505, %507 : vector<8x96xf32>
        %509 = vector.broadcast %35 : vector<1x96xf32> to vector<8x96xf32>
        %510 = arith.mulf %421, %509 : vector<8x96xf32>
        %511 = arith.addf %508, %510 : vector<8x96xf32>
        %512 = vector.broadcast %40 : vector<1x96xf32> to vector<8x96xf32>
        %513 = arith.mulf %511, %512 : vector<8x96xf32>
        %cst_383 = arith.constant 0.000000e+00 : f32
        %cst_384 = arith.constant 1.000000e+00 : f32
        %514 = vector.broadcast %cst_383 : f32 to vector<8x96xf32>
        %515 = arith.maximumf %514, %513 : vector<8x96xf32>
        %516 = vector.broadcast %cst_384 : f32 to vector<8x96xf32>
        %517 = arith.minimumf %516, %515 : vector<8x96xf32>
        %518 = vector.broadcast %33 : vector<1x96xf32> to vector<8x96xf32>
        %519 = arith.mulf %517, %518 : vector<8x96xf32>
        %520 = arith.subf %415, %519 : vector<8x96xf32>
        %521 = vector.broadcast %34 : vector<1x96xf32> to vector<8x96xf32>
        %522 = arith.mulf %517, %521 : vector<8x96xf32>
        %523 = arith.subf %418, %522 : vector<8x96xf32>
        %524 = vector.broadcast %35 : vector<1x96xf32> to vector<8x96xf32>
        %525 = arith.mulf %517, %524 : vector<8x96xf32>
        %526 = arith.subf %421, %525 : vector<8x96xf32>
        %527 = arith.mulf %520, %520 : vector<8x96xf32>
        %528 = arith.mulf %523, %523 : vector<8x96xf32>
        %529 = arith.addf %527, %528 : vector<8x96xf32>
        %530 = arith.mulf %526, %526 : vector<8x96xf32>
        %531 = arith.addf %529, %530 : vector<8x96xf32>
        %532 = vector.broadcast %36 : vector<1x96xf32> to vector<8x96xf32>
        %533 = arith.mulf %424, %532 : vector<8x96xf32>
        %534 = vector.broadcast %37 : vector<1x96xf32> to vector<8x96xf32>
        %535 = arith.mulf %427, %534 : vector<8x96xf32>
        %536 = arith.addf %533, %535 : vector<8x96xf32>
        %537 = vector.broadcast %38 : vector<1x96xf32> to vector<8x96xf32>
        %538 = arith.mulf %430, %537 : vector<8x96xf32>
        %539 = arith.addf %536, %538 : vector<8x96xf32>
        %540 = vector.broadcast %41 : vector<1x96xf32> to vector<8x96xf32>
        %541 = arith.mulf %539, %540 : vector<8x96xf32>
        %cst_385 = arith.constant 0.000000e+00 : f32
        %cst_386 = arith.constant 1.000000e+00 : f32
        %542 = vector.broadcast %cst_385 : f32 to vector<8x96xf32>
        %543 = arith.maximumf %542, %541 : vector<8x96xf32>
        %544 = vector.broadcast %cst_386 : f32 to vector<8x96xf32>
        %545 = arith.minimumf %544, %543 : vector<8x96xf32>
        %546 = vector.broadcast %36 : vector<1x96xf32> to vector<8x96xf32>
        %547 = arith.mulf %545, %546 : vector<8x96xf32>
        %548 = arith.subf %424, %547 : vector<8x96xf32>
        %549 = vector.broadcast %37 : vector<1x96xf32> to vector<8x96xf32>
        %550 = arith.mulf %545, %549 : vector<8x96xf32>
        %551 = arith.subf %427, %550 : vector<8x96xf32>
        %552 = vector.broadcast %38 : vector<1x96xf32> to vector<8x96xf32>
        %553 = arith.mulf %545, %552 : vector<8x96xf32>
        %554 = arith.subf %430, %553 : vector<8x96xf32>
        %555 = arith.mulf %548, %548 : vector<8x96xf32>
        %556 = arith.mulf %551, %551 : vector<8x96xf32>
        %557 = arith.addf %555, %556 : vector<8x96xf32>
        %558 = arith.mulf %554, %554 : vector<8x96xf32>
        %559 = arith.addf %557, %558 : vector<8x96xf32>
        %560 = arith.minimumf %531, %559 : vector<8x96xf32>
        %561 = arith.minimumf %503, %560 : vector<8x96xf32>
        %562 = arith.select %475, %441, %561 : vector<8x96xi1>, vector<8x96xf32>
        %563 = vector.extract_strided_slice %562 {offsets = [0, 0], sizes = [8, 48], strides = [1, 1]} : vector<8x96xf32> to vector<8x48xf32>
        %564 = vector.extract_strided_slice %562 {offsets = [0, 48], sizes = [8, 48], strides = [1, 1]} : vector<8x96xf32> to vector<8x48xf32>
        %565 = arith.minimumf %563, %564 : vector<8x48xf32>
        %566 = math.sqrt %565 : vector<8x48xf32>
        %567 = vector.broadcast %403 : vector<8x1xf32> to vector<8x48xf32>
        %568 = arith.mulf %566, %567 : vector<8x48xf32>
        %569 = arith.addf %arg8, %568 : vector<8x48xf32>
        scf.yield %569 : vector<8x48xf32>
      }
      %c16_i32_40 = arith.constant 16 : i32
      %c0_41 = arith.constant 0 : index
      %c0_42 = arith.constant 0 : index
      %51 = vector.load %arg6[%c0_41, %c0_42] : memref<8x48xf32, #tpu.memory_space<vmem>>, vector<1x48xf32>
      %cst_43 = arith.constant dense<0.000000e+00> : vector<48xf32>
      %52 = vector.multi_reduction <add>, %50, %cst_43 [0] : vector<8x48xf32> to vector<48xf32>
      %53 = vector.shape_cast %52 : vector<48xf32> to vector<1x48xf32>
      %54 = arith.addf %51, %53 : vector<1x48xf32>
      %c0_44 = arith.constant 0 : index
      %c0_45 = arith.constant 0 : index
      %55 = vector.load %arg6[%c0_44, %c0_45] : memref<8x48xf32, #tpu.memory_space<vmem>>, vector<1x48xf32>
      tpu.vector_store %arg6[%c0_44, %c0_45], %54 {strides = array<i32>} : memref<8x48xf32, #tpu.memory_space<vmem>>, vector<1x48xf32>,
      %c35 = arith.constant 35 : index
      %c0_46 = arith.constant 0 : index
      %56 = vector.load %arg4[%c35, %c0_46] : memref<280x96xf32, #tpu.memory_space<vmem>>, vector<1x96xf32>
      %c36 = arith.constant 36 : index
      %c0_47 = arith.constant 0 : index
      %57 = vector.load %arg4[%c36, %c0_47] : memref<280x96xf32, #tpu.memory_space<vmem>>, vector<1x96xf32>
      %c37 = arith.constant 37 : index
      %c0_48 = arith.constant 0 : index
      %58 = vector.load %arg4[%c37, %c0_48] : memref<280x96xf32, #tpu.memory_space<vmem>>, vector<1x96xf32>
      %c38 = arith.constant 38 : index
      %c0_49 = arith.constant 0 : index
      %59 = vector.load %arg4[%c38, %c0_49] : memref<280x96xf32, #tpu.memory_space<vmem>>, vector<1x96xf32>
      %c39 = arith.constant 39 : index
      %c0_50 = arith.constant 0 : index
      %60 = vector.load %arg4[%c39, %c0_50] : memref<280x96xf32, #tpu.memory_space<vmem>>, vector<1x96xf32>
      %c40 = arith.constant 40 : index
      %c0_51 = arith.constant 0 : index
      %61 = vector.load %arg4[%c40, %c0_51] : memref<280x96xf32, #tpu.memory_space<vmem>>, vector<1x96xf32>
      %c41 = arith.constant 41 : index
      %c0_52 = arith.constant 0 : index
      %62 = vector.load %arg4[%c41, %c0_52] : memref<280x96xf32, #tpu.memory_space<vmem>>, vector<1x96xf32>
      %c42 = arith.constant 42 : index
      %c0_53 = arith.constant 0 : index
      %63 = vector.load %arg4[%c42, %c0_53] : memref<280x96xf32, #tpu.memory_space<vmem>>, vector<1x96xf32>
      %c43 = arith.constant 43 : index
      %c0_54 = arith.constant 0 : index
      %64 = vector.load %arg4[%c43, %c0_54] : memref<280x96xf32, #tpu.memory_space<vmem>>, vector<1x96xf32>
      %c44 = arith.constant 44 : index
      %c0_55 = arith.constant 0 : index
      %65 = vector.load %arg4[%c44, %c0_55] : memref<280x96xf32, #tpu.memory_space<vmem>>, vector<1x96xf32>
      %c45 = arith.constant 45 : index
      %c0_56 = arith.constant 0 : index
      %66 = vector.load %arg4[%c45, %c0_56] : memref<280x96xf32, #tpu.memory_space<vmem>>, vector<1x96xf32>
      %c46 = arith.constant 46 : index
      %c0_57 = arith.constant 0 : index
      %67 = vector.load %arg4[%c46, %c0_57] : memref<280x96xf32, #tpu.memory_space<vmem>>, vector<1x96xf32>
      %c47 = arith.constant 47 : index
      %c0_58 = arith.constant 0 : index
      %68 = vector.load %arg4[%c47, %c0_58] : memref<280x96xf32, #tpu.memory_space<vmem>>, vector<1x96xf32>
      %c48 = arith.constant 48 : index
      %c0_59 = arith.constant 0 : index
      %69 = vector.load %arg4[%c48, %c0_59] : memref<280x96xf32, #tpu.memory_space<vmem>>, vector<1x96xf32>
      %c49 = arith.constant 49 : index
      %c0_60 = arith.constant 0 : index
      %70 = vector.load %arg4[%c49, %c0_60] : memref<280x96xf32, #tpu.memory_space<vmem>>, vector<1x96xf32>
      %c50 = arith.constant 50 : index
      %c0_61 = arith.constant 0 : index
      %71 = vector.load %arg4[%c50, %c0_61] : memref<280x96xf32, #tpu.memory_space<vmem>>, vector<1x96xf32>
      %c51 = arith.constant 51 : index
      %c0_62 = arith.constant 0 : index
      %72 = vector.load %arg4[%c51, %c0_62] : memref<280x96xf32, #tpu.memory_space<vmem>>, vector<1x96xf32>
      %c52 = arith.constant 52 : index
      %c0_63 = arith.constant 0 : index
      %73 = vector.load %arg4[%c52, %c0_63] : memref<280x96xf32, #tpu.memory_space<vmem>>, vector<1x96xf32>
      %c53 = arith.constant 53 : index
      %c0_64 = arith.constant 0 : index
      %74 = vector.load %arg4[%c53, %c0_64] : memref<280x96xf32, #tpu.memory_space<vmem>>, vector<1x96xf32>
      %c54 = arith.constant 54 : index
      %c0_65 = arith.constant 0 : index
      %75 = vector.load %arg4[%c54, %c0_65] : memref<280x96xf32, #tpu.memory_space<vmem>>, vector<1x96xf32>
      %c55 = arith.constant 55 : index
      %c0_66 = arith.constant 0 : index
      %76 = vector.load %arg4[%c55, %c0_66] : memref<280x96xf32, #tpu.memory_space<vmem>>, vector<1x96xf32>
      %c56 = arith.constant 56 : index
      %c0_67 = arith.constant 0 : index
      %77 = vector.load %arg4[%c56, %c0_67] : memref<280x96xf32, #tpu.memory_space<vmem>>, vector<1x96xf32>
      %c57 = arith.constant 57 : index
      %c0_68 = arith.constant 0 : index
      %78 = vector.load %arg4[%c57, %c0_68] : memref<280x96xf32, #tpu.memory_space<vmem>>, vector<1x96xf32>
      %c58 = arith.constant 58 : index
      %c0_69 = arith.constant 0 : index
      %79 = vector.load %arg4[%c58, %c0_69] : memref<280x96xf32, #tpu.memory_space<vmem>>, vector<1x96xf32>
      %c59 = arith.constant 59 : index
      %c0_70 = arith.constant 0 : index
      %80 = vector.load %arg4[%c59, %c0_70] : memref<280x96xf32, #tpu.memory_space<vmem>>, vector<1x96xf32>
      %c60 = arith.constant 60 : index
      %c0_71 = arith.constant 0 : index
      %81 = vector.load %arg4[%c60, %c0_71] : memref<280x96xf32, #tpu.memory_space<vmem>>, vector<1x96xf32>
      %c61 = arith.constant 61 : index
      %c0_72 = arith.constant 0 : index
      %82 = vector.load %arg4[%c61, %c0_72] : memref<280x96xf32, #tpu.memory_space<vmem>>, vector<1x96xf32>
      %c62 = arith.constant 62 : index
      %c0_73 = arith.constant 0 : index
      %83 = vector.load %arg4[%c62, %c0_73] : memref<280x96xf32, #tpu.memory_space<vmem>>, vector<1x96xf32>
      %c63 = arith.constant 63 : index
      %c0_74 = arith.constant 0 : index
      %84 = vector.load %arg4[%c63, %c0_74] : memref<280x96xf32, #tpu.memory_space<vmem>>, vector<1x96xf32>
      %c64 = arith.constant 64 : index
      %c0_75 = arith.constant 0 : index
      %85 = vector.load %arg4[%c64, %c0_75] : memref<280x96xf32, #tpu.memory_space<vmem>>, vector<1x96xf32>
      %c65 = arith.constant 65 : index
      %c0_76 = arith.constant 0 : index
      %86 = vector.load %arg4[%c65, %c0_76] : memref<280x96xf32, #tpu.memory_space<vmem>>, vector<1x96xf32>
      %c66 = arith.constant 66 : index
      %c0_77 = arith.constant 0 : index
      %87 = vector.load %arg4[%c66, %c0_77] : memref<280x96xf32, #tpu.memory_space<vmem>>, vector<1x96xf32>
      %c67 = arith.constant 67 : index
      %c0_78 = arith.constant 0 : index
      %88 = vector.load %arg4[%c67, %c0_78] : memref<280x96xf32, #tpu.memory_space<vmem>>, vector<1x96xf32>
      %c68 = arith.constant 68 : index
      %c0_79 = arith.constant 0 : index
      %89 = vector.load %arg4[%c68, %c0_79] : memref<280x96xf32, #tpu.memory_space<vmem>>, vector<1x96xf32>
      %c69 = arith.constant 69 : index
      %c0_80 = arith.constant 0 : index
      %90 = vector.load %arg4[%c69, %c0_80] : memref<280x96xf32, #tpu.memory_space<vmem>>, vector<1x96xf32>
      %cst_81 = arith.constant 5.000000e-01 : f32
      %91 = vector.broadcast %cst_81 : f32 to vector<1x96xf32>
      %92 = arith.cmpf ogt, %90, %91 : vector<1x96xf32>
      %c8_i32_82 = arith.constant 8 : i32
      %93 = arith.muli %arg0, %c8_i32_82 : i32
      %c1_i32_83 = arith.constant 1 : i32
      %94 = arith.addi %93, %c1_i32_83 : i32
      %95 = arith.sitofp %94 : i32 to f32
      %cst_84 = arith.constant 0.000000e+00 : f32
      %96 = vector.broadcast %cst_84 : f32 to vector<8x48xf32>
      %c0_i32_85 = arith.constant 0 : i32
      %c16_i32_86 = arith.constant 16 : i32
      %97 = arith.addi %c0_i32_85, %c16_i32_86 : i32
      %c1_i32_87 = arith.constant 1 : i32
      %98 = scf.for %arg7 = %c0_i32_85 to %97 step %c1_i32_87 iter_args(%arg8 = %96) -> (vector<8x48xf32>)  : i32 {
        %c8_i32_376 = arith.constant 8 : i32
        %392 = arith.muli %arg7, %c8_i32_376 : i32
        %393 = tpu.assume_multiple %392, 8 : i32
        %394 = arith.index_cast %393 : i32 to index
        %c0_377 = arith.constant 0 : index
        %395 = vector.load %arg5[%394, %c0_377] : memref<128x4xf32, #tpu.memory_space<vmem>>, vector<8x4xf32>
        %396 = vector.extract_strided_slice %395 {offsets = [0, 0], sizes = [8, 1], strides = [1, 1]} : vector<8x4xf32> to vector<8x1xf32>
        %397 = vector.extract_strided_slice %395 {offsets = [0, 1], sizes = [8, 1], strides = [1, 1]} : vector<8x4xf32> to vector<8x1xf32>
        %398 = vector.extract_strided_slice %395 {offsets = [0, 2], sizes = [8, 1], strides = [1, 1]} : vector<8x4xf32> to vector<8x1xf32>
        %399 = vector.extract_strided_slice %395 {offsets = [0, 3], sizes = [8, 1], strides = [1, 1]} : vector<8x4xf32> to vector<8x1xf32>
        %400 = vector.broadcast %95 : f32 to vector<8x1xf32>
        %401 = arith.cmpf oeq, %399, %400 : vector<8x1xf32>
        %402 = arith.extui %401 : vector<8x1xi1> to vector<8x1xi32>
        %403 = arith.sitofp %402 : vector<8x1xi32> to vector<8x1xf32>
        %404 = vector.broadcast %396 : vector<8x1xf32> to vector<8x96xf32>
        %405 = vector.broadcast %56 : vector<1x96xf32> to vector<8x96xf32>
        %406 = arith.subf %404, %405 : vector<8x96xf32>
        %407 = vector.broadcast %397 : vector<8x1xf32> to vector<8x96xf32>
        %408 = vector.broadcast %57 : vector<1x96xf32> to vector<8x96xf32>
        %409 = arith.subf %407, %408 : vector<8x96xf32>
        %410 = vector.broadcast %398 : vector<8x1xf32> to vector<8x96xf32>
        %411 = vector.broadcast %58 : vector<1x96xf32> to vector<8x96xf32>
        %412 = arith.subf %410, %411 : vector<8x96xf32>
        %413 = vector.broadcast %396 : vector<8x1xf32> to vector<8x96xf32>
        %414 = vector.broadcast %59 : vector<1x96xf32> to vector<8x96xf32>
        %415 = arith.subf %413, %414 : vector<8x96xf32>
        %416 = vector.broadcast %397 : vector<8x1xf32> to vector<8x96xf32>
        %417 = vector.broadcast %60 : vector<1x96xf32> to vector<8x96xf32>
        %418 = arith.subf %416, %417 : vector<8x96xf32>
        %419 = vector.broadcast %398 : vector<8x1xf32> to vector<8x96xf32>
        %420 = vector.broadcast %61 : vector<1x96xf32> to vector<8x96xf32>
        %421 = arith.subf %419, %420 : vector<8x96xf32>
        %422 = vector.broadcast %396 : vector<8x1xf32> to vector<8x96xf32>
        %423 = vector.broadcast %62 : vector<1x96xf32> to vector<8x96xf32>
        %424 = arith.subf %422, %423 : vector<8x96xf32>
        %425 = vector.broadcast %397 : vector<8x1xf32> to vector<8x96xf32>
        %426 = vector.broadcast %63 : vector<1x96xf32> to vector<8x96xf32>
        %427 = arith.subf %425, %426 : vector<8x96xf32>
        %428 = vector.broadcast %398 : vector<8x1xf32> to vector<8x96xf32>
        %429 = vector.broadcast %64 : vector<1x96xf32> to vector<8x96xf32>
        %430 = arith.subf %428, %429 : vector<8x96xf32>
        %431 = vector.broadcast %65 : vector<1x96xf32> to vector<8x96xf32>
        %432 = arith.mulf %406, %431 : vector<8x96xf32>
        %433 = vector.broadcast %66 : vector<1x96xf32> to vector<8x96xf32>
        %434 = arith.mulf %409, %433 : vector<8x96xf32>
        %435 = arith.addf %432, %434 : vector<8x96xf32>
        %436 = vector.broadcast %67 : vector<1x96xf32> to vector<8x96xf32>
        %437 = arith.mulf %412, %436 : vector<8x96xf32>
        %438 = arith.addf %435, %437 : vector<8x96xf32>
        %439 = arith.mulf %438, %438 : vector<8x96xf32>
        %440 = vector.broadcast %68 : vector<1x96xf32> to vector<8x96xf32>
        %441 = arith.mulf %439, %440 : vector<8x96xf32>
        %442 = vector.broadcast %69 : vector<1x96xf32> to vector<8x96xf32>
        %443 = arith.mulf %406, %442 : vector<8x96xf32>
        %444 = vector.broadcast %70 : vector<1x96xf32> to vector<8x96xf32>
        %445 = arith.mulf %409, %444 : vector<8x96xf32>
        %446 = arith.addf %443, %445 : vector<8x96xf32>
        %447 = vector.broadcast %71 : vector<1x96xf32> to vector<8x96xf32>
        %448 = arith.mulf %412, %447 : vector<8x96xf32>
        %449 = arith.addf %446, %448 : vector<8x96xf32>
        %450 = vector.broadcast %72 : vector<1x96xf32> to vector<8x96xf32>
        %451 = arith.mulf %415, %450 : vector<8x96xf32>
        %452 = vector.broadcast %73 : vector<1x96xf32> to vector<8x96xf32>
        %453 = arith.mulf %418, %452 : vector<8x96xf32>
        %454 = arith.addf %451, %453 : vector<8x96xf32>
        %455 = vector.broadcast %74 : vector<1x96xf32> to vector<8x96xf32>
        %456 = arith.mulf %421, %455 : vector<8x96xf32>
        %457 = arith.addf %454, %456 : vector<8x96xf32>
        %458 = vector.broadcast %75 : vector<1x96xf32> to vector<8x96xf32>
        %459 = arith.mulf %424, %458 : vector<8x96xf32>
        %460 = vector.broadcast %76 : vector<1x96xf32> to vector<8x96xf32>
        %461 = arith.mulf %427, %460 : vector<8x96xf32>
        %462 = arith.addf %459, %461 : vector<8x96xf32>
        %463 = vector.broadcast %77 : vector<1x96xf32> to vector<8x96xf32>
        %464 = arith.mulf %430, %463 : vector<8x96xf32>
        %465 = arith.addf %462, %464 : vector<8x96xf32>
        %cst_378 = arith.constant 0.000000e+00 : f32
        %466 = vector.broadcast %cst_378 : f32 to vector<8x96xf32>
        %467 = arith.cmpf oge, %449, %466 : vector<8x96xf32>
        %cst_379 = arith.constant 0.000000e+00 : f32
        %468 = vector.broadcast %cst_379 : f32 to vector<8x96xf32>
        %469 = arith.cmpf oge, %457, %468 : vector<8x96xf32>
        %470 = arith.andi %467, %469 : vector<8x96xi1>
        %cst_380 = arith.constant 0.000000e+00 : f32
        %471 = vector.broadcast %cst_380 : f32 to vector<8x96xf32>
        %472 = arith.cmpf oge, %465, %471 : vector<8x96xf32>
        %473 = arith.andi %470, %472 : vector<8x96xi1>
        %474 = vector.broadcast %92 : vector<1x96xi1> to vector<8x96xi1>
        %475 = arith.andi %473, %474 : vector<8x96xi1>
        %476 = vector.broadcast %78 : vector<1x96xf32> to vector<8x96xf32>
        %477 = arith.mulf %406, %476 : vector<8x96xf32>
        %478 = vector.broadcast %79 : vector<1x96xf32> to vector<8x96xf32>
        %479 = arith.mulf %409, %478 : vector<8x96xf32>
        %480 = arith.addf %477, %479 : vector<8x96xf32>
        %481 = vector.broadcast %80 : vector<1x96xf32> to vector<8x96xf32>
        %482 = arith.mulf %412, %481 : vector<8x96xf32>
        %483 = arith.addf %480, %482 : vector<8x96xf32>
        %484 = vector.broadcast %87 : vector<1x96xf32> to vector<8x96xf32>
        %485 = arith.mulf %483, %484 : vector<8x96xf32>
        %cst_381 = arith.constant 0.000000e+00 : f32
        %cst_382 = arith.constant 1.000000e+00 : f32
        %486 = vector.broadcast %cst_381 : f32 to vector<8x96xf32>
        %487 = arith.maximumf %486, %485 : vector<8x96xf32>
        %488 = vector.broadcast %cst_382 : f32 to vector<8x96xf32>
        %489 = arith.minimumf %488, %487 : vector<8x96xf32>
        %490 = vector.broadcast %78 : vector<1x96xf32> to vector<8x96xf32>
        %491 = arith.mulf %489, %490 : vector<8x96xf32>
        %492 = arith.subf %406, %491 : vector<8x96xf32>
        %493 = vector.broadcast %79 : vector<1x96xf32> to vector<8x96xf32>
        %494 = arith.mulf %489, %493 : vector<8x96xf32>
        %495 = arith.subf %409, %494 : vector<8x96xf32>
        %496 = vector.broadcast %80 : vector<1x96xf32> to vector<8x96xf32>
        %497 = arith.mulf %489, %496 : vector<8x96xf32>
        %498 = arith.subf %412, %497 : vector<8x96xf32>
        %499 = arith.mulf %492, %492 : vector<8x96xf32>
        %500 = arith.mulf %495, %495 : vector<8x96xf32>
        %501 = arith.addf %499, %500 : vector<8x96xf32>
        %502 = arith.mulf %498, %498 : vector<8x96xf32>
        %503 = arith.addf %501, %502 : vector<8x96xf32>
        %504 = vector.broadcast %81 : vector<1x96xf32> to vector<8x96xf32>
        %505 = arith.mulf %415, %504 : vector<8x96xf32>
        %506 = vector.broadcast %82 : vector<1x96xf32> to vector<8x96xf32>
        %507 = arith.mulf %418, %506 : vector<8x96xf32>
        %508 = arith.addf %505, %507 : vector<8x96xf32>
        %509 = vector.broadcast %83 : vector<1x96xf32> to vector<8x96xf32>
        %510 = arith.mulf %421, %509 : vector<8x96xf32>
        %511 = arith.addf %508, %510 : vector<8x96xf32>
        %512 = vector.broadcast %88 : vector<1x96xf32> to vector<8x96xf32>
        %513 = arith.mulf %511, %512 : vector<8x96xf32>
        %cst_383 = arith.constant 0.000000e+00 : f32
        %cst_384 = arith.constant 1.000000e+00 : f32
        %514 = vector.broadcast %cst_383 : f32 to vector<8x96xf32>
        %515 = arith.maximumf %514, %513 : vector<8x96xf32>
        %516 = vector.broadcast %cst_384 : f32 to vector<8x96xf32>
        %517 = arith.minimumf %516, %515 : vector<8x96xf32>
        %518 = vector.broadcast %81 : vector<1x96xf32> to vector<8x96xf32>
        %519 = arith.mulf %517, %518 : vector<8x96xf32>
        %520 = arith.subf %415, %519 : vector<8x96xf32>
        %521 = vector.broadcast %82 : vector<1x96xf32> to vector<8x96xf32>
        %522 = arith.mulf %517, %521 : vector<8x96xf32>
        %523 = arith.subf %418, %522 : vector<8x96xf32>
        %524 = vector.broadcast %83 : vector<1x96xf32> to vector<8x96xf32>
        %525 = arith.mulf %517, %524 : vector<8x96xf32>
        %526 = arith.subf %421, %525 : vector<8x96xf32>
        %527 = arith.mulf %520, %520 : vector<8x96xf32>
        %528 = arith.mulf %523, %523 : vector<8x96xf32>
        %529 = arith.addf %527, %528 : vector<8x96xf32>
        %530 = arith.mulf %526, %526 : vector<8x96xf32>
        %531 = arith.addf %529, %530 : vector<8x96xf32>
        %532 = vector.broadcast %84 : vector<1x96xf32> to vector<8x96xf32>
        %533 = arith.mulf %424, %532 : vector<8x96xf32>
        %534 = vector.broadcast %85 : vector<1x96xf32> to vector<8x96xf32>
        %535 = arith.mulf %427, %534 : vector<8x96xf32>
        %536 = arith.addf %533, %535 : vector<8x96xf32>
        %537 = vector.broadcast %86 : vector<1x96xf32> to vector<8x96xf32>
        %538 = arith.mulf %430, %537 : vector<8x96xf32>
        %539 = arith.addf %536, %538 : vector<8x96xf32>
        %540 = vector.broadcast %89 : vector<1x96xf32> to vector<8x96xf32>
        %541 = arith.mulf %539, %540 : vector<8x96xf32>
        %cst_385 = arith.constant 0.000000e+00 : f32
        %cst_386 = arith.constant 1.000000e+00 : f32
        %542 = vector.broadcast %cst_385 : f32 to vector<8x96xf32>
        %543 = arith.maximumf %542, %541 : vector<8x96xf32>
        %544 = vector.broadcast %cst_386 : f32 to vector<8x96xf32>
        %545 = arith.minimumf %544, %543 : vector<8x96xf32>
        %546 = vector.broadcast %84 : vector<1x96xf32> to vector<8x96xf32>
        %547 = arith.mulf %545, %546 : vector<8x96xf32>
        %548 = arith.subf %424, %547 : vector<8x96xf32>
        %549 = vector.broadcast %85 : vector<1x96xf32> to vector<8x96xf32>
        %550 = arith.mulf %545, %549 : vector<8x96xf32>
        %551 = arith.subf %427, %550 : vector<8x96xf32>
        %552 = vector.broadcast %86 : vector<1x96xf32> to vector<8x96xf32>
        %553 = arith.mulf %545, %552 : vector<8x96xf32>
        %554 = arith.subf %430, %553 : vector<8x96xf32>
        %555 = arith.mulf %548, %548 : vector<8x96xf32>
        %556 = arith.mulf %551, %551 : vector<8x96xf32>
        %557 = arith.addf %555, %556 : vector<8x96xf32>
        %558 = arith.mulf %554, %554 : vector<8x96xf32>
        %559 = arith.addf %557, %558 : vector<8x96xf32>
        %560 = arith.minimumf %531, %559 : vector<8x96xf32>
        %561 = arith.minimumf %503, %560 : vector<8x96xf32>
        %562 = arith.select %475, %441, %561 : vector<8x96xi1>, vector<8x96xf32>
        %563 = vector.extract_strided_slice %562 {offsets = [0, 0], sizes = [8, 48], strides = [1, 1]} : vector<8x96xf32> to vector<8x48xf32>
        %564 = vector.extract_strided_slice %562 {offsets = [0, 48], sizes = [8, 48], strides = [1, 1]} : vector<8x96xf32> to vector<8x48xf32>
        %565 = arith.minimumf %563, %564 : vector<8x48xf32>
        %566 = math.sqrt %565 : vector<8x48xf32>
        %567 = vector.broadcast %403 : vector<8x1xf32> to vector<8x48xf32>
        %568 = arith.mulf %566, %567 : vector<8x48xf32>
        %569 = arith.addf %arg8, %568 : vector<8x48xf32>
        scf.yield %569 : vector<8x48xf32>
      }
      %c16_i32_88 = arith.constant 16 : i32
      %c1_89 = arith.constant 1 : index
      %c0_90 = arith.constant 0 : index
      %99 = vector.load %arg6[%c1_89, %c0_90] : memref<8x48xf32, #tpu.memory_space<vmem>>, vector<1x48xf32>
      %cst_91 = arith.constant dense<0.000000e+00> : vector<48xf32>
      %100 = vector.multi_reduction <add>, %98, %cst_91 [0] : vector<8x48xf32> to vector<48xf32>
      %101 = vector.shape_cast %100 : vector<48xf32> to vector<1x48xf32>
      %102 = arith.addf %99, %101 : vector<1x48xf32>
      %c1_92 = arith.constant 1 : index
      %c0_93 = arith.constant 0 : index
      %103 = vector.load %arg6[%c1_92, %c0_93] : memref<8x48xf32, #tpu.memory_space<vmem>>, vector<1x48xf32>
      tpu.vector_store %arg6[%c1_92, %c0_93], %102 {strides = array<i32>} : memref<8x48xf32, #tpu.memory_space<vmem>>, vector<1x48xf32>,
      %c70 = arith.constant 70 : index
      %c0_94 = arith.constant 0 : index
      %104 = vector.load %arg4[%c70, %c0_94] : memref<280x96xf32, #tpu.memory_space<vmem>>, vector<1x96xf32>
      %c71 = arith.constant 71 : index
      %c0_95 = arith.constant 0 : index
      %105 = vector.load %arg4[%c71, %c0_95] : memref<280x96xf32, #tpu.memory_space<vmem>>, vector<1x96xf32>
      %c72 = arith.constant 72 : index
      %c0_96 = arith.constant 0 : index
      %106 = vector.load %arg4[%c72, %c0_96] : memref<280x96xf32, #tpu.memory_space<vmem>>, vector<1x96xf32>
      %c73 = arith.constant 73 : index
      %c0_97 = arith.constant 0 : index
      %107 = vector.load %arg4[%c73, %c0_97] : memref<280x96xf32, #tpu.memory_space<vmem>>, vector<1x96xf32>
      %c74 = arith.constant 74 : index
      %c0_98 = arith.constant 0 : index
      %108 = vector.load %arg4[%c74, %c0_98] : memref<280x96xf32, #tpu.memory_space<vmem>>, vector<1x96xf32>
      %c75 = arith.constant 75 : index
      %c0_99 = arith.constant 0 : index
      %109 = vector.load %arg4[%c75, %c0_99] : memref<280x96xf32, #tpu.memory_space<vmem>>, vector<1x96xf32>
      %c76 = arith.constant 76 : index
      %c0_100 = arith.constant 0 : index
      %110 = vector.load %arg4[%c76, %c0_100] : memref<280x96xf32, #tpu.memory_space<vmem>>, vector<1x96xf32>
      %c77 = arith.constant 77 : index
      %c0_101 = arith.constant 0 : index
      %111 = vector.load %arg4[%c77, %c0_101] : memref<280x96xf32, #tpu.memory_space<vmem>>, vector<1x96xf32>
      %c78 = arith.constant 78 : index
      %c0_102 = arith.constant 0 : index
      %112 = vector.load %arg4[%c78, %c0_102] : memref<280x96xf32, #tpu.memory_space<vmem>>, vector<1x96xf32>
      %c79 = arith.constant 79 : index
      %c0_103 = arith.constant 0 : index
      %113 = vector.load %arg4[%c79, %c0_103] : memref<280x96xf32, #tpu.memory_space<vmem>>, vector<1x96xf32>
      %c80 = arith.constant 80 : index
      %c0_104 = arith.constant 0 : index
      %114 = vector.load %arg4[%c80, %c0_104] : memref<280x96xf32, #tpu.memory_space<vmem>>, vector<1x96xf32>
      %c81 = arith.constant 81 : index
      %c0_105 = arith.constant 0 : index
      %115 = vector.load %arg4[%c81, %c0_105] : memref<280x96xf32, #tpu.memory_space<vmem>>, vector<1x96xf32>
      %c82 = arith.constant 82 : index
      %c0_106 = arith.constant 0 : index
      %116 = vector.load %arg4[%c82, %c0_106] : memref<280x96xf32, #tpu.memory_space<vmem>>, vector<1x96xf32>
      %c83 = arith.constant 83 : index
      %c0_107 = arith.constant 0 : index
      %117 = vector.load %arg4[%c83, %c0_107] : memref<280x96xf32, #tpu.memory_space<vmem>>, vector<1x96xf32>
      %c84 = arith.constant 84 : index
      %c0_108 = arith.constant 0 : index
      %118 = vector.load %arg4[%c84, %c0_108] : memref<280x96xf32, #tpu.memory_space<vmem>>, vector<1x96xf32>
      %c85 = arith.constant 85 : index
      %c0_109 = arith.constant 0 : index
      %119 = vector.load %arg4[%c85, %c0_109] : memref<280x96xf32, #tpu.memory_space<vmem>>, vector<1x96xf32>
      %c86 = arith.constant 86 : index
      %c0_110 = arith.constant 0 : index
      %120 = vector.load %arg4[%c86, %c0_110] : memref<280x96xf32, #tpu.memory_space<vmem>>, vector<1x96xf32>
      %c87 = arith.constant 87 : index
      %c0_111 = arith.constant 0 : index
      %121 = vector.load %arg4[%c87, %c0_111] : memref<280x96xf32, #tpu.memory_space<vmem>>, vector<1x96xf32>
      %c88 = arith.constant 88 : index
      %c0_112 = arith.constant 0 : index
      %122 = vector.load %arg4[%c88, %c0_112] : memref<280x96xf32, #tpu.memory_space<vmem>>, vector<1x96xf32>
      %c89 = arith.constant 89 : index
      %c0_113 = arith.constant 0 : index
      %123 = vector.load %arg4[%c89, %c0_113] : memref<280x96xf32, #tpu.memory_space<vmem>>, vector<1x96xf32>
      %c90 = arith.constant 90 : index
      %c0_114 = arith.constant 0 : index
      %124 = vector.load %arg4[%c90, %c0_114] : memref<280x96xf32, #tpu.memory_space<vmem>>, vector<1x96xf32>
      %c91 = arith.constant 91 : index
      %c0_115 = arith.constant 0 : index
      %125 = vector.load %arg4[%c91, %c0_115] : memref<280x96xf32, #tpu.memory_space<vmem>>, vector<1x96xf32>
      %c92 = arith.constant 92 : index
      %c0_116 = arith.constant 0 : index
      %126 = vector.load %arg4[%c92, %c0_116] : memref<280x96xf32, #tpu.memory_space<vmem>>, vector<1x96xf32>
      %c93 = arith.constant 93 : index
      %c0_117 = arith.constant 0 : index
      %127 = vector.load %arg4[%c93, %c0_117] : memref<280x96xf32, #tpu.memory_space<vmem>>, vector<1x96xf32>
      %c94 = arith.constant 94 : index
      %c0_118 = arith.constant 0 : index
      %128 = vector.load %arg4[%c94, %c0_118] : memref<280x96xf32, #tpu.memory_space<vmem>>, vector<1x96xf32>
      %c95 = arith.constant 95 : index
      %c0_119 = arith.constant 0 : index
      %129 = vector.load %arg4[%c95, %c0_119] : memref<280x96xf32, #tpu.memory_space<vmem>>, vector<1x96xf32>
      %c96 = arith.constant 96 : index
      %c0_120 = arith.constant 0 : index
      %130 = vector.load %arg4[%c96, %c0_120] : memref<280x96xf32, #tpu.memory_space<vmem>>, vector<1x96xf32>
      %c97 = arith.constant 97 : index
      %c0_121 = arith.constant 0 : index
      %131 = vector.load %arg4[%c97, %c0_121] : memref<280x96xf32, #tpu.memory_space<vmem>>, vector<1x96xf32>
      %c98 = arith.constant 98 : index
      %c0_122 = arith.constant 0 : index
      %132 = vector.load %arg4[%c98, %c0_122] : memref<280x96xf32, #tpu.memory_space<vmem>>, vector<1x96xf32>
      %c99 = arith.constant 99 : index
      %c0_123 = arith.constant 0 : index
      %133 = vector.load %arg4[%c99, %c0_123] : memref<280x96xf32, #tpu.memory_space<vmem>>, vector<1x96xf32>
      %c100 = arith.constant 100 : index
      %c0_124 = arith.constant 0 : index
      %134 = vector.load %arg4[%c100, %c0_124] : memref<280x96xf32, #tpu.memory_space<vmem>>, vector<1x96xf32>
      %c101 = arith.constant 101 : index
      %c0_125 = arith.constant 0 : index
      %135 = vector.load %arg4[%c101, %c0_125] : memref<280x96xf32, #tpu.memory_space<vmem>>, vector<1x96xf32>
      %c102 = arith.constant 102 : index
      %c0_126 = arith.constant 0 : index
      %136 = vector.load %arg4[%c102, %c0_126] : memref<280x96xf32, #tpu.memory_space<vmem>>, vector<1x96xf32>
      %c103 = arith.constant 103 : index
      %c0_127 = arith.constant 0 : index
      %137 = vector.load %arg4[%c103, %c0_127] : memref<280x96xf32, #tpu.memory_space<vmem>>, vector<1x96xf32>
      %c104 = arith.constant 104 : index
      %c0_128 = arith.constant 0 : index
      %138 = vector.load %arg4[%c104, %c0_128] : memref<280x96xf32, #tpu.memory_space<vmem>>, vector<1x96xf32>
      %cst_129 = arith.constant 5.000000e-01 : f32
      %139 = vector.broadcast %cst_129 : f32 to vector<1x96xf32>
      %140 = arith.cmpf ogt, %138, %139 : vector<1x96xf32>
      %c8_i32_130 = arith.constant 8 : i32
      %141 = arith.muli %arg0, %c8_i32_130 : i32
      %c2_i32 = arith.constant 2 : i32
      %142 = arith.addi %141, %c2_i32 : i32
      %143 = arith.sitofp %142 : i32 to f32
      %cst_131 = arith.constant 0.000000e+00 : f32
      %144 = vector.broadcast %cst_131 : f32 to vector<8x48xf32>
      %c0_i32_132 = arith.constant 0 : i32
      %c16_i32_133 = arith.constant 16 : i32
      %145 = arith.addi %c0_i32_132, %c16_i32_133 : i32
      %c1_i32_134 = arith.constant 1 : i32
      %146 = scf.for %arg7 = %c0_i32_132 to %145 step %c1_i32_134 iter_args(%arg8 = %144) -> (vector<8x48xf32>)  : i32 {
        %c8_i32_376 = arith.constant 8 : i32
        %392 = arith.muli %arg7, %c8_i32_376 : i32
        %393 = tpu.assume_multiple %392, 8 : i32
        %394 = arith.index_cast %393 : i32 to index
        %c0_377 = arith.constant 0 : index
        %395 = vector.load %arg5[%394, %c0_377] : memref<128x4xf32, #tpu.memory_space<vmem>>, vector<8x4xf32>
        %396 = vector.extract_strided_slice %395 {offsets = [0, 0], sizes = [8, 1], strides = [1, 1]} : vector<8x4xf32> to vector<8x1xf32>
        %397 = vector.extract_strided_slice %395 {offsets = [0, 1], sizes = [8, 1], strides = [1, 1]} : vector<8x4xf32> to vector<8x1xf32>
        %398 = vector.extract_strided_slice %395 {offsets = [0, 2], sizes = [8, 1], strides = [1, 1]} : vector<8x4xf32> to vector<8x1xf32>
        %399 = vector.extract_strided_slice %395 {offsets = [0, 3], sizes = [8, 1], strides = [1, 1]} : vector<8x4xf32> to vector<8x1xf32>
        %400 = vector.broadcast %143 : f32 to vector<8x1xf32>
        %401 = arith.cmpf oeq, %399, %400 : vector<8x1xf32>
        %402 = arith.extui %401 : vector<8x1xi1> to vector<8x1xi32>
        %403 = arith.sitofp %402 : vector<8x1xi32> to vector<8x1xf32>
        %404 = vector.broadcast %396 : vector<8x1xf32> to vector<8x96xf32>
        %405 = vector.broadcast %104 : vector<1x96xf32> to vector<8x96xf32>
        %406 = arith.subf %404, %405 : vector<8x96xf32>
        %407 = vector.broadcast %397 : vector<8x1xf32> to vector<8x96xf32>
        %408 = vector.broadcast %105 : vector<1x96xf32> to vector<8x96xf32>
        %409 = arith.subf %407, %408 : vector<8x96xf32>
        %410 = vector.broadcast %398 : vector<8x1xf32> to vector<8x96xf32>
        %411 = vector.broadcast %106 : vector<1x96xf32> to vector<8x96xf32>
        %412 = arith.subf %410, %411 : vector<8x96xf32>
        %413 = vector.broadcast %396 : vector<8x1xf32> to vector<8x96xf32>
        %414 = vector.broadcast %107 : vector<1x96xf32> to vector<8x96xf32>
        %415 = arith.subf %413, %414 : vector<8x96xf32>
        %416 = vector.broadcast %397 : vector<8x1xf32> to vector<8x96xf32>
        %417 = vector.broadcast %108 : vector<1x96xf32> to vector<8x96xf32>
        %418 = arith.subf %416, %417 : vector<8x96xf32>
        %419 = vector.broadcast %398 : vector<8x1xf32> to vector<8x96xf32>
        %420 = vector.broadcast %109 : vector<1x96xf32> to vector<8x96xf32>
        %421 = arith.subf %419, %420 : vector<8x96xf32>
        %422 = vector.broadcast %396 : vector<8x1xf32> to vector<8x96xf32>
        %423 = vector.broadcast %110 : vector<1x96xf32> to vector<8x96xf32>
        %424 = arith.subf %422, %423 : vector<8x96xf32>
        %425 = vector.broadcast %397 : vector<8x1xf32> to vector<8x96xf32>
        %426 = vector.broadcast %111 : vector<1x96xf32> to vector<8x96xf32>
        %427 = arith.subf %425, %426 : vector<8x96xf32>
        %428 = vector.broadcast %398 : vector<8x1xf32> to vector<8x96xf32>
        %429 = vector.broadcast %112 : vector<1x96xf32> to vector<8x96xf32>
        %430 = arith.subf %428, %429 : vector<8x96xf32>
        %431 = vector.broadcast %113 : vector<1x96xf32> to vector<8x96xf32>
        %432 = arith.mulf %406, %431 : vector<8x96xf32>
        %433 = vector.broadcast %114 : vector<1x96xf32> to vector<8x96xf32>
        %434 = arith.mulf %409, %433 : vector<8x96xf32>
        %435 = arith.addf %432, %434 : vector<8x96xf32>
        %436 = vector.broadcast %115 : vector<1x96xf32> to vector<8x96xf32>
        %437 = arith.mulf %412, %436 : vector<8x96xf32>
        %438 = arith.addf %435, %437 : vector<8x96xf32>
        %439 = arith.mulf %438, %438 : vector<8x96xf32>
        %440 = vector.broadcast %116 : vector<1x96xf32> to vector<8x96xf32>
        %441 = arith.mulf %439, %440 : vector<8x96xf32>
        %442 = vector.broadcast %117 : vector<1x96xf32> to vector<8x96xf32>
        %443 = arith.mulf %406, %442 : vector<8x96xf32>
        %444 = vector.broadcast %118 : vector<1x96xf32> to vector<8x96xf32>
        %445 = arith.mulf %409, %444 : vector<8x96xf32>
        %446 = arith.addf %443, %445 : vector<8x96xf32>
        %447 = vector.broadcast %119 : vector<1x96xf32> to vector<8x96xf32>
        %448 = arith.mulf %412, %447 : vector<8x96xf32>
        %449 = arith.addf %446, %448 : vector<8x96xf32>
        %450 = vector.broadcast %120 : vector<1x96xf32> to vector<8x96xf32>
        %451 = arith.mulf %415, %450 : vector<8x96xf32>
        %452 = vector.broadcast %121 : vector<1x96xf32> to vector<8x96xf32>
        %453 = arith.mulf %418, %452 : vector<8x96xf32>
        %454 = arith.addf %451, %453 : vector<8x96xf32>
        %455 = vector.broadcast %122 : vector<1x96xf32> to vector<8x96xf32>
        %456 = arith.mulf %421, %455 : vector<8x96xf32>
        %457 = arith.addf %454, %456 : vector<8x96xf32>
        %458 = vector.broadcast %123 : vector<1x96xf32> to vector<8x96xf32>
        %459 = arith.mulf %424, %458 : vector<8x96xf32>
        %460 = vector.broadcast %124 : vector<1x96xf32> to vector<8x96xf32>
        %461 = arith.mulf %427, %460 : vector<8x96xf32>
        %462 = arith.addf %459, %461 : vector<8x96xf32>
        %463 = vector.broadcast %125 : vector<1x96xf32> to vector<8x96xf32>
        %464 = arith.mulf %430, %463 : vector<8x96xf32>
        %465 = arith.addf %462, %464 : vector<8x96xf32>
        %cst_378 = arith.constant 0.000000e+00 : f32
        %466 = vector.broadcast %cst_378 : f32 to vector<8x96xf32>
        %467 = arith.cmpf oge, %449, %466 : vector<8x96xf32>
        %cst_379 = arith.constant 0.000000e+00 : f32
        %468 = vector.broadcast %cst_379 : f32 to vector<8x96xf32>
        %469 = arith.cmpf oge, %457, %468 : vector<8x96xf32>
        %470 = arith.andi %467, %469 : vector<8x96xi1>
        %cst_380 = arith.constant 0.000000e+00 : f32
        %471 = vector.broadcast %cst_380 : f32 to vector<8x96xf32>
        %472 = arith.cmpf oge, %465, %471 : vector<8x96xf32>
        %473 = arith.andi %470, %472 : vector<8x96xi1>
        %474 = vector.broadcast %140 : vector<1x96xi1> to vector<8x96xi1>
        %475 = arith.andi %473, %474 : vector<8x96xi1>
        %476 = vector.broadcast %126 : vector<1x96xf32> to vector<8x96xf32>
        %477 = arith.mulf %406, %476 : vector<8x96xf32>
        %478 = vector.broadcast %127 : vector<1x96xf32> to vector<8x96xf32>
        %479 = arith.mulf %409, %478 : vector<8x96xf32>
        %480 = arith.addf %477, %479 : vector<8x96xf32>
        %481 = vector.broadcast %128 : vector<1x96xf32> to vector<8x96xf32>
        %482 = arith.mulf %412, %481 : vector<8x96xf32>
        %483 = arith.addf %480, %482 : vector<8x96xf32>
        %484 = vector.broadcast %135 : vector<1x96xf32> to vector<8x96xf32>
        %485 = arith.mulf %483, %484 : vector<8x96xf32>
        %cst_381 = arith.constant 0.000000e+00 : f32
        %cst_382 = arith.constant 1.000000e+00 : f32
        %486 = vector.broadcast %cst_381 : f32 to vector<8x96xf32>
        %487 = arith.maximumf %486, %485 : vector<8x96xf32>
        %488 = vector.broadcast %cst_382 : f32 to vector<8x96xf32>
        %489 = arith.minimumf %488, %487 : vector<8x96xf32>
        %490 = vector.broadcast %126 : vector<1x96xf32> to vector<8x96xf32>
        %491 = arith.mulf %489, %490 : vector<8x96xf32>
        %492 = arith.subf %406, %491 : vector<8x96xf32>
        %493 = vector.broadcast %127 : vector<1x96xf32> to vector<8x96xf32>
        %494 = arith.mulf %489, %493 : vector<8x96xf32>
        %495 = arith.subf %409, %494 : vector<8x96xf32>
        %496 = vector.broadcast %128 : vector<1x96xf32> to vector<8x96xf32>
        %497 = arith.mulf %489, %496 : vector<8x96xf32>
        %498 = arith.subf %412, %497 : vector<8x96xf32>
        %499 = arith.mulf %492, %492 : vector<8x96xf32>
        %500 = arith.mulf %495, %495 : vector<8x96xf32>
        %501 = arith.addf %499, %500 : vector<8x96xf32>
        %502 = arith.mulf %498, %498 : vector<8x96xf32>
        %503 = arith.addf %501, %502 : vector<8x96xf32>
        %504 = vector.broadcast %129 : vector<1x96xf32> to vector<8x96xf32>
        %505 = arith.mulf %415, %504 : vector<8x96xf32>
        %506 = vector.broadcast %130 : vector<1x96xf32> to vector<8x96xf32>
        %507 = arith.mulf %418, %506 : vector<8x96xf32>
        %508 = arith.addf %505, %507 : vector<8x96xf32>
        %509 = vector.broadcast %131 : vector<1x96xf32> to vector<8x96xf32>
        %510 = arith.mulf %421, %509 : vector<8x96xf32>
        %511 = arith.addf %508, %510 : vector<8x96xf32>
        %512 = vector.broadcast %136 : vector<1x96xf32> to vector<8x96xf32>
        %513 = arith.mulf %511, %512 : vector<8x96xf32>
        %cst_383 = arith.constant 0.000000e+00 : f32
        %cst_384 = arith.constant 1.000000e+00 : f32
        %514 = vector.broadcast %cst_383 : f32 to vector<8x96xf32>
        %515 = arith.maximumf %514, %513 : vector<8x96xf32>
        %516 = vector.broadcast %cst_384 : f32 to vector<8x96xf32>
        %517 = arith.minimumf %516, %515 : vector<8x96xf32>
        %518 = vector.broadcast %129 : vector<1x96xf32> to vector<8x96xf32>
        %519 = arith.mulf %517, %518 : vector<8x96xf32>
        %520 = arith.subf %415, %519 : vector<8x96xf32>
        %521 = vector.broadcast %130 : vector<1x96xf32> to vector<8x96xf32>
        %522 = arith.mulf %517, %521 : vector<8x96xf32>
        %523 = arith.subf %418, %522 : vector<8x96xf32>
        %524 = vector.broadcast %131 : vector<1x96xf32> to vector<8x96xf32>
        %525 = arith.mulf %517, %524 : vector<8x96xf32>
        %526 = arith.subf %421, %525 : vector<8x96xf32>
        %527 = arith.mulf %520, %520 : vector<8x96xf32>
        %528 = arith.mulf %523, %523 : vector<8x96xf32>
        %529 = arith.addf %527, %528 : vector<8x96xf32>
        %530 = arith.mulf %526, %526 : vector<8x96xf32>
        %531 = arith.addf %529, %530 : vector<8x96xf32>
        %532 = vector.broadcast %132 : vector<1x96xf32> to vector<8x96xf32>
        %533 = arith.mulf %424, %532 : vector<8x96xf32>
        %534 = vector.broadcast %133 : vector<1x96xf32> to vector<8x96xf32>
        %535 = arith.mulf %427, %534 : vector<8x96xf32>
        %536 = arith.addf %533, %535 : vector<8x96xf32>
        %537 = vector.broadcast %134 : vector<1x96xf32> to vector<8x96xf32>
        %538 = arith.mulf %430, %537 : vector<8x96xf32>
        %539 = arith.addf %536, %538 : vector<8x96xf32>
        %540 = vector.broadcast %137 : vector<1x96xf32> to vector<8x96xf32>
        %541 = arith.mulf %539, %540 : vector<8x96xf32>
        %cst_385 = arith.constant 0.000000e+00 : f32
        %cst_386 = arith.constant 1.000000e+00 : f32
        %542 = vector.broadcast %cst_385 : f32 to vector<8x96xf32>
        %543 = arith.maximumf %542, %541 : vector<8x96xf32>
        %544 = vector.broadcast %cst_386 : f32 to vector<8x96xf32>
        %545 = arith.minimumf %544, %543 : vector<8x96xf32>
        %546 = vector.broadcast %132 : vector<1x96xf32> to vector<8x96xf32>
        %547 = arith.mulf %545, %546 : vector<8x96xf32>
        %548 = arith.subf %424, %547 : vector<8x96xf32>
        %549 = vector.broadcast %133 : vector<1x96xf32> to vector<8x96xf32>
        %550 = arith.mulf %545, %549 : vector<8x96xf32>
        %551 = arith.subf %427, %550 : vector<8x96xf32>
        %552 = vector.broadcast %134 : vector<1x96xf32> to vector<8x96xf32>
        %553 = arith.mulf %545, %552 : vector<8x96xf32>
        %554 = arith.subf %430, %553 : vector<8x96xf32>
        %555 = arith.mulf %548, %548 : vector<8x96xf32>
        %556 = arith.mulf %551, %551 : vector<8x96xf32>
        %557 = arith.addf %555, %556 : vector<8x96xf32>
        %558 = arith.mulf %554, %554 : vector<8x96xf32>
        %559 = arith.addf %557, %558 : vector<8x96xf32>
        %560 = arith.minimumf %531, %559 : vector<8x96xf32>
        %561 = arith.minimumf %503, %560 : vector<8x96xf32>
        %562 = arith.select %475, %441, %561 : vector<8x96xi1>, vector<8x96xf32>
        %563 = vector.extract_strided_slice %562 {offsets = [0, 0], sizes = [8, 48], strides = [1, 1]} : vector<8x96xf32> to vector<8x48xf32>
        %564 = vector.extract_strided_slice %562 {offsets = [0, 48], sizes = [8, 48], strides = [1, 1]} : vector<8x96xf32> to vector<8x48xf32>
        %565 = arith.minimumf %563, %564 : vector<8x48xf32>
        %566 = math.sqrt %565 : vector<8x48xf32>
        %567 = vector.broadcast %403 : vector<8x1xf32> to vector<8x48xf32>
        %568 = arith.mulf %566, %567 : vector<8x48xf32>
        %569 = arith.addf %arg8, %568 : vector<8x48xf32>
        scf.yield %569 : vector<8x48xf32>
      }
      %c16_i32_135 = arith.constant 16 : i32
      %c2_136 = arith.constant 2 : index
      %c0_137 = arith.constant 0 : index
      %147 = vector.load %arg6[%c2_136, %c0_137] : memref<8x48xf32, #tpu.memory_space<vmem>>, vector<1x48xf32>
      %cst_138 = arith.constant dense<0.000000e+00> : vector<48xf32>
      %148 = vector.multi_reduction <add>, %146, %cst_138 [0] : vector<8x48xf32> to vector<48xf32>
      %149 = vector.shape_cast %148 : vector<48xf32> to vector<1x48xf32>
      %150 = arith.addf %147, %149 : vector<1x48xf32>
      %c2_139 = arith.constant 2 : index
      %c0_140 = arith.constant 0 : index
      %151 = vector.load %arg6[%c2_139, %c0_140] : memref<8x48xf32, #tpu.memory_space<vmem>>, vector<1x48xf32>
      tpu.vector_store %arg6[%c2_139, %c0_140], %150 {strides = array<i32>} : memref<8x48xf32, #tpu.memory_space<vmem>>, vector<1x48xf32>,
      %c105 = arith.constant 105 : index
      %c0_141 = arith.constant 0 : index
      %152 = vector.load %arg4[%c105, %c0_141] : memref<280x96xf32, #tpu.memory_space<vmem>>, vector<1x96xf32>
      %c106 = arith.constant 106 : index
      %c0_142 = arith.constant 0 : index
      %153 = vector.load %arg4[%c106, %c0_142] : memref<280x96xf32, #tpu.memory_space<vmem>>, vector<1x96xf32>
      %c107 = arith.constant 107 : index
      %c0_143 = arith.constant 0 : index
      %154 = vector.load %arg4[%c107, %c0_143] : memref<280x96xf32, #tpu.memory_space<vmem>>, vector<1x96xf32>
      %c108 = arith.constant 108 : index
      %c0_144 = arith.constant 0 : index
      %155 = vector.load %arg4[%c108, %c0_144] : memref<280x96xf32, #tpu.memory_space<vmem>>, vector<1x96xf32>
      %c109 = arith.constant 109 : index
      %c0_145 = arith.constant 0 : index
      %156 = vector.load %arg4[%c109, %c0_145] : memref<280x96xf32, #tpu.memory_space<vmem>>, vector<1x96xf32>
      %c110 = arith.constant 110 : index
      %c0_146 = arith.constant 0 : index
      %157 = vector.load %arg4[%c110, %c0_146] : memref<280x96xf32, #tpu.memory_space<vmem>>, vector<1x96xf32>
      %c111 = arith.constant 111 : index
      %c0_147 = arith.constant 0 : index
      %158 = vector.load %arg4[%c111, %c0_147] : memref<280x96xf32, #tpu.memory_space<vmem>>, vector<1x96xf32>
      %c112 = arith.constant 112 : index
      %c0_148 = arith.constant 0 : index
      %159 = vector.load %arg4[%c112, %c0_148] : memref<280x96xf32, #tpu.memory_space<vmem>>, vector<1x96xf32>
      %c113 = arith.constant 113 : index
      %c0_149 = arith.constant 0 : index
      %160 = vector.load %arg4[%c113, %c0_149] : memref<280x96xf32, #tpu.memory_space<vmem>>, vector<1x96xf32>
      %c114 = arith.constant 114 : index
      %c0_150 = arith.constant 0 : index
      %161 = vector.load %arg4[%c114, %c0_150] : memref<280x96xf32, #tpu.memory_space<vmem>>, vector<1x96xf32>
      %c115 = arith.constant 115 : index
      %c0_151 = arith.constant 0 : index
      %162 = vector.load %arg4[%c115, %c0_151] : memref<280x96xf32, #tpu.memory_space<vmem>>, vector<1x96xf32>
      %c116 = arith.constant 116 : index
      %c0_152 = arith.constant 0 : index
      %163 = vector.load %arg4[%c116, %c0_152] : memref<280x96xf32, #tpu.memory_space<vmem>>, vector<1x96xf32>
      %c117 = arith.constant 117 : index
      %c0_153 = arith.constant 0 : index
      %164 = vector.load %arg4[%c117, %c0_153] : memref<280x96xf32, #tpu.memory_space<vmem>>, vector<1x96xf32>
      %c118 = arith.constant 118 : index
      %c0_154 = arith.constant 0 : index
      %165 = vector.load %arg4[%c118, %c0_154] : memref<280x96xf32, #tpu.memory_space<vmem>>, vector<1x96xf32>
      %c119 = arith.constant 119 : index
      %c0_155 = arith.constant 0 : index
      %166 = vector.load %arg4[%c119, %c0_155] : memref<280x96xf32, #tpu.memory_space<vmem>>, vector<1x96xf32>
      %c120 = arith.constant 120 : index
      %c0_156 = arith.constant 0 : index
      %167 = vector.load %arg4[%c120, %c0_156] : memref<280x96xf32, #tpu.memory_space<vmem>>, vector<1x96xf32>
      %c121 = arith.constant 121 : index
      %c0_157 = arith.constant 0 : index
      %168 = vector.load %arg4[%c121, %c0_157] : memref<280x96xf32, #tpu.memory_space<vmem>>, vector<1x96xf32>
      %c122 = arith.constant 122 : index
      %c0_158 = arith.constant 0 : index
      %169 = vector.load %arg4[%c122, %c0_158] : memref<280x96xf32, #tpu.memory_space<vmem>>, vector<1x96xf32>
      %c123 = arith.constant 123 : index
      %c0_159 = arith.constant 0 : index
      %170 = vector.load %arg4[%c123, %c0_159] : memref<280x96xf32, #tpu.memory_space<vmem>>, vector<1x96xf32>
      %c124 = arith.constant 124 : index
      %c0_160 = arith.constant 0 : index
      %171 = vector.load %arg4[%c124, %c0_160] : memref<280x96xf32, #tpu.memory_space<vmem>>, vector<1x96xf32>
      %c125 = arith.constant 125 : index
      %c0_161 = arith.constant 0 : index
      %172 = vector.load %arg4[%c125, %c0_161] : memref<280x96xf32, #tpu.memory_space<vmem>>, vector<1x96xf32>
      %c126 = arith.constant 126 : index
      %c0_162 = arith.constant 0 : index
      %173 = vector.load %arg4[%c126, %c0_162] : memref<280x96xf32, #tpu.memory_space<vmem>>, vector<1x96xf32>
      %c127 = arith.constant 127 : index
      %c0_163 = arith.constant 0 : index
      %174 = vector.load %arg4[%c127, %c0_163] : memref<280x96xf32, #tpu.memory_space<vmem>>, vector<1x96xf32>
      %c128 = arith.constant 128 : index
      %c0_164 = arith.constant 0 : index
      %175 = vector.load %arg4[%c128, %c0_164] : memref<280x96xf32, #tpu.memory_space<vmem>>, vector<1x96xf32>
      %c129 = arith.constant 129 : index
      %c0_165 = arith.constant 0 : index
      %176 = vector.load %arg4[%c129, %c0_165] : memref<280x96xf32, #tpu.memory_space<vmem>>, vector<1x96xf32>
      %c130 = arith.constant 130 : index
      %c0_166 = arith.constant 0 : index
      %177 = vector.load %arg4[%c130, %c0_166] : memref<280x96xf32, #tpu.memory_space<vmem>>, vector<1x96xf32>
      %c131 = arith.constant 131 : index
      %c0_167 = arith.constant 0 : index
      %178 = vector.load %arg4[%c131, %c0_167] : memref<280x96xf32, #tpu.memory_space<vmem>>, vector<1x96xf32>
      %c132 = arith.constant 132 : index
      %c0_168 = arith.constant 0 : index
      %179 = vector.load %arg4[%c132, %c0_168] : memref<280x96xf32, #tpu.memory_space<vmem>>, vector<1x96xf32>
      %c133 = arith.constant 133 : index
      %c0_169 = arith.constant 0 : index
      %180 = vector.load %arg4[%c133, %c0_169] : memref<280x96xf32, #tpu.memory_space<vmem>>, vector<1x96xf32>
      %c134 = arith.constant 134 : index
      %c0_170 = arith.constant 0 : index
      %181 = vector.load %arg4[%c134, %c0_170] : memref<280x96xf32, #tpu.memory_space<vmem>>, vector<1x96xf32>
      %c135 = arith.constant 135 : index
      %c0_171 = arith.constant 0 : index
      %182 = vector.load %arg4[%c135, %c0_171] : memref<280x96xf32, #tpu.memory_space<vmem>>, vector<1x96xf32>
      %c136 = arith.constant 136 : index
      %c0_172 = arith.constant 0 : index
      %183 = vector.load %arg4[%c136, %c0_172] : memref<280x96xf32, #tpu.memory_space<vmem>>, vector<1x96xf32>
      %c137 = arith.constant 137 : index
      %c0_173 = arith.constant 0 : index
      %184 = vector.load %arg4[%c137, %c0_173] : memref<280x96xf32, #tpu.memory_space<vmem>>, vector<1x96xf32>
      %c138 = arith.constant 138 : index
      %c0_174 = arith.constant 0 : index
      %185 = vector.load %arg4[%c138, %c0_174] : memref<280x96xf32, #tpu.memory_space<vmem>>, vector<1x96xf32>
      %c139 = arith.constant 139 : index
      %c0_175 = arith.constant 0 : index
      %186 = vector.load %arg4[%c139, %c0_175] : memref<280x96xf32, #tpu.memory_space<vmem>>, vector<1x96xf32>
      %cst_176 = arith.constant 5.000000e-01 : f32
      %187 = vector.broadcast %cst_176 : f32 to vector<1x96xf32>
      %188 = arith.cmpf ogt, %186, %187 : vector<1x96xf32>
      %c8_i32_177 = arith.constant 8 : i32
      %189 = arith.muli %arg0, %c8_i32_177 : i32
      %c3_i32 = arith.constant 3 : i32
      %190 = arith.addi %189, %c3_i32 : i32
      %191 = arith.sitofp %190 : i32 to f32
      %cst_178 = arith.constant 0.000000e+00 : f32
      %192 = vector.broadcast %cst_178 : f32 to vector<8x48xf32>
      %c0_i32_179 = arith.constant 0 : i32
      %c16_i32_180 = arith.constant 16 : i32
      %193 = arith.addi %c0_i32_179, %c16_i32_180 : i32
      %c1_i32_181 = arith.constant 1 : i32
      %194 = scf.for %arg7 = %c0_i32_179 to %193 step %c1_i32_181 iter_args(%arg8 = %192) -> (vector<8x48xf32>)  : i32 {
        %c8_i32_376 = arith.constant 8 : i32
        %392 = arith.muli %arg7, %c8_i32_376 : i32
        %393 = tpu.assume_multiple %392, 8 : i32
        %394 = arith.index_cast %393 : i32 to index
        %c0_377 = arith.constant 0 : index
        %395 = vector.load %arg5[%394, %c0_377] : memref<128x4xf32, #tpu.memory_space<vmem>>, vector<8x4xf32>
        %396 = vector.extract_strided_slice %395 {offsets = [0, 0], sizes = [8, 1], strides = [1, 1]} : vector<8x4xf32> to vector<8x1xf32>
        %397 = vector.extract_strided_slice %395 {offsets = [0, 1], sizes = [8, 1], strides = [1, 1]} : vector<8x4xf32> to vector<8x1xf32>
        %398 = vector.extract_strided_slice %395 {offsets = [0, 2], sizes = [8, 1], strides = [1, 1]} : vector<8x4xf32> to vector<8x1xf32>
        %399 = vector.extract_strided_slice %395 {offsets = [0, 3], sizes = [8, 1], strides = [1, 1]} : vector<8x4xf32> to vector<8x1xf32>
        %400 = vector.broadcast %191 : f32 to vector<8x1xf32>
        %401 = arith.cmpf oeq, %399, %400 : vector<8x1xf32>
        %402 = arith.extui %401 : vector<8x1xi1> to vector<8x1xi32>
        %403 = arith.sitofp %402 : vector<8x1xi32> to vector<8x1xf32>
        %404 = vector.broadcast %396 : vector<8x1xf32> to vector<8x96xf32>
        %405 = vector.broadcast %152 : vector<1x96xf32> to vector<8x96xf32>
        %406 = arith.subf %404, %405 : vector<8x96xf32>
        %407 = vector.broadcast %397 : vector<8x1xf32> to vector<8x96xf32>
        %408 = vector.broadcast %153 : vector<1x96xf32> to vector<8x96xf32>
        %409 = arith.subf %407, %408 : vector<8x96xf32>
        %410 = vector.broadcast %398 : vector<8x1xf32> to vector<8x96xf32>
        %411 = vector.broadcast %154 : vector<1x96xf32> to vector<8x96xf32>
        %412 = arith.subf %410, %411 : vector<8x96xf32>
        %413 = vector.broadcast %396 : vector<8x1xf32> to vector<8x96xf32>
        %414 = vector.broadcast %155 : vector<1x96xf32> to vector<8x96xf32>
        %415 = arith.subf %413, %414 : vector<8x96xf32>
        %416 = vector.broadcast %397 : vector<8x1xf32> to vector<8x96xf32>
        %417 = vector.broadcast %156 : vector<1x96xf32> to vector<8x96xf32>
        %418 = arith.subf %416, %417 : vector<8x96xf32>
        %419 = vector.broadcast %398 : vector<8x1xf32> to vector<8x96xf32>
        %420 = vector.broadcast %157 : vector<1x96xf32> to vector<8x96xf32>
        %421 = arith.subf %419, %420 : vector<8x96xf32>
        %422 = vector.broadcast %396 : vector<8x1xf32> to vector<8x96xf32>
        %423 = vector.broadcast %158 : vector<1x96xf32> to vector<8x96xf32>
        %424 = arith.subf %422, %423 : vector<8x96xf32>
        %425 = vector.broadcast %397 : vector<8x1xf32> to vector<8x96xf32>
        %426 = vector.broadcast %159 : vector<1x96xf32> to vector<8x96xf32>
        %427 = arith.subf %425, %426 : vector<8x96xf32>
        %428 = vector.broadcast %398 : vector<8x1xf32> to vector<8x96xf32>
        %429 = vector.broadcast %160 : vector<1x96xf32> to vector<8x96xf32>
        %430 = arith.subf %428, %429 : vector<8x96xf32>
        %431 = vector.broadcast %161 : vector<1x96xf32> to vector<8x96xf32>
        %432 = arith.mulf %406, %431 : vector<8x96xf32>
        %433 = vector.broadcast %162 : vector<1x96xf32> to vector<8x96xf32>
        %434 = arith.mulf %409, %433 : vector<8x96xf32>
        %435 = arith.addf %432, %434 : vector<8x96xf32>
        %436 = vector.broadcast %163 : vector<1x96xf32> to vector<8x96xf32>
        %437 = arith.mulf %412, %436 : vector<8x96xf32>
        %438 = arith.addf %435, %437 : vector<8x96xf32>
        %439 = arith.mulf %438, %438 : vector<8x96xf32>
        %440 = vector.broadcast %164 : vector<1x96xf32> to vector<8x96xf32>
        %441 = arith.mulf %439, %440 : vector<8x96xf32>
        %442 = vector.broadcast %165 : vector<1x96xf32> to vector<8x96xf32>
        %443 = arith.mulf %406, %442 : vector<8x96xf32>
        %444 = vector.broadcast %166 : vector<1x96xf32> to vector<8x96xf32>
        %445 = arith.mulf %409, %444 : vector<8x96xf32>
        %446 = arith.addf %443, %445 : vector<8x96xf32>
        %447 = vector.broadcast %167 : vector<1x96xf32> to vector<8x96xf32>
        %448 = arith.mulf %412, %447 : vector<8x96xf32>
        %449 = arith.addf %446, %448 : vector<8x96xf32>
        %450 = vector.broadcast %168 : vector<1x96xf32> to vector<8x96xf32>
        %451 = arith.mulf %415, %450 : vector<8x96xf32>
        %452 = vector.broadcast %169 : vector<1x96xf32> to vector<8x96xf32>
        %453 = arith.mulf %418, %452 : vector<8x96xf32>
        %454 = arith.addf %451, %453 : vector<8x96xf32>
        %455 = vector.broadcast %170 : vector<1x96xf32> to vector<8x96xf32>
        %456 = arith.mulf %421, %455 : vector<8x96xf32>
        %457 = arith.addf %454, %456 : vector<8x96xf32>
        %458 = vector.broadcast %171 : vector<1x96xf32> to vector<8x96xf32>
        %459 = arith.mulf %424, %458 : vector<8x96xf32>
        %460 = vector.broadcast %172 : vector<1x96xf32> to vector<8x96xf32>
        %461 = arith.mulf %427, %460 : vector<8x96xf32>
        %462 = arith.addf %459, %461 : vector<8x96xf32>
        %463 = vector.broadcast %173 : vector<1x96xf32> to vector<8x96xf32>
        %464 = arith.mulf %430, %463 : vector<8x96xf32>
        %465 = arith.addf %462, %464 : vector<8x96xf32>
        %cst_378 = arith.constant 0.000000e+00 : f32
        %466 = vector.broadcast %cst_378 : f32 to vector<8x96xf32>
        %467 = arith.cmpf oge, %449, %466 : vector<8x96xf32>
        %cst_379 = arith.constant 0.000000e+00 : f32
        %468 = vector.broadcast %cst_379 : f32 to vector<8x96xf32>
        %469 = arith.cmpf oge, %457, %468 : vector<8x96xf32>
        %470 = arith.andi %467, %469 : vector<8x96xi1>
        %cst_380 = arith.constant 0.000000e+00 : f32
        %471 = vector.broadcast %cst_380 : f32 to vector<8x96xf32>
        %472 = arith.cmpf oge, %465, %471 : vector<8x96xf32>
        %473 = arith.andi %470, %472 : vector<8x96xi1>
        %474 = vector.broadcast %188 : vector<1x96xi1> to vector<8x96xi1>
        %475 = arith.andi %473, %474 : vector<8x96xi1>
        %476 = vector.broadcast %174 : vector<1x96xf32> to vector<8x96xf32>
        %477 = arith.mulf %406, %476 : vector<8x96xf32>
        %478 = vector.broadcast %175 : vector<1x96xf32> to vector<8x96xf32>
        %479 = arith.mulf %409, %478 : vector<8x96xf32>
        %480 = arith.addf %477, %479 : vector<8x96xf32>
        %481 = vector.broadcast %176 : vector<1x96xf32> to vector<8x96xf32>
        %482 = arith.mulf %412, %481 : vector<8x96xf32>
        %483 = arith.addf %480, %482 : vector<8x96xf32>
        %484 = vector.broadcast %183 : vector<1x96xf32> to vector<8x96xf32>
        %485 = arith.mulf %483, %484 : vector<8x96xf32>
        %cst_381 = arith.constant 0.000000e+00 : f32
        %cst_382 = arith.constant 1.000000e+00 : f32
        %486 = vector.broadcast %cst_381 : f32 to vector<8x96xf32>
        %487 = arith.maximumf %486, %485 : vector<8x96xf32>
        %488 = vector.broadcast %cst_382 : f32 to vector<8x96xf32>
        %489 = arith.minimumf %488, %487 : vector<8x96xf32>
        %490 = vector.broadcast %174 : vector<1x96xf32> to vector<8x96xf32>
        %491 = arith.mulf %489, %490 : vector<8x96xf32>
        %492 = arith.subf %406, %491 : vector<8x96xf32>
        %493 = vector.broadcast %175 : vector<1x96xf32> to vector<8x96xf32>
        %494 = arith.mulf %489, %493 : vector<8x96xf32>
        %495 = arith.subf %409, %494 : vector<8x96xf32>
        %496 = vector.broadcast %176 : vector<1x96xf32> to vector<8x96xf32>
        %497 = arith.mulf %489, %496 : vector<8x96xf32>
        %498 = arith.subf %412, %497 : vector<8x96xf32>
        %499 = arith.mulf %492, %492 : vector<8x96xf32>
        %500 = arith.mulf %495, %495 : vector<8x96xf32>
        %501 = arith.addf %499, %500 : vector<8x96xf32>
        %502 = arith.mulf %498, %498 : vector<8x96xf32>
        %503 = arith.addf %501, %502 : vector<8x96xf32>
        %504 = vector.broadcast %177 : vector<1x96xf32> to vector<8x96xf32>
        %505 = arith.mulf %415, %504 : vector<8x96xf32>
        %506 = vector.broadcast %178 : vector<1x96xf32> to vector<8x96xf32>
        %507 = arith.mulf %418, %506 : vector<8x96xf32>
        %508 = arith.addf %505, %507 : vector<8x96xf32>
        %509 = vector.broadcast %179 : vector<1x96xf32> to vector<8x96xf32>
        %510 = arith.mulf %421, %509 : vector<8x96xf32>
        %511 = arith.addf %508, %510 : vector<8x96xf32>
        %512 = vector.broadcast %184 : vector<1x96xf32> to vector<8x96xf32>
        %513 = arith.mulf %511, %512 : vector<8x96xf32>
        %cst_383 = arith.constant 0.000000e+00 : f32
        %cst_384 = arith.constant 1.000000e+00 : f32
        %514 = vector.broadcast %cst_383 : f32 to vector<8x96xf32>
        %515 = arith.maximumf %514, %513 : vector<8x96xf32>
        %516 = vector.broadcast %cst_384 : f32 to vector<8x96xf32>
        %517 = arith.minimumf %516, %515 : vector<8x96xf32>
        %518 = vector.broadcast %177 : vector<1x96xf32> to vector<8x96xf32>
        %519 = arith.mulf %517, %518 : vector<8x96xf32>
        %520 = arith.subf %415, %519 : vector<8x96xf32>
        %521 = vector.broadcast %178 : vector<1x96xf32> to vector<8x96xf32>
        %522 = arith.mulf %517, %521 : vector<8x96xf32>
        %523 = arith.subf %418, %522 : vector<8x96xf32>
        %524 = vector.broadcast %179 : vector<1x96xf32> to vector<8x96xf32>
        %525 = arith.mulf %517, %524 : vector<8x96xf32>
        %526 = arith.subf %421, %525 : vector<8x96xf32>
        %527 = arith.mulf %520, %520 : vector<8x96xf32>
        %528 = arith.mulf %523, %523 : vector<8x96xf32>
        %529 = arith.addf %527, %528 : vector<8x96xf32>
        %530 = arith.mulf %526, %526 : vector<8x96xf32>
        %531 = arith.addf %529, %530 : vector<8x96xf32>
        %532 = vector.broadcast %180 : vector<1x96xf32> to vector<8x96xf32>
        %533 = arith.mulf %424, %532 : vector<8x96xf32>
        %534 = vector.broadcast %181 : vector<1x96xf32> to vector<8x96xf32>
        %535 = arith.mulf %427, %534 : vector<8x96xf32>
        %536 = arith.addf %533, %535 : vector<8x96xf32>
        %537 = vector.broadcast %182 : vector<1x96xf32> to vector<8x96xf32>
        %538 = arith.mulf %430, %537 : vector<8x96xf32>
        %539 = arith.addf %536, %538 : vector<8x96xf32>
        %540 = vector.broadcast %185 : vector<1x96xf32> to vector<8x96xf32>
        %541 = arith.mulf %539, %540 : vector<8x96xf32>
        %cst_385 = arith.constant 0.000000e+00 : f32
        %cst_386 = arith.constant 1.000000e+00 : f32
        %542 = vector.broadcast %cst_385 : f32 to vector<8x96xf32>
        %543 = arith.maximumf %542, %541 : vector<8x96xf32>
        %544 = vector.broadcast %cst_386 : f32 to vector<8x96xf32>
        %545 = arith.minimumf %544, %543 : vector<8x96xf32>
        %546 = vector.broadcast %180 : vector<1x96xf32> to vector<8x96xf32>
        %547 = arith.mulf %545, %546 : vector<8x96xf32>
        %548 = arith.subf %424, %547 : vector<8x96xf32>
        %549 = vector.broadcast %181 : vector<1x96xf32> to vector<8x96xf32>
        %550 = arith.mulf %545, %549 : vector<8x96xf32>
        %551 = arith.subf %427, %550 : vector<8x96xf32>
        %552 = vector.broadcast %182 : vector<1x96xf32> to vector<8x96xf32>
        %553 = arith.mulf %545, %552 : vector<8x96xf32>
        %554 = arith.subf %430, %553 : vector<8x96xf32>
        %555 = arith.mulf %548, %548 : vector<8x96xf32>
        %556 = arith.mulf %551, %551 : vector<8x96xf32>
        %557 = arith.addf %555, %556 : vector<8x96xf32>
        %558 = arith.mulf %554, %554 : vector<8x96xf32>
        %559 = arith.addf %557, %558 : vector<8x96xf32>
        %560 = arith.minimumf %531, %559 : vector<8x96xf32>
        %561 = arith.minimumf %503, %560 : vector<8x96xf32>
        %562 = arith.select %475, %441, %561 : vector<8x96xi1>, vector<8x96xf32>
        %563 = vector.extract_strided_slice %562 {offsets = [0, 0], sizes = [8, 48], strides = [1, 1]} : vector<8x96xf32> to vector<8x48xf32>
        %564 = vector.extract_strided_slice %562 {offsets = [0, 48], sizes = [8, 48], strides = [1, 1]} : vector<8x96xf32> to vector<8x48xf32>
        %565 = arith.minimumf %563, %564 : vector<8x48xf32>
        %566 = math.sqrt %565 : vector<8x48xf32>
        %567 = vector.broadcast %403 : vector<8x1xf32> to vector<8x48xf32>
        %568 = arith.mulf %566, %567 : vector<8x48xf32>
        %569 = arith.addf %arg8, %568 : vector<8x48xf32>
        scf.yield %569 : vector<8x48xf32>
      }
      %c16_i32_182 = arith.constant 16 : i32
      %c3_183 = arith.constant 3 : index
      %c0_184 = arith.constant 0 : index
      %195 = vector.load %arg6[%c3_183, %c0_184] : memref<8x48xf32, #tpu.memory_space<vmem>>, vector<1x48xf32>
      %cst_185 = arith.constant dense<0.000000e+00> : vector<48xf32>
      %196 = vector.multi_reduction <add>, %194, %cst_185 [0] : vector<8x48xf32> to vector<48xf32>
      %197 = vector.shape_cast %196 : vector<48xf32> to vector<1x48xf32>
      %198 = arith.addf %195, %197 : vector<1x48xf32>
      %c3_186 = arith.constant 3 : index
      %c0_187 = arith.constant 0 : index
      %199 = vector.load %arg6[%c3_186, %c0_187] : memref<8x48xf32, #tpu.memory_space<vmem>>, vector<1x48xf32>
      tpu.vector_store %arg6[%c3_186, %c0_187], %198 {strides = array<i32>} : memref<8x48xf32, #tpu.memory_space<vmem>>, vector<1x48xf32>,
      %c140 = arith.constant 140 : index
      %c0_188 = arith.constant 0 : index
      %200 = vector.load %arg4[%c140, %c0_188] : memref<280x96xf32, #tpu.memory_space<vmem>>, vector<1x96xf32>
      %c141 = arith.constant 141 : index
      %c0_189 = arith.constant 0 : index
      %201 = vector.load %arg4[%c141, %c0_189] : memref<280x96xf32, #tpu.memory_space<vmem>>, vector<1x96xf32>
      %c142 = arith.constant 142 : index
      %c0_190 = arith.constant 0 : index
      %202 = vector.load %arg4[%c142, %c0_190] : memref<280x96xf32, #tpu.memory_space<vmem>>, vector<1x96xf32>
      %c143 = arith.constant 143 : index
      %c0_191 = arith.constant 0 : index
      %203 = vector.load %arg4[%c143, %c0_191] : memref<280x96xf32, #tpu.memory_space<vmem>>, vector<1x96xf32>
      %c144 = arith.constant 144 : index
      %c0_192 = arith.constant 0 : index
      %204 = vector.load %arg4[%c144, %c0_192] : memref<280x96xf32, #tpu.memory_space<vmem>>, vector<1x96xf32>
      %c145 = arith.constant 145 : index
      %c0_193 = arith.constant 0 : index
      %205 = vector.load %arg4[%c145, %c0_193] : memref<280x96xf32, #tpu.memory_space<vmem>>, vector<1x96xf32>
      %c146 = arith.constant 146 : index
      %c0_194 = arith.constant 0 : index
      %206 = vector.load %arg4[%c146, %c0_194] : memref<280x96xf32, #tpu.memory_space<vmem>>, vector<1x96xf32>
      %c147 = arith.constant 147 : index
      %c0_195 = arith.constant 0 : index
      %207 = vector.load %arg4[%c147, %c0_195] : memref<280x96xf32, #tpu.memory_space<vmem>>, vector<1x96xf32>
      %c148 = arith.constant 148 : index
      %c0_196 = arith.constant 0 : index
      %208 = vector.load %arg4[%c148, %c0_196] : memref<280x96xf32, #tpu.memory_space<vmem>>, vector<1x96xf32>
      %c149 = arith.constant 149 : index
      %c0_197 = arith.constant 0 : index
      %209 = vector.load %arg4[%c149, %c0_197] : memref<280x96xf32, #tpu.memory_space<vmem>>, vector<1x96xf32>
      %c150 = arith.constant 150 : index
      %c0_198 = arith.constant 0 : index
      %210 = vector.load %arg4[%c150, %c0_198] : memref<280x96xf32, #tpu.memory_space<vmem>>, vector<1x96xf32>
      %c151 = arith.constant 151 : index
      %c0_199 = arith.constant 0 : index
      %211 = vector.load %arg4[%c151, %c0_199] : memref<280x96xf32, #tpu.memory_space<vmem>>, vector<1x96xf32>
      %c152 = arith.constant 152 : index
      %c0_200 = arith.constant 0 : index
      %212 = vector.load %arg4[%c152, %c0_200] : memref<280x96xf32, #tpu.memory_space<vmem>>, vector<1x96xf32>
      %c153 = arith.constant 153 : index
      %c0_201 = arith.constant 0 : index
      %213 = vector.load %arg4[%c153, %c0_201] : memref<280x96xf32, #tpu.memory_space<vmem>>, vector<1x96xf32>
      %c154 = arith.constant 154 : index
      %c0_202 = arith.constant 0 : index
      %214 = vector.load %arg4[%c154, %c0_202] : memref<280x96xf32, #tpu.memory_space<vmem>>, vector<1x96xf32>
      %c155 = arith.constant 155 : index
      %c0_203 = arith.constant 0 : index
      %215 = vector.load %arg4[%c155, %c0_203] : memref<280x96xf32, #tpu.memory_space<vmem>>, vector<1x96xf32>
      %c156 = arith.constant 156 : index
      %c0_204 = arith.constant 0 : index
      %216 = vector.load %arg4[%c156, %c0_204] : memref<280x96xf32, #tpu.memory_space<vmem>>, vector<1x96xf32>
      %c157 = arith.constant 157 : index
      %c0_205 = arith.constant 0 : index
      %217 = vector.load %arg4[%c157, %c0_205] : memref<280x96xf32, #tpu.memory_space<vmem>>, vector<1x96xf32>
      %c158 = arith.constant 158 : index
      %c0_206 = arith.constant 0 : index
      %218 = vector.load %arg4[%c158, %c0_206] : memref<280x96xf32, #tpu.memory_space<vmem>>, vector<1x96xf32>
      %c159 = arith.constant 159 : index
      %c0_207 = arith.constant 0 : index
      %219 = vector.load %arg4[%c159, %c0_207] : memref<280x96xf32, #tpu.memory_space<vmem>>, vector<1x96xf32>
      %c160 = arith.constant 160 : index
      %c0_208 = arith.constant 0 : index
      %220 = vector.load %arg4[%c160, %c0_208] : memref<280x96xf32, #tpu.memory_space<vmem>>, vector<1x96xf32>
      %c161 = arith.constant 161 : index
      %c0_209 = arith.constant 0 : index
      %221 = vector.load %arg4[%c161, %c0_209] : memref<280x96xf32, #tpu.memory_space<vmem>>, vector<1x96xf32>
      %c162 = arith.constant 162 : index
      %c0_210 = arith.constant 0 : index
      %222 = vector.load %arg4[%c162, %c0_210] : memref<280x96xf32, #tpu.memory_space<vmem>>, vector<1x96xf32>
      %c163 = arith.constant 163 : index
      %c0_211 = arith.constant 0 : index
      %223 = vector.load %arg4[%c163, %c0_211] : memref<280x96xf32, #tpu.memory_space<vmem>>, vector<1x96xf32>
      %c164 = arith.constant 164 : index
      %c0_212 = arith.constant 0 : index
      %224 = vector.load %arg4[%c164, %c0_212] : memref<280x96xf32, #tpu.memory_space<vmem>>, vector<1x96xf32>
      %c165 = arith.constant 165 : index
      %c0_213 = arith.constant 0 : index
      %225 = vector.load %arg4[%c165, %c0_213] : memref<280x96xf32, #tpu.memory_space<vmem>>, vector<1x96xf32>
      %c166 = arith.constant 166 : index
      %c0_214 = arith.constant 0 : index
      %226 = vector.load %arg4[%c166, %c0_214] : memref<280x96xf32, #tpu.memory_space<vmem>>, vector<1x96xf32>
      %c167 = arith.constant 167 : index
      %c0_215 = arith.constant 0 : index
      %227 = vector.load %arg4[%c167, %c0_215] : memref<280x96xf32, #tpu.memory_space<vmem>>, vector<1x96xf32>
      %c168 = arith.constant 168 : index
      %c0_216 = arith.constant 0 : index
      %228 = vector.load %arg4[%c168, %c0_216] : memref<280x96xf32, #tpu.memory_space<vmem>>, vector<1x96xf32>
      %c169 = arith.constant 169 : index
      %c0_217 = arith.constant 0 : index
      %229 = vector.load %arg4[%c169, %c0_217] : memref<280x96xf32, #tpu.memory_space<vmem>>, vector<1x96xf32>
      %c170 = arith.constant 170 : index
      %c0_218 = arith.constant 0 : index
      %230 = vector.load %arg4[%c170, %c0_218] : memref<280x96xf32, #tpu.memory_space<vmem>>, vector<1x96xf32>
      %c171 = arith.constant 171 : index
      %c0_219 = arith.constant 0 : index
      %231 = vector.load %arg4[%c171, %c0_219] : memref<280x96xf32, #tpu.memory_space<vmem>>, vector<1x96xf32>
      %c172 = arith.constant 172 : index
      %c0_220 = arith.constant 0 : index
      %232 = vector.load %arg4[%c172, %c0_220] : memref<280x96xf32, #tpu.memory_space<vmem>>, vector<1x96xf32>
      %c173 = arith.constant 173 : index
      %c0_221 = arith.constant 0 : index
      %233 = vector.load %arg4[%c173, %c0_221] : memref<280x96xf32, #tpu.memory_space<vmem>>, vector<1x96xf32>
      %c174 = arith.constant 174 : index
      %c0_222 = arith.constant 0 : index
      %234 = vector.load %arg4[%c174, %c0_222] : memref<280x96xf32, #tpu.memory_space<vmem>>, vector<1x96xf32>
      %cst_223 = arith.constant 5.000000e-01 : f32
      %235 = vector.broadcast %cst_223 : f32 to vector<1x96xf32>
      %236 = arith.cmpf ogt, %234, %235 : vector<1x96xf32>
      %c8_i32_224 = arith.constant 8 : i32
      %237 = arith.muli %arg0, %c8_i32_224 : i32
      %c4_i32 = arith.constant 4 : i32
      %238 = arith.addi %237, %c4_i32 : i32
      %239 = arith.sitofp %238 : i32 to f32
      %cst_225 = arith.constant 0.000000e+00 : f32
      %240 = vector.broadcast %cst_225 : f32 to vector<8x48xf32>
      %c0_i32_226 = arith.constant 0 : i32
      %c16_i32_227 = arith.constant 16 : i32
      %241 = arith.addi %c0_i32_226, %c16_i32_227 : i32
      %c1_i32_228 = arith.constant 1 : i32
      %242 = scf.for %arg7 = %c0_i32_226 to %241 step %c1_i32_228 iter_args(%arg8 = %240) -> (vector<8x48xf32>)  : i32 {
        %c8_i32_376 = arith.constant 8 : i32
        %392 = arith.muli %arg7, %c8_i32_376 : i32
        %393 = tpu.assume_multiple %392, 8 : i32
        %394 = arith.index_cast %393 : i32 to index
        %c0_377 = arith.constant 0 : index
        %395 = vector.load %arg5[%394, %c0_377] : memref<128x4xf32, #tpu.memory_space<vmem>>, vector<8x4xf32>
        %396 = vector.extract_strided_slice %395 {offsets = [0, 0], sizes = [8, 1], strides = [1, 1]} : vector<8x4xf32> to vector<8x1xf32>
        %397 = vector.extract_strided_slice %395 {offsets = [0, 1], sizes = [8, 1], strides = [1, 1]} : vector<8x4xf32> to vector<8x1xf32>
        %398 = vector.extract_strided_slice %395 {offsets = [0, 2], sizes = [8, 1], strides = [1, 1]} : vector<8x4xf32> to vector<8x1xf32>
        %399 = vector.extract_strided_slice %395 {offsets = [0, 3], sizes = [8, 1], strides = [1, 1]} : vector<8x4xf32> to vector<8x1xf32>
        %400 = vector.broadcast %239 : f32 to vector<8x1xf32>
        %401 = arith.cmpf oeq, %399, %400 : vector<8x1xf32>
        %402 = arith.extui %401 : vector<8x1xi1> to vector<8x1xi32>
        %403 = arith.sitofp %402 : vector<8x1xi32> to vector<8x1xf32>
        %404 = vector.broadcast %396 : vector<8x1xf32> to vector<8x96xf32>
        %405 = vector.broadcast %200 : vector<1x96xf32> to vector<8x96xf32>
        %406 = arith.subf %404, %405 : vector<8x96xf32>
        %407 = vector.broadcast %397 : vector<8x1xf32> to vector<8x96xf32>
        %408 = vector.broadcast %201 : vector<1x96xf32> to vector<8x96xf32>
        %409 = arith.subf %407, %408 : vector<8x96xf32>
        %410 = vector.broadcast %398 : vector<8x1xf32> to vector<8x96xf32>
        %411 = vector.broadcast %202 : vector<1x96xf32> to vector<8x96xf32>
        %412 = arith.subf %410, %411 : vector<8x96xf32>
        %413 = vector.broadcast %396 : vector<8x1xf32> to vector<8x96xf32>
        %414 = vector.broadcast %203 : vector<1x96xf32> to vector<8x96xf32>
        %415 = arith.subf %413, %414 : vector<8x96xf32>
        %416 = vector.broadcast %397 : vector<8x1xf32> to vector<8x96xf32>
        %417 = vector.broadcast %204 : vector<1x96xf32> to vector<8x96xf32>
        %418 = arith.subf %416, %417 : vector<8x96xf32>
        %419 = vector.broadcast %398 : vector<8x1xf32> to vector<8x96xf32>
        %420 = vector.broadcast %205 : vector<1x96xf32> to vector<8x96xf32>
        %421 = arith.subf %419, %420 : vector<8x96xf32>
        %422 = vector.broadcast %396 : vector<8x1xf32> to vector<8x96xf32>
        %423 = vector.broadcast %206 : vector<1x96xf32> to vector<8x96xf32>
        %424 = arith.subf %422, %423 : vector<8x96xf32>
        %425 = vector.broadcast %397 : vector<8x1xf32> to vector<8x96xf32>
        %426 = vector.broadcast %207 : vector<1x96xf32> to vector<8x96xf32>
        %427 = arith.subf %425, %426 : vector<8x96xf32>
        %428 = vector.broadcast %398 : vector<8x1xf32> to vector<8x96xf32>
        %429 = vector.broadcast %208 : vector<1x96xf32> to vector<8x96xf32>
        %430 = arith.subf %428, %429 : vector<8x96xf32>
        %431 = vector.broadcast %209 : vector<1x96xf32> to vector<8x96xf32>
        %432 = arith.mulf %406, %431 : vector<8x96xf32>
        %433 = vector.broadcast %210 : vector<1x96xf32> to vector<8x96xf32>
        %434 = arith.mulf %409, %433 : vector<8x96xf32>
        %435 = arith.addf %432, %434 : vector<8x96xf32>
        %436 = vector.broadcast %211 : vector<1x96xf32> to vector<8x96xf32>
        %437 = arith.mulf %412, %436 : vector<8x96xf32>
        %438 = arith.addf %435, %437 : vector<8x96xf32>
        %439 = arith.mulf %438, %438 : vector<8x96xf32>
        %440 = vector.broadcast %212 : vector<1x96xf32> to vector<8x96xf32>
        %441 = arith.mulf %439, %440 : vector<8x96xf32>
        %442 = vector.broadcast %213 : vector<1x96xf32> to vector<8x96xf32>
        %443 = arith.mulf %406, %442 : vector<8x96xf32>
        %444 = vector.broadcast %214 : vector<1x96xf32> to vector<8x96xf32>
        %445 = arith.mulf %409, %444 : vector<8x96xf32>
        %446 = arith.addf %443, %445 : vector<8x96xf32>
        %447 = vector.broadcast %215 : vector<1x96xf32> to vector<8x96xf32>
        %448 = arith.mulf %412, %447 : vector<8x96xf32>
        %449 = arith.addf %446, %448 : vector<8x96xf32>
        %450 = vector.broadcast %216 : vector<1x96xf32> to vector<8x96xf32>
        %451 = arith.mulf %415, %450 : vector<8x96xf32>
        %452 = vector.broadcast %217 : vector<1x96xf32> to vector<8x96xf32>
        %453 = arith.mulf %418, %452 : vector<8x96xf32>
        %454 = arith.addf %451, %453 : vector<8x96xf32>
        %455 = vector.broadcast %218 : vector<1x96xf32> to vector<8x96xf32>
        %456 = arith.mulf %421, %455 : vector<8x96xf32>
        %457 = arith.addf %454, %456 : vector<8x96xf32>
        %458 = vector.broadcast %219 : vector<1x96xf32> to vector<8x96xf32>
        %459 = arith.mulf %424, %458 : vector<8x96xf32>
        %460 = vector.broadcast %220 : vector<1x96xf32> to vector<8x96xf32>
        %461 = arith.mulf %427, %460 : vector<8x96xf32>
        %462 = arith.addf %459, %461 : vector<8x96xf32>
        %463 = vector.broadcast %221 : vector<1x96xf32> to vector<8x96xf32>
        %464 = arith.mulf %430, %463 : vector<8x96xf32>
        %465 = arith.addf %462, %464 : vector<8x96xf32>
        %cst_378 = arith.constant 0.000000e+00 : f32
        %466 = vector.broadcast %cst_378 : f32 to vector<8x96xf32>
        %467 = arith.cmpf oge, %449, %466 : vector<8x96xf32>
        %cst_379 = arith.constant 0.000000e+00 : f32
        %468 = vector.broadcast %cst_379 : f32 to vector<8x96xf32>
        %469 = arith.cmpf oge, %457, %468 : vector<8x96xf32>
        %470 = arith.andi %467, %469 : vector<8x96xi1>
        %cst_380 = arith.constant 0.000000e+00 : f32
        %471 = vector.broadcast %cst_380 : f32 to vector<8x96xf32>
        %472 = arith.cmpf oge, %465, %471 : vector<8x96xf32>
        %473 = arith.andi %470, %472 : vector<8x96xi1>
        %474 = vector.broadcast %236 : vector<1x96xi1> to vector<8x96xi1>
        %475 = arith.andi %473, %474 : vector<8x96xi1>
        %476 = vector.broadcast %222 : vector<1x96xf32> to vector<8x96xf32>
        %477 = arith.mulf %406, %476 : vector<8x96xf32>
        %478 = vector.broadcast %223 : vector<1x96xf32> to vector<8x96xf32>
        %479 = arith.mulf %409, %478 : vector<8x96xf32>
        %480 = arith.addf %477, %479 : vector<8x96xf32>
        %481 = vector.broadcast %224 : vector<1x96xf32> to vector<8x96xf32>
        %482 = arith.mulf %412, %481 : vector<8x96xf32>
        %483 = arith.addf %480, %482 : vector<8x96xf32>
        %484 = vector.broadcast %231 : vector<1x96xf32> to vector<8x96xf32>
        %485 = arith.mulf %483, %484 : vector<8x96xf32>
        %cst_381 = arith.constant 0.000000e+00 : f32
        %cst_382 = arith.constant 1.000000e+00 : f32
        %486 = vector.broadcast %cst_381 : f32 to vector<8x96xf32>
        %487 = arith.maximumf %486, %485 : vector<8x96xf32>
        %488 = vector.broadcast %cst_382 : f32 to vector<8x96xf32>
        %489 = arith.minimumf %488, %487 : vector<8x96xf32>
        %490 = vector.broadcast %222 : vector<1x96xf32> to vector<8x96xf32>
        %491 = arith.mulf %489, %490 : vector<8x96xf32>
        %492 = arith.subf %406, %491 : vector<8x96xf32>
        %493 = vector.broadcast %223 : vector<1x96xf32> to vector<8x96xf32>
        %494 = arith.mulf %489, %493 : vector<8x96xf32>
        %495 = arith.subf %409, %494 : vector<8x96xf32>
        %496 = vector.broadcast %224 : vector<1x96xf32> to vector<8x96xf32>
        %497 = arith.mulf %489, %496 : vector<8x96xf32>
        %498 = arith.subf %412, %497 : vector<8x96xf32>
        %499 = arith.mulf %492, %492 : vector<8x96xf32>
        %500 = arith.mulf %495, %495 : vector<8x96xf32>
        %501 = arith.addf %499, %500 : vector<8x96xf32>
        %502 = arith.mulf %498, %498 : vector<8x96xf32>
        %503 = arith.addf %501, %502 : vector<8x96xf32>
        %504 = vector.broadcast %225 : vector<1x96xf32> to vector<8x96xf32>
        %505 = arith.mulf %415, %504 : vector<8x96xf32>
        %506 = vector.broadcast %226 : vector<1x96xf32> to vector<8x96xf32>
        %507 = arith.mulf %418, %506 : vector<8x96xf32>
        %508 = arith.addf %505, %507 : vector<8x96xf32>
        %509 = vector.broadcast %227 : vector<1x96xf32> to vector<8x96xf32>
        %510 = arith.mulf %421, %509 : vector<8x96xf32>
        %511 = arith.addf %508, %510 : vector<8x96xf32>
        %512 = vector.broadcast %232 : vector<1x96xf32> to vector<8x96xf32>
        %513 = arith.mulf %511, %512 : vector<8x96xf32>
        %cst_383 = arith.constant 0.000000e+00 : f32
        %cst_384 = arith.constant 1.000000e+00 : f32
        %514 = vector.broadcast %cst_383 : f32 to vector<8x96xf32>
        %515 = arith.maximumf %514, %513 : vector<8x96xf32>
        %516 = vector.broadcast %cst_384 : f32 to vector<8x96xf32>
        %517 = arith.minimumf %516, %515 : vector<8x96xf32>
        %518 = vector.broadcast %225 : vector<1x96xf32> to vector<8x96xf32>
        %519 = arith.mulf %517, %518 : vector<8x96xf32>
        %520 = arith.subf %415, %519 : vector<8x96xf32>
        %521 = vector.broadcast %226 : vector<1x96xf32> to vector<8x96xf32>
        %522 = arith.mulf %517, %521 : vector<8x96xf32>
        %523 = arith.subf %418, %522 : vector<8x96xf32>
        %524 = vector.broadcast %227 : vector<1x96xf32> to vector<8x96xf32>
        %525 = arith.mulf %517, %524 : vector<8x96xf32>
        %526 = arith.subf %421, %525 : vector<8x96xf32>
        %527 = arith.mulf %520, %520 : vector<8x96xf32>
        %528 = arith.mulf %523, %523 : vector<8x96xf32>
        %529 = arith.addf %527, %528 : vector<8x96xf32>
        %530 = arith.mulf %526, %526 : vector<8x96xf32>
        %531 = arith.addf %529, %530 : vector<8x96xf32>
        %532 = vector.broadcast %228 : vector<1x96xf32> to vector<8x96xf32>
        %533 = arith.mulf %424, %532 : vector<8x96xf32>
        %534 = vector.broadcast %229 : vector<1x96xf32> to vector<8x96xf32>
        %535 = arith.mulf %427, %534 : vector<8x96xf32>
        %536 = arith.addf %533, %535 : vector<8x96xf32>
        %537 = vector.broadcast %230 : vector<1x96xf32> to vector<8x96xf32>
        %538 = arith.mulf %430, %537 : vector<8x96xf32>
        %539 = arith.addf %536, %538 : vector<8x96xf32>
        %540 = vector.broadcast %233 : vector<1x96xf32> to vector<8x96xf32>
        %541 = arith.mulf %539, %540 : vector<8x96xf32>
        %cst_385 = arith.constant 0.000000e+00 : f32
        %cst_386 = arith.constant 1.000000e+00 : f32
        %542 = vector.broadcast %cst_385 : f32 to vector<8x96xf32>
        %543 = arith.maximumf %542, %541 : vector<8x96xf32>
        %544 = vector.broadcast %cst_386 : f32 to vector<8x96xf32>
        %545 = arith.minimumf %544, %543 : vector<8x96xf32>
        %546 = vector.broadcast %228 : vector<1x96xf32> to vector<8x96xf32>
        %547 = arith.mulf %545, %546 : vector<8x96xf32>
        %548 = arith.subf %424, %547 : vector<8x96xf32>
        %549 = vector.broadcast %229 : vector<1x96xf32> to vector<8x96xf32>
        %550 = arith.mulf %545, %549 : vector<8x96xf32>
        %551 = arith.subf %427, %550 : vector<8x96xf32>
        %552 = vector.broadcast %230 : vector<1x96xf32> to vector<8x96xf32>
        %553 = arith.mulf %545, %552 : vector<8x96xf32>
        %554 = arith.subf %430, %553 : vector<8x96xf32>
        %555 = arith.mulf %548, %548 : vector<8x96xf32>
        %556 = arith.mulf %551, %551 : vector<8x96xf32>
        %557 = arith.addf %555, %556 : vector<8x96xf32>
        %558 = arith.mulf %554, %554 : vector<8x96xf32>
        %559 = arith.addf %557, %558 : vector<8x96xf32>
        %560 = arith.minimumf %531, %559 : vector<8x96xf32>
        %561 = arith.minimumf %503, %560 : vector<8x96xf32>
        %562 = arith.select %475, %441, %561 : vector<8x96xi1>, vector<8x96xf32>
        %563 = vector.extract_strided_slice %562 {offsets = [0, 0], sizes = [8, 48], strides = [1, 1]} : vector<8x96xf32> to vector<8x48xf32>
        %564 = vector.extract_strided_slice %562 {offsets = [0, 48], sizes = [8, 48], strides = [1, 1]} : vector<8x96xf32> to vector<8x48xf32>
        %565 = arith.minimumf %563, %564 : vector<8x48xf32>
        %566 = math.sqrt %565 : vector<8x48xf32>
        %567 = vector.broadcast %403 : vector<8x1xf32> to vector<8x48xf32>
        %568 = arith.mulf %566, %567 : vector<8x48xf32>
        %569 = arith.addf %arg8, %568 : vector<8x48xf32>
        scf.yield %569 : vector<8x48xf32>
      }
      %c16_i32_229 = arith.constant 16 : i32
      %c4_230 = arith.constant 4 : index
      %c0_231 = arith.constant 0 : index
      %243 = vector.load %arg6[%c4_230, %c0_231] : memref<8x48xf32, #tpu.memory_space<vmem>>, vector<1x48xf32>
      %cst_232 = arith.constant dense<0.000000e+00> : vector<48xf32>
      %244 = vector.multi_reduction <add>, %242, %cst_232 [0] : vector<8x48xf32> to vector<48xf32>
      %245 = vector.shape_cast %244 : vector<48xf32> to vector<1x48xf32>
      %246 = arith.addf %243, %245 : vector<1x48xf32>
      %c4_233 = arith.constant 4 : index
      %c0_234 = arith.constant 0 : index
      %247 = vector.load %arg6[%c4_233, %c0_234] : memref<8x48xf32, #tpu.memory_space<vmem>>, vector<1x48xf32>
      tpu.vector_store %arg6[%c4_233, %c0_234], %246 {strides = array<i32>} : memref<8x48xf32, #tpu.memory_space<vmem>>, vector<1x48xf32>,
      %c175 = arith.constant 175 : index
      %c0_235 = arith.constant 0 : index
      %248 = vector.load %arg4[%c175, %c0_235] : memref<280x96xf32, #tpu.memory_space<vmem>>, vector<1x96xf32>
      %c176 = arith.constant 176 : index
      %c0_236 = arith.constant 0 : index
      %249 = vector.load %arg4[%c176, %c0_236] : memref<280x96xf32, #tpu.memory_space<vmem>>, vector<1x96xf32>
      %c177 = arith.constant 177 : index
      %c0_237 = arith.constant 0 : index
      %250 = vector.load %arg4[%c177, %c0_237] : memref<280x96xf32, #tpu.memory_space<vmem>>, vector<1x96xf32>
      %c178 = arith.constant 178 : index
      %c0_238 = arith.constant 0 : index
      %251 = vector.load %arg4[%c178, %c0_238] : memref<280x96xf32, #tpu.memory_space<vmem>>, vector<1x96xf32>
      %c179 = arith.constant 179 : index
      %c0_239 = arith.constant 0 : index
      %252 = vector.load %arg4[%c179, %c0_239] : memref<280x96xf32, #tpu.memory_space<vmem>>, vector<1x96xf32>
      %c180 = arith.constant 180 : index
      %c0_240 = arith.constant 0 : index
      %253 = vector.load %arg4[%c180, %c0_240] : memref<280x96xf32, #tpu.memory_space<vmem>>, vector<1x96xf32>
      %c181 = arith.constant 181 : index
      %c0_241 = arith.constant 0 : index
      %254 = vector.load %arg4[%c181, %c0_241] : memref<280x96xf32, #tpu.memory_space<vmem>>, vector<1x96xf32>
      %c182 = arith.constant 182 : index
      %c0_242 = arith.constant 0 : index
      %255 = vector.load %arg4[%c182, %c0_242] : memref<280x96xf32, #tpu.memory_space<vmem>>, vector<1x96xf32>
      %c183 = arith.constant 183 : index
      %c0_243 = arith.constant 0 : index
      %256 = vector.load %arg4[%c183, %c0_243] : memref<280x96xf32, #tpu.memory_space<vmem>>, vector<1x96xf32>
      %c184 = arith.constant 184 : index
      %c0_244 = arith.constant 0 : index
      %257 = vector.load %arg4[%c184, %c0_244] : memref<280x96xf32, #tpu.memory_space<vmem>>, vector<1x96xf32>
      %c185 = arith.constant 185 : index
      %c0_245 = arith.constant 0 : index
      %258 = vector.load %arg4[%c185, %c0_245] : memref<280x96xf32, #tpu.memory_space<vmem>>, vector<1x96xf32>
      %c186 = arith.constant 186 : index
      %c0_246 = arith.constant 0 : index
      %259 = vector.load %arg4[%c186, %c0_246] : memref<280x96xf32, #tpu.memory_space<vmem>>, vector<1x96xf32>
      %c187 = arith.constant 187 : index
      %c0_247 = arith.constant 0 : index
      %260 = vector.load %arg4[%c187, %c0_247] : memref<280x96xf32, #tpu.memory_space<vmem>>, vector<1x96xf32>
      %c188 = arith.constant 188 : index
      %c0_248 = arith.constant 0 : index
      %261 = vector.load %arg4[%c188, %c0_248] : memref<280x96xf32, #tpu.memory_space<vmem>>, vector<1x96xf32>
      %c189 = arith.constant 189 : index
      %c0_249 = arith.constant 0 : index
      %262 = vector.load %arg4[%c189, %c0_249] : memref<280x96xf32, #tpu.memory_space<vmem>>, vector<1x96xf32>
      %c190 = arith.constant 190 : index
      %c0_250 = arith.constant 0 : index
      %263 = vector.load %arg4[%c190, %c0_250] : memref<280x96xf32, #tpu.memory_space<vmem>>, vector<1x96xf32>
      %c191 = arith.constant 191 : index
      %c0_251 = arith.constant 0 : index
      %264 = vector.load %arg4[%c191, %c0_251] : memref<280x96xf32, #tpu.memory_space<vmem>>, vector<1x96xf32>
      %c192 = arith.constant 192 : index
      %c0_252 = arith.constant 0 : index
      %265 = vector.load %arg4[%c192, %c0_252] : memref<280x96xf32, #tpu.memory_space<vmem>>, vector<1x96xf32>
      %c193 = arith.constant 193 : index
      %c0_253 = arith.constant 0 : index
      %266 = vector.load %arg4[%c193, %c0_253] : memref<280x96xf32, #tpu.memory_space<vmem>>, vector<1x96xf32>
      %c194 = arith.constant 194 : index
      %c0_254 = arith.constant 0 : index
      %267 = vector.load %arg4[%c194, %c0_254] : memref<280x96xf32, #tpu.memory_space<vmem>>, vector<1x96xf32>
      %c195 = arith.constant 195 : index
      %c0_255 = arith.constant 0 : index
      %268 = vector.load %arg4[%c195, %c0_255] : memref<280x96xf32, #tpu.memory_space<vmem>>, vector<1x96xf32>
      %c196 = arith.constant 196 : index
      %c0_256 = arith.constant 0 : index
      %269 = vector.load %arg4[%c196, %c0_256] : memref<280x96xf32, #tpu.memory_space<vmem>>, vector<1x96xf32>
      %c197 = arith.constant 197 : index
      %c0_257 = arith.constant 0 : index
      %270 = vector.load %arg4[%c197, %c0_257] : memref<280x96xf32, #tpu.memory_space<vmem>>, vector<1x96xf32>
      %c198 = arith.constant 198 : index
      %c0_258 = arith.constant 0 : index
      %271 = vector.load %arg4[%c198, %c0_258] : memref<280x96xf32, #tpu.memory_space<vmem>>, vector<1x96xf32>
      %c199 = arith.constant 199 : index
      %c0_259 = arith.constant 0 : index
      %272 = vector.load %arg4[%c199, %c0_259] : memref<280x96xf32, #tpu.memory_space<vmem>>, vector<1x96xf32>
      %c200 = arith.constant 200 : index
      %c0_260 = arith.constant 0 : index
      %273 = vector.load %arg4[%c200, %c0_260] : memref<280x96xf32, #tpu.memory_space<vmem>>, vector<1x96xf32>
      %c201 = arith.constant 201 : index
      %c0_261 = arith.constant 0 : index
      %274 = vector.load %arg4[%c201, %c0_261] : memref<280x96xf32, #tpu.memory_space<vmem>>, vector<1x96xf32>
      %c202 = arith.constant 202 : index
      %c0_262 = arith.constant 0 : index
      %275 = vector.load %arg4[%c202, %c0_262] : memref<280x96xf32, #tpu.memory_space<vmem>>, vector<1x96xf32>
      %c203 = arith.constant 203 : index
      %c0_263 = arith.constant 0 : index
      %276 = vector.load %arg4[%c203, %c0_263] : memref<280x96xf32, #tpu.memory_space<vmem>>, vector<1x96xf32>
      %c204 = arith.constant 204 : index
      %c0_264 = arith.constant 0 : index
      %277 = vector.load %arg4[%c204, %c0_264] : memref<280x96xf32, #tpu.memory_space<vmem>>, vector<1x96xf32>
      %c205 = arith.constant 205 : index
      %c0_265 = arith.constant 0 : index
      %278 = vector.load %arg4[%c205, %c0_265] : memref<280x96xf32, #tpu.memory_space<vmem>>, vector<1x96xf32>
      %c206 = arith.constant 206 : index
      %c0_266 = arith.constant 0 : index
      %279 = vector.load %arg4[%c206, %c0_266] : memref<280x96xf32, #tpu.memory_space<vmem>>, vector<1x96xf32>
      %c207 = arith.constant 207 : index
      %c0_267 = arith.constant 0 : index
      %280 = vector.load %arg4[%c207, %c0_267] : memref<280x96xf32, #tpu.memory_space<vmem>>, vector<1x96xf32>
      %c208 = arith.constant 208 : index
      %c0_268 = arith.constant 0 : index
      %281 = vector.load %arg4[%c208, %c0_268] : memref<280x96xf32, #tpu.memory_space<vmem>>, vector<1x96xf32>
      %c209 = arith.constant 209 : index
      %c0_269 = arith.constant 0 : index
      %282 = vector.load %arg4[%c209, %c0_269] : memref<280x96xf32, #tpu.memory_space<vmem>>, vector<1x96xf32>
      %cst_270 = arith.constant 5.000000e-01 : f32
      %283 = vector.broadcast %cst_270 : f32 to vector<1x96xf32>
      %284 = arith.cmpf ogt, %282, %283 : vector<1x96xf32>
      %c8_i32_271 = arith.constant 8 : i32
      %285 = arith.muli %arg0, %c8_i32_271 : i32
      %c5_i32 = arith.constant 5 : i32
      %286 = arith.addi %285, %c5_i32 : i32
      %287 = arith.sitofp %286 : i32 to f32
      %cst_272 = arith.constant 0.000000e+00 : f32
      %288 = vector.broadcast %cst_272 : f32 to vector<8x48xf32>
      %c0_i32_273 = arith.constant 0 : i32
      %c16_i32_274 = arith.constant 16 : i32
      %289 = arith.addi %c0_i32_273, %c16_i32_274 : i32
      %c1_i32_275 = arith.constant 1 : i32
      %290 = scf.for %arg7 = %c0_i32_273 to %289 step %c1_i32_275 iter_args(%arg8 = %288) -> (vector<8x48xf32>)  : i32 {
        %c8_i32_376 = arith.constant 8 : i32
        %392 = arith.muli %arg7, %c8_i32_376 : i32
        %393 = tpu.assume_multiple %392, 8 : i32
        %394 = arith.index_cast %393 : i32 to index
        %c0_377 = arith.constant 0 : index
        %395 = vector.load %arg5[%394, %c0_377] : memref<128x4xf32, #tpu.memory_space<vmem>>, vector<8x4xf32>
        %396 = vector.extract_strided_slice %395 {offsets = [0, 0], sizes = [8, 1], strides = [1, 1]} : vector<8x4xf32> to vector<8x1xf32>
        %397 = vector.extract_strided_slice %395 {offsets = [0, 1], sizes = [8, 1], strides = [1, 1]} : vector<8x4xf32> to vector<8x1xf32>
        %398 = vector.extract_strided_slice %395 {offsets = [0, 2], sizes = [8, 1], strides = [1, 1]} : vector<8x4xf32> to vector<8x1xf32>
        %399 = vector.extract_strided_slice %395 {offsets = [0, 3], sizes = [8, 1], strides = [1, 1]} : vector<8x4xf32> to vector<8x1xf32>
        %400 = vector.broadcast %287 : f32 to vector<8x1xf32>
        %401 = arith.cmpf oeq, %399, %400 : vector<8x1xf32>
        %402 = arith.extui %401 : vector<8x1xi1> to vector<8x1xi32>
        %403 = arith.sitofp %402 : vector<8x1xi32> to vector<8x1xf32>
        %404 = vector.broadcast %396 : vector<8x1xf32> to vector<8x96xf32>
        %405 = vector.broadcast %248 : vector<1x96xf32> to vector<8x96xf32>
        %406 = arith.subf %404, %405 : vector<8x96xf32>
        %407 = vector.broadcast %397 : vector<8x1xf32> to vector<8x96xf32>
        %408 = vector.broadcast %249 : vector<1x96xf32> to vector<8x96xf32>
        %409 = arith.subf %407, %408 : vector<8x96xf32>
        %410 = vector.broadcast %398 : vector<8x1xf32> to vector<8x96xf32>
        %411 = vector.broadcast %250 : vector<1x96xf32> to vector<8x96xf32>
        %412 = arith.subf %410, %411 : vector<8x96xf32>
        %413 = vector.broadcast %396 : vector<8x1xf32> to vector<8x96xf32>
        %414 = vector.broadcast %251 : vector<1x96xf32> to vector<8x96xf32>
        %415 = arith.subf %413, %414 : vector<8x96xf32>
        %416 = vector.broadcast %397 : vector<8x1xf32> to vector<8x96xf32>
        %417 = vector.broadcast %252 : vector<1x96xf32> to vector<8x96xf32>
        %418 = arith.subf %416, %417 : vector<8x96xf32>
        %419 = vector.broadcast %398 : vector<8x1xf32> to vector<8x96xf32>
        %420 = vector.broadcast %253 : vector<1x96xf32> to vector<8x96xf32>
        %421 = arith.subf %419, %420 : vector<8x96xf32>
        %422 = vector.broadcast %396 : vector<8x1xf32> to vector<8x96xf32>
        %423 = vector.broadcast %254 : vector<1x96xf32> to vector<8x96xf32>
        %424 = arith.subf %422, %423 : vector<8x96xf32>
        %425 = vector.broadcast %397 : vector<8x1xf32> to vector<8x96xf32>
        %426 = vector.broadcast %255 : vector<1x96xf32> to vector<8x96xf32>
        %427 = arith.subf %425, %426 : vector<8x96xf32>
        %428 = vector.broadcast %398 : vector<8x1xf32> to vector<8x96xf32>
        %429 = vector.broadcast %256 : vector<1x96xf32> to vector<8x96xf32>
        %430 = arith.subf %428, %429 : vector<8x96xf32>
        %431 = vector.broadcast %257 : vector<1x96xf32> to vector<8x96xf32>
        %432 = arith.mulf %406, %431 : vector<8x96xf32>
        %433 = vector.broadcast %258 : vector<1x96xf32> to vector<8x96xf32>
        %434 = arith.mulf %409, %433 : vector<8x96xf32>
        %435 = arith.addf %432, %434 : vector<8x96xf32>
        %436 = vector.broadcast %259 : vector<1x96xf32> to vector<8x96xf32>
        %437 = arith.mulf %412, %436 : vector<8x96xf32>
        %438 = arith.addf %435, %437 : vector<8x96xf32>
        %439 = arith.mulf %438, %438 : vector<8x96xf32>
        %440 = vector.broadcast %260 : vector<1x96xf32> to vector<8x96xf32>
        %441 = arith.mulf %439, %440 : vector<8x96xf32>
        %442 = vector.broadcast %261 : vector<1x96xf32> to vector<8x96xf32>
        %443 = arith.mulf %406, %442 : vector<8x96xf32>
        %444 = vector.broadcast %262 : vector<1x96xf32> to vector<8x96xf32>
        %445 = arith.mulf %409, %444 : vector<8x96xf32>
        %446 = arith.addf %443, %445 : vector<8x96xf32>
        %447 = vector.broadcast %263 : vector<1x96xf32> to vector<8x96xf32>
        %448 = arith.mulf %412, %447 : vector<8x96xf32>
        %449 = arith.addf %446, %448 : vector<8x96xf32>
        %450 = vector.broadcast %264 : vector<1x96xf32> to vector<8x96xf32>
        %451 = arith.mulf %415, %450 : vector<8x96xf32>
        %452 = vector.broadcast %265 : vector<1x96xf32> to vector<8x96xf32>
        %453 = arith.mulf %418, %452 : vector<8x96xf32>
        %454 = arith.addf %451, %453 : vector<8x96xf32>
        %455 = vector.broadcast %266 : vector<1x96xf32> to vector<8x96xf32>
        %456 = arith.mulf %421, %455 : vector<8x96xf32>
        %457 = arith.addf %454, %456 : vector<8x96xf32>
        %458 = vector.broadcast %267 : vector<1x96xf32> to vector<8x96xf32>
        %459 = arith.mulf %424, %458 : vector<8x96xf32>
        %460 = vector.broadcast %268 : vector<1x96xf32> to vector<8x96xf32>
        %461 = arith.mulf %427, %460 : vector<8x96xf32>
        %462 = arith.addf %459, %461 : vector<8x96xf32>
        %463 = vector.broadcast %269 : vector<1x96xf32> to vector<8x96xf32>
        %464 = arith.mulf %430, %463 : vector<8x96xf32>
        %465 = arith.addf %462, %464 : vector<8x96xf32>
        %cst_378 = arith.constant 0.000000e+00 : f32
        %466 = vector.broadcast %cst_378 : f32 to vector<8x96xf32>
        %467 = arith.cmpf oge, %449, %466 : vector<8x96xf32>
        %cst_379 = arith.constant 0.000000e+00 : f32
        %468 = vector.broadcast %cst_379 : f32 to vector<8x96xf32>
        %469 = arith.cmpf oge, %457, %468 : vector<8x96xf32>
        %470 = arith.andi %467, %469 : vector<8x96xi1>
        %cst_380 = arith.constant 0.000000e+00 : f32
        %471 = vector.broadcast %cst_380 : f32 to vector<8x96xf32>
        %472 = arith.cmpf oge, %465, %471 : vector<8x96xf32>
        %473 = arith.andi %470, %472 : vector<8x96xi1>
        %474 = vector.broadcast %284 : vector<1x96xi1> to vector<8x96xi1>
        %475 = arith.andi %473, %474 : vector<8x96xi1>
        %476 = vector.broadcast %270 : vector<1x96xf32> to vector<8x96xf32>
        %477 = arith.mulf %406, %476 : vector<8x96xf32>
        %478 = vector.broadcast %271 : vector<1x96xf32> to vector<8x96xf32>
        %479 = arith.mulf %409, %478 : vector<8x96xf32>
        %480 = arith.addf %477, %479 : vector<8x96xf32>
        %481 = vector.broadcast %272 : vector<1x96xf32> to vector<8x96xf32>
        %482 = arith.mulf %412, %481 : vector<8x96xf32>
        %483 = arith.addf %480, %482 : vector<8x96xf32>
        %484 = vector.broadcast %279 : vector<1x96xf32> to vector<8x96xf32>
        %485 = arith.mulf %483, %484 : vector<8x96xf32>
        %cst_381 = arith.constant 0.000000e+00 : f32
        %cst_382 = arith.constant 1.000000e+00 : f32
        %486 = vector.broadcast %cst_381 : f32 to vector<8x96xf32>
        %487 = arith.maximumf %486, %485 : vector<8x96xf32>
        %488 = vector.broadcast %cst_382 : f32 to vector<8x96xf32>
        %489 = arith.minimumf %488, %487 : vector<8x96xf32>
        %490 = vector.broadcast %270 : vector<1x96xf32> to vector<8x96xf32>
        %491 = arith.mulf %489, %490 : vector<8x96xf32>
        %492 = arith.subf %406, %491 : vector<8x96xf32>
        %493 = vector.broadcast %271 : vector<1x96xf32> to vector<8x96xf32>
        %494 = arith.mulf %489, %493 : vector<8x96xf32>
        %495 = arith.subf %409, %494 : vector<8x96xf32>
        %496 = vector.broadcast %272 : vector<1x96xf32> to vector<8x96xf32>
        %497 = arith.mulf %489, %496 : vector<8x96xf32>
        %498 = arith.subf %412, %497 : vector<8x96xf32>
        %499 = arith.mulf %492, %492 : vector<8x96xf32>
        %500 = arith.mulf %495, %495 : vector<8x96xf32>
        %501 = arith.addf %499, %500 : vector<8x96xf32>
        %502 = arith.mulf %498, %498 : vector<8x96xf32>
        %503 = arith.addf %501, %502 : vector<8x96xf32>
        %504 = vector.broadcast %273 : vector<1x96xf32> to vector<8x96xf32>
        %505 = arith.mulf %415, %504 : vector<8x96xf32>
        %506 = vector.broadcast %274 : vector<1x96xf32> to vector<8x96xf32>
        %507 = arith.mulf %418, %506 : vector<8x96xf32>
        %508 = arith.addf %505, %507 : vector<8x96xf32>
        %509 = vector.broadcast %275 : vector<1x96xf32> to vector<8x96xf32>
        %510 = arith.mulf %421, %509 : vector<8x96xf32>
        %511 = arith.addf %508, %510 : vector<8x96xf32>
        %512 = vector.broadcast %280 : vector<1x96xf32> to vector<8x96xf32>
        %513 = arith.mulf %511, %512 : vector<8x96xf32>
        %cst_383 = arith.constant 0.000000e+00 : f32
        %cst_384 = arith.constant 1.000000e+00 : f32
        %514 = vector.broadcast %cst_383 : f32 to vector<8x96xf32>
        %515 = arith.maximumf %514, %513 : vector<8x96xf32>
        %516 = vector.broadcast %cst_384 : f32 to vector<8x96xf32>
        %517 = arith.minimumf %516, %515 : vector<8x96xf32>
        %518 = vector.broadcast %273 : vector<1x96xf32> to vector<8x96xf32>
        %519 = arith.mulf %517, %518 : vector<8x96xf32>
        %520 = arith.subf %415, %519 : vector<8x96xf32>
        %521 = vector.broadcast %274 : vector<1x96xf32> to vector<8x96xf32>
        %522 = arith.mulf %517, %521 : vector<8x96xf32>
        %523 = arith.subf %418, %522 : vector<8x96xf32>
        %524 = vector.broadcast %275 : vector<1x96xf32> to vector<8x96xf32>
        %525 = arith.mulf %517, %524 : vector<8x96xf32>
        %526 = arith.subf %421, %525 : vector<8x96xf32>
        %527 = arith.mulf %520, %520 : vector<8x96xf32>
        %528 = arith.mulf %523, %523 : vector<8x96xf32>
        %529 = arith.addf %527, %528 : vector<8x96xf32>
        %530 = arith.mulf %526, %526 : vector<8x96xf32>
        %531 = arith.addf %529, %530 : vector<8x96xf32>
        %532 = vector.broadcast %276 : vector<1x96xf32> to vector<8x96xf32>
        %533 = arith.mulf %424, %532 : vector<8x96xf32>
        %534 = vector.broadcast %277 : vector<1x96xf32> to vector<8x96xf32>
        %535 = arith.mulf %427, %534 : vector<8x96xf32>
        %536 = arith.addf %533, %535 : vector<8x96xf32>
        %537 = vector.broadcast %278 : vector<1x96xf32> to vector<8x96xf32>
        %538 = arith.mulf %430, %537 : vector<8x96xf32>
        %539 = arith.addf %536, %538 : vector<8x96xf32>
        %540 = vector.broadcast %281 : vector<1x96xf32> to vector<8x96xf32>
        %541 = arith.mulf %539, %540 : vector<8x96xf32>
        %cst_385 = arith.constant 0.000000e+00 : f32
        %cst_386 = arith.constant 1.000000e+00 : f32
        %542 = vector.broadcast %cst_385 : f32 to vector<8x96xf32>
        %543 = arith.maximumf %542, %541 : vector<8x96xf32>
        %544 = vector.broadcast %cst_386 : f32 to vector<8x96xf32>
        %545 = arith.minimumf %544, %543 : vector<8x96xf32>
        %546 = vector.broadcast %276 : vector<1x96xf32> to vector<8x96xf32>
        %547 = arith.mulf %545, %546 : vector<8x96xf32>
        %548 = arith.subf %424, %547 : vector<8x96xf32>
        %549 = vector.broadcast %277 : vector<1x96xf32> to vector<8x96xf32>
        %550 = arith.mulf %545, %549 : vector<8x96xf32>
        %551 = arith.subf %427, %550 : vector<8x96xf32>
        %552 = vector.broadcast %278 : vector<1x96xf32> to vector<8x96xf32>
        %553 = arith.mulf %545, %552 : vector<8x96xf32>
        %554 = arith.subf %430, %553 : vector<8x96xf32>
        %555 = arith.mulf %548, %548 : vector<8x96xf32>
        %556 = arith.mulf %551, %551 : vector<8x96xf32>
        %557 = arith.addf %555, %556 : vector<8x96xf32>
        %558 = arith.mulf %554, %554 : vector<8x96xf32>
        %559 = arith.addf %557, %558 : vector<8x96xf32>
        %560 = arith.minimumf %531, %559 : vector<8x96xf32>
        %561 = arith.minimumf %503, %560 : vector<8x96xf32>
        %562 = arith.select %475, %441, %561 : vector<8x96xi1>, vector<8x96xf32>
        %563 = vector.extract_strided_slice %562 {offsets = [0, 0], sizes = [8, 48], strides = [1, 1]} : vector<8x96xf32> to vector<8x48xf32>
        %564 = vector.extract_strided_slice %562 {offsets = [0, 48], sizes = [8, 48], strides = [1, 1]} : vector<8x96xf32> to vector<8x48xf32>
        %565 = arith.minimumf %563, %564 : vector<8x48xf32>
        %566 = math.sqrt %565 : vector<8x48xf32>
        %567 = vector.broadcast %403 : vector<8x1xf32> to vector<8x48xf32>
        %568 = arith.mulf %566, %567 : vector<8x48xf32>
        %569 = arith.addf %arg8, %568 : vector<8x48xf32>
        scf.yield %569 : vector<8x48xf32>
      }
      %c16_i32_276 = arith.constant 16 : i32
      %c5_277 = arith.constant 5 : index
      %c0_278 = arith.constant 0 : index
      %291 = vector.load %arg6[%c5_277, %c0_278] : memref<8x48xf32, #tpu.memory_space<vmem>>, vector<1x48xf32>
      %cst_279 = arith.constant dense<0.000000e+00> : vector<48xf32>
      %292 = vector.multi_reduction <add>, %290, %cst_279 [0] : vector<8x48xf32> to vector<48xf32>
      %293 = vector.shape_cast %292 : vector<48xf32> to vector<1x48xf32>
      %294 = arith.addf %291, %293 : vector<1x48xf32>
      %c5_280 = arith.constant 5 : index
      %c0_281 = arith.constant 0 : index
      %295 = vector.load %arg6[%c5_280, %c0_281] : memref<8x48xf32, #tpu.memory_space<vmem>>, vector<1x48xf32>
      tpu.vector_store %arg6[%c5_280, %c0_281], %294 {strides = array<i32>} : memref<8x48xf32, #tpu.memory_space<vmem>>, vector<1x48xf32>,
      %c210 = arith.constant 210 : index
      %c0_282 = arith.constant 0 : index
      %296 = vector.load %arg4[%c210, %c0_282] : memref<280x96xf32, #tpu.memory_space<vmem>>, vector<1x96xf32>
      %c211 = arith.constant 211 : index
      %c0_283 = arith.constant 0 : index
      %297 = vector.load %arg4[%c211, %c0_283] : memref<280x96xf32, #tpu.memory_space<vmem>>, vector<1x96xf32>
      %c212 = arith.constant 212 : index
      %c0_284 = arith.constant 0 : index
      %298 = vector.load %arg4[%c212, %c0_284] : memref<280x96xf32, #tpu.memory_space<vmem>>, vector<1x96xf32>
      %c213 = arith.constant 213 : index
      %c0_285 = arith.constant 0 : index
      %299 = vector.load %arg4[%c213, %c0_285] : memref<280x96xf32, #tpu.memory_space<vmem>>, vector<1x96xf32>
      %c214 = arith.constant 214 : index
      %c0_286 = arith.constant 0 : index
      %300 = vector.load %arg4[%c214, %c0_286] : memref<280x96xf32, #tpu.memory_space<vmem>>, vector<1x96xf32>
      %c215 = arith.constant 215 : index
      %c0_287 = arith.constant 0 : index
      %301 = vector.load %arg4[%c215, %c0_287] : memref<280x96xf32, #tpu.memory_space<vmem>>, vector<1x96xf32>
      %c216 = arith.constant 216 : index
      %c0_288 = arith.constant 0 : index
      %302 = vector.load %arg4[%c216, %c0_288] : memref<280x96xf32, #tpu.memory_space<vmem>>, vector<1x96xf32>
      %c217 = arith.constant 217 : index
      %c0_289 = arith.constant 0 : index
      %303 = vector.load %arg4[%c217, %c0_289] : memref<280x96xf32, #tpu.memory_space<vmem>>, vector<1x96xf32>
      %c218 = arith.constant 218 : index
      %c0_290 = arith.constant 0 : index
      %304 = vector.load %arg4[%c218, %c0_290] : memref<280x96xf32, #tpu.memory_space<vmem>>, vector<1x96xf32>
      %c219 = arith.constant 219 : index
      %c0_291 = arith.constant 0 : index
      %305 = vector.load %arg4[%c219, %c0_291] : memref<280x96xf32, #tpu.memory_space<vmem>>, vector<1x96xf32>
      %c220 = arith.constant 220 : index
      %c0_292 = arith.constant 0 : index
      %306 = vector.load %arg4[%c220, %c0_292] : memref<280x96xf32, #tpu.memory_space<vmem>>, vector<1x96xf32>
      %c221 = arith.constant 221 : index
      %c0_293 = arith.constant 0 : index
      %307 = vector.load %arg4[%c221, %c0_293] : memref<280x96xf32, #tpu.memory_space<vmem>>, vector<1x96xf32>
      %c222 = arith.constant 222 : index
      %c0_294 = arith.constant 0 : index
      %308 = vector.load %arg4[%c222, %c0_294] : memref<280x96xf32, #tpu.memory_space<vmem>>, vector<1x96xf32>
      %c223 = arith.constant 223 : index
      %c0_295 = arith.constant 0 : index
      %309 = vector.load %arg4[%c223, %c0_295] : memref<280x96xf32, #tpu.memory_space<vmem>>, vector<1x96xf32>
      %c224 = arith.constant 224 : index
      %c0_296 = arith.constant 0 : index
      %310 = vector.load %arg4[%c224, %c0_296] : memref<280x96xf32, #tpu.memory_space<vmem>>, vector<1x96xf32>
      %c225 = arith.constant 225 : index
      %c0_297 = arith.constant 0 : index
      %311 = vector.load %arg4[%c225, %c0_297] : memref<280x96xf32, #tpu.memory_space<vmem>>, vector<1x96xf32>
      %c226 = arith.constant 226 : index
      %c0_298 = arith.constant 0 : index
      %312 = vector.load %arg4[%c226, %c0_298] : memref<280x96xf32, #tpu.memory_space<vmem>>, vector<1x96xf32>
      %c227 = arith.constant 227 : index
      %c0_299 = arith.constant 0 : index
      %313 = vector.load %arg4[%c227, %c0_299] : memref<280x96xf32, #tpu.memory_space<vmem>>, vector<1x96xf32>
      %c228 = arith.constant 228 : index
      %c0_300 = arith.constant 0 : index
      %314 = vector.load %arg4[%c228, %c0_300] : memref<280x96xf32, #tpu.memory_space<vmem>>, vector<1x96xf32>
      %c229 = arith.constant 229 : index
      %c0_301 = arith.constant 0 : index
      %315 = vector.load %arg4[%c229, %c0_301] : memref<280x96xf32, #tpu.memory_space<vmem>>, vector<1x96xf32>
      %c230 = arith.constant 230 : index
      %c0_302 = arith.constant 0 : index
      %316 = vector.load %arg4[%c230, %c0_302] : memref<280x96xf32, #tpu.memory_space<vmem>>, vector<1x96xf32>
      %c231 = arith.constant 231 : index
      %c0_303 = arith.constant 0 : index
      %317 = vector.load %arg4[%c231, %c0_303] : memref<280x96xf32, #tpu.memory_space<vmem>>, vector<1x96xf32>
      %c232 = arith.constant 232 : index
      %c0_304 = arith.constant 0 : index
      %318 = vector.load %arg4[%c232, %c0_304] : memref<280x96xf32, #tpu.memory_space<vmem>>, vector<1x96xf32>
      %c233 = arith.constant 233 : index
      %c0_305 = arith.constant 0 : index
      %319 = vector.load %arg4[%c233, %c0_305] : memref<280x96xf32, #tpu.memory_space<vmem>>, vector<1x96xf32>
      %c234 = arith.constant 234 : index
      %c0_306 = arith.constant 0 : index
      %320 = vector.load %arg4[%c234, %c0_306] : memref<280x96xf32, #tpu.memory_space<vmem>>, vector<1x96xf32>
      %c235 = arith.constant 235 : index
      %c0_307 = arith.constant 0 : index
      %321 = vector.load %arg4[%c235, %c0_307] : memref<280x96xf32, #tpu.memory_space<vmem>>, vector<1x96xf32>
      %c236 = arith.constant 236 : index
      %c0_308 = arith.constant 0 : index
      %322 = vector.load %arg4[%c236, %c0_308] : memref<280x96xf32, #tpu.memory_space<vmem>>, vector<1x96xf32>
      %c237 = arith.constant 237 : index
      %c0_309 = arith.constant 0 : index
      %323 = vector.load %arg4[%c237, %c0_309] : memref<280x96xf32, #tpu.memory_space<vmem>>, vector<1x96xf32>
      %c238 = arith.constant 238 : index
      %c0_310 = arith.constant 0 : index
      %324 = vector.load %arg4[%c238, %c0_310] : memref<280x96xf32, #tpu.memory_space<vmem>>, vector<1x96xf32>
      %c239 = arith.constant 239 : index
      %c0_311 = arith.constant 0 : index
      %325 = vector.load %arg4[%c239, %c0_311] : memref<280x96xf32, #tpu.memory_space<vmem>>, vector<1x96xf32>
      %c240 = arith.constant 240 : index
      %c0_312 = arith.constant 0 : index
      %326 = vector.load %arg4[%c240, %c0_312] : memref<280x96xf32, #tpu.memory_space<vmem>>, vector<1x96xf32>
      %c241 = arith.constant 241 : index
      %c0_313 = arith.constant 0 : index
      %327 = vector.load %arg4[%c241, %c0_313] : memref<280x96xf32, #tpu.memory_space<vmem>>, vector<1x96xf32>
      %c242 = arith.constant 242 : index
      %c0_314 = arith.constant 0 : index
      %328 = vector.load %arg4[%c242, %c0_314] : memref<280x96xf32, #tpu.memory_space<vmem>>, vector<1x96xf32>
      %c243 = arith.constant 243 : index
      %c0_315 = arith.constant 0 : index
      %329 = vector.load %arg4[%c243, %c0_315] : memref<280x96xf32, #tpu.memory_space<vmem>>, vector<1x96xf32>
      %c244 = arith.constant 244 : index
      %c0_316 = arith.constant 0 : index
      %330 = vector.load %arg4[%c244, %c0_316] : memref<280x96xf32, #tpu.memory_space<vmem>>, vector<1x96xf32>
      %cst_317 = arith.constant 5.000000e-01 : f32
      %331 = vector.broadcast %cst_317 : f32 to vector<1x96xf32>
      %332 = arith.cmpf ogt, %330, %331 : vector<1x96xf32>
      %c8_i32_318 = arith.constant 8 : i32
      %333 = arith.muli %arg0, %c8_i32_318 : i32
      %c6_i32 = arith.constant 6 : i32
      %334 = arith.addi %333, %c6_i32 : i32
      %335 = arith.sitofp %334 : i32 to f32
      %cst_319 = arith.constant 0.000000e+00 : f32
      %336 = vector.broadcast %cst_319 : f32 to vector<8x48xf32>
      %c0_i32_320 = arith.constant 0 : i32
      %c16_i32_321 = arith.constant 16 : i32
      %337 = arith.addi %c0_i32_320, %c16_i32_321 : i32
      %c1_i32_322 = arith.constant 1 : i32
      %338 = scf.for %arg7 = %c0_i32_320 to %337 step %c1_i32_322 iter_args(%arg8 = %336) -> (vector<8x48xf32>)  : i32 {
        %c8_i32_376 = arith.constant 8 : i32
        %392 = arith.muli %arg7, %c8_i32_376 : i32
        %393 = tpu.assume_multiple %392, 8 : i32
        %394 = arith.index_cast %393 : i32 to index
        %c0_377 = arith.constant 0 : index
        %395 = vector.load %arg5[%394, %c0_377] : memref<128x4xf32, #tpu.memory_space<vmem>>, vector<8x4xf32>
        %396 = vector.extract_strided_slice %395 {offsets = [0, 0], sizes = [8, 1], strides = [1, 1]} : vector<8x4xf32> to vector<8x1xf32>
        %397 = vector.extract_strided_slice %395 {offsets = [0, 1], sizes = [8, 1], strides = [1, 1]} : vector<8x4xf32> to vector<8x1xf32>
        %398 = vector.extract_strided_slice %395 {offsets = [0, 2], sizes = [8, 1], strides = [1, 1]} : vector<8x4xf32> to vector<8x1xf32>
        %399 = vector.extract_strided_slice %395 {offsets = [0, 3], sizes = [8, 1], strides = [1, 1]} : vector<8x4xf32> to vector<8x1xf32>
        %400 = vector.broadcast %335 : f32 to vector<8x1xf32>
        %401 = arith.cmpf oeq, %399, %400 : vector<8x1xf32>
        %402 = arith.extui %401 : vector<8x1xi1> to vector<8x1xi32>
        %403 = arith.sitofp %402 : vector<8x1xi32> to vector<8x1xf32>
        %404 = vector.broadcast %396 : vector<8x1xf32> to vector<8x96xf32>
        %405 = vector.broadcast %296 : vector<1x96xf32> to vector<8x96xf32>
        %406 = arith.subf %404, %405 : vector<8x96xf32>
        %407 = vector.broadcast %397 : vector<8x1xf32> to vector<8x96xf32>
        %408 = vector.broadcast %297 : vector<1x96xf32> to vector<8x96xf32>
        %409 = arith.subf %407, %408 : vector<8x96xf32>
        %410 = vector.broadcast %398 : vector<8x1xf32> to vector<8x96xf32>
        %411 = vector.broadcast %298 : vector<1x96xf32> to vector<8x96xf32>
        %412 = arith.subf %410, %411 : vector<8x96xf32>
        %413 = vector.broadcast %396 : vector<8x1xf32> to vector<8x96xf32>
        %414 = vector.broadcast %299 : vector<1x96xf32> to vector<8x96xf32>
        %415 = arith.subf %413, %414 : vector<8x96xf32>
        %416 = vector.broadcast %397 : vector<8x1xf32> to vector<8x96xf32>
        %417 = vector.broadcast %300 : vector<1x96xf32> to vector<8x96xf32>
        %418 = arith.subf %416, %417 : vector<8x96xf32>
        %419 = vector.broadcast %398 : vector<8x1xf32> to vector<8x96xf32>
        %420 = vector.broadcast %301 : vector<1x96xf32> to vector<8x96xf32>
        %421 = arith.subf %419, %420 : vector<8x96xf32>
        %422 = vector.broadcast %396 : vector<8x1xf32> to vector<8x96xf32>
        %423 = vector.broadcast %302 : vector<1x96xf32> to vector<8x96xf32>
        %424 = arith.subf %422, %423 : vector<8x96xf32>
        %425 = vector.broadcast %397 : vector<8x1xf32> to vector<8x96xf32>
        %426 = vector.broadcast %303 : vector<1x96xf32> to vector<8x96xf32>
        %427 = arith.subf %425, %426 : vector<8x96xf32>
        %428 = vector.broadcast %398 : vector<8x1xf32> to vector<8x96xf32>
        %429 = vector.broadcast %304 : vector<1x96xf32> to vector<8x96xf32>
        %430 = arith.subf %428, %429 : vector<8x96xf32>
        %431 = vector.broadcast %305 : vector<1x96xf32> to vector<8x96xf32>
        %432 = arith.mulf %406, %431 : vector<8x96xf32>
        %433 = vector.broadcast %306 : vector<1x96xf32> to vector<8x96xf32>
        %434 = arith.mulf %409, %433 : vector<8x96xf32>
        %435 = arith.addf %432, %434 : vector<8x96xf32>
        %436 = vector.broadcast %307 : vector<1x96xf32> to vector<8x96xf32>
        %437 = arith.mulf %412, %436 : vector<8x96xf32>
        %438 = arith.addf %435, %437 : vector<8x96xf32>
        %439 = arith.mulf %438, %438 : vector<8x96xf32>
        %440 = vector.broadcast %308 : vector<1x96xf32> to vector<8x96xf32>
        %441 = arith.mulf %439, %440 : vector<8x96xf32>
        %442 = vector.broadcast %309 : vector<1x96xf32> to vector<8x96xf32>
        %443 = arith.mulf %406, %442 : vector<8x96xf32>
        %444 = vector.broadcast %310 : vector<1x96xf32> to vector<8x96xf32>
        %445 = arith.mulf %409, %444 : vector<8x96xf32>
        %446 = arith.addf %443, %445 : vector<8x96xf32>
        %447 = vector.broadcast %311 : vector<1x96xf32> to vector<8x96xf32>
        %448 = arith.mulf %412, %447 : vector<8x96xf32>
        %449 = arith.addf %446, %448 : vector<8x96xf32>
        %450 = vector.broadcast %312 : vector<1x96xf32> to vector<8x96xf32>
        %451 = arith.mulf %415, %450 : vector<8x96xf32>
        %452 = vector.broadcast %313 : vector<1x96xf32> to vector<8x96xf32>
        %453 = arith.mulf %418, %452 : vector<8x96xf32>
        %454 = arith.addf %451, %453 : vector<8x96xf32>
        %455 = vector.broadcast %314 : vector<1x96xf32> to vector<8x96xf32>
        %456 = arith.mulf %421, %455 : vector<8x96xf32>
        %457 = arith.addf %454, %456 : vector<8x96xf32>
        %458 = vector.broadcast %315 : vector<1x96xf32> to vector<8x96xf32>
        %459 = arith.mulf %424, %458 : vector<8x96xf32>
        %460 = vector.broadcast %316 : vector<1x96xf32> to vector<8x96xf32>
        %461 = arith.mulf %427, %460 : vector<8x96xf32>
        %462 = arith.addf %459, %461 : vector<8x96xf32>
        %463 = vector.broadcast %317 : vector<1x96xf32> to vector<8x96xf32>
        %464 = arith.mulf %430, %463 : vector<8x96xf32>
        %465 = arith.addf %462, %464 : vector<8x96xf32>
        %cst_378 = arith.constant 0.000000e+00 : f32
        %466 = vector.broadcast %cst_378 : f32 to vector<8x96xf32>
        %467 = arith.cmpf oge, %449, %466 : vector<8x96xf32>
        %cst_379 = arith.constant 0.000000e+00 : f32
        %468 = vector.broadcast %cst_379 : f32 to vector<8x96xf32>
        %469 = arith.cmpf oge, %457, %468 : vector<8x96xf32>
        %470 = arith.andi %467, %469 : vector<8x96xi1>
        %cst_380 = arith.constant 0.000000e+00 : f32
        %471 = vector.broadcast %cst_380 : f32 to vector<8x96xf32>
        %472 = arith.cmpf oge, %465, %471 : vector<8x96xf32>
        %473 = arith.andi %470, %472 : vector<8x96xi1>
        %474 = vector.broadcast %332 : vector<1x96xi1> to vector<8x96xi1>
        %475 = arith.andi %473, %474 : vector<8x96xi1>
        %476 = vector.broadcast %318 : vector<1x96xf32> to vector<8x96xf32>
        %477 = arith.mulf %406, %476 : vector<8x96xf32>
        %478 = vector.broadcast %319 : vector<1x96xf32> to vector<8x96xf32>
        %479 = arith.mulf %409, %478 : vector<8x96xf32>
        %480 = arith.addf %477, %479 : vector<8x96xf32>
        %481 = vector.broadcast %320 : vector<1x96xf32> to vector<8x96xf32>
        %482 = arith.mulf %412, %481 : vector<8x96xf32>
        %483 = arith.addf %480, %482 : vector<8x96xf32>
        %484 = vector.broadcast %327 : vector<1x96xf32> to vector<8x96xf32>
        %485 = arith.mulf %483, %484 : vector<8x96xf32>
        %cst_381 = arith.constant 0.000000e+00 : f32
        %cst_382 = arith.constant 1.000000e+00 : f32
        %486 = vector.broadcast %cst_381 : f32 to vector<8x96xf32>
        %487 = arith.maximumf %486, %485 : vector<8x96xf32>
        %488 = vector.broadcast %cst_382 : f32 to vector<8x96xf32>
        %489 = arith.minimumf %488, %487 : vector<8x96xf32>
        %490 = vector.broadcast %318 : vector<1x96xf32> to vector<8x96xf32>
        %491 = arith.mulf %489, %490 : vector<8x96xf32>
        %492 = arith.subf %406, %491 : vector<8x96xf32>
        %493 = vector.broadcast %319 : vector<1x96xf32> to vector<8x96xf32>
        %494 = arith.mulf %489, %493 : vector<8x96xf32>
        %495 = arith.subf %409, %494 : vector<8x96xf32>
        %496 = vector.broadcast %320 : vector<1x96xf32> to vector<8x96xf32>
        %497 = arith.mulf %489, %496 : vector<8x96xf32>
        %498 = arith.subf %412, %497 : vector<8x96xf32>
        %499 = arith.mulf %492, %492 : vector<8x96xf32>
        %500 = arith.mulf %495, %495 : vector<8x96xf32>
        %501 = arith.addf %499, %500 : vector<8x96xf32>
        %502 = arith.mulf %498, %498 : vector<8x96xf32>
        %503 = arith.addf %501, %502 : vector<8x96xf32>
        %504 = vector.broadcast %321 : vector<1x96xf32> to vector<8x96xf32>
        %505 = arith.mulf %415, %504 : vector<8x96xf32>
        %506 = vector.broadcast %322 : vector<1x96xf32> to vector<8x96xf32>
        %507 = arith.mulf %418, %506 : vector<8x96xf32>
        %508 = arith.addf %505, %507 : vector<8x96xf32>
        %509 = vector.broadcast %323 : vector<1x96xf32> to vector<8x96xf32>
        %510 = arith.mulf %421, %509 : vector<8x96xf32>
        %511 = arith.addf %508, %510 : vector<8x96xf32>
        %512 = vector.broadcast %328 : vector<1x96xf32> to vector<8x96xf32>
        %513 = arith.mulf %511, %512 : vector<8x96xf32>
        %cst_383 = arith.constant 0.000000e+00 : f32
        %cst_384 = arith.constant 1.000000e+00 : f32
        %514 = vector.broadcast %cst_383 : f32 to vector<8x96xf32>
        %515 = arith.maximumf %514, %513 : vector<8x96xf32>
        %516 = vector.broadcast %cst_384 : f32 to vector<8x96xf32>
        %517 = arith.minimumf %516, %515 : vector<8x96xf32>
        %518 = vector.broadcast %321 : vector<1x96xf32> to vector<8x96xf32>
        %519 = arith.mulf %517, %518 : vector<8x96xf32>
        %520 = arith.subf %415, %519 : vector<8x96xf32>
        %521 = vector.broadcast %322 : vector<1x96xf32> to vector<8x96xf32>
        %522 = arith.mulf %517, %521 : vector<8x96xf32>
        %523 = arith.subf %418, %522 : vector<8x96xf32>
        %524 = vector.broadcast %323 : vector<1x96xf32> to vector<8x96xf32>
        %525 = arith.mulf %517, %524 : vector<8x96xf32>
        %526 = arith.subf %421, %525 : vector<8x96xf32>
        %527 = arith.mulf %520, %520 : vector<8x96xf32>
        %528 = arith.mulf %523, %523 : vector<8x96xf32>
        %529 = arith.addf %527, %528 : vector<8x96xf32>
        %530 = arith.mulf %526, %526 : vector<8x96xf32>
        %531 = arith.addf %529, %530 : vector<8x96xf32>
        %532 = vector.broadcast %324 : vector<1x96xf32> to vector<8x96xf32>
        %533 = arith.mulf %424, %532 : vector<8x96xf32>
        %534 = vector.broadcast %325 : vector<1x96xf32> to vector<8x96xf32>
        %535 = arith.mulf %427, %534 : vector<8x96xf32>
        %536 = arith.addf %533, %535 : vector<8x96xf32>
        %537 = vector.broadcast %326 : vector<1x96xf32> to vector<8x96xf32>
        %538 = arith.mulf %430, %537 : vector<8x96xf32>
        %539 = arith.addf %536, %538 : vector<8x96xf32>
        %540 = vector.broadcast %329 : vector<1x96xf32> to vector<8x96xf32>
        %541 = arith.mulf %539, %540 : vector<8x96xf32>
        %cst_385 = arith.constant 0.000000e+00 : f32
        %cst_386 = arith.constant 1.000000e+00 : f32
        %542 = vector.broadcast %cst_385 : f32 to vector<8x96xf32>
        %543 = arith.maximumf %542, %541 : vector<8x96xf32>
        %544 = vector.broadcast %cst_386 : f32 to vector<8x96xf32>
        %545 = arith.minimumf %544, %543 : vector<8x96xf32>
        %546 = vector.broadcast %324 : vector<1x96xf32> to vector<8x96xf32>
        %547 = arith.mulf %545, %546 : vector<8x96xf32>
        %548 = arith.subf %424, %547 : vector<8x96xf32>
        %549 = vector.broadcast %325 : vector<1x96xf32> to vector<8x96xf32>
        %550 = arith.mulf %545, %549 : vector<8x96xf32>
        %551 = arith.subf %427, %550 : vector<8x96xf32>
        %552 = vector.broadcast %326 : vector<1x96xf32> to vector<8x96xf32>
        %553 = arith.mulf %545, %552 : vector<8x96xf32>
        %554 = arith.subf %430, %553 : vector<8x96xf32>
        %555 = arith.mulf %548, %548 : vector<8x96xf32>
        %556 = arith.mulf %551, %551 : vector<8x96xf32>
        %557 = arith.addf %555, %556 : vector<8x96xf32>
        %558 = arith.mulf %554, %554 : vector<8x96xf32>
        %559 = arith.addf %557, %558 : vector<8x96xf32>
        %560 = arith.minimumf %531, %559 : vector<8x96xf32>
        %561 = arith.minimumf %503, %560 : vector<8x96xf32>
        %562 = arith.select %475, %441, %561 : vector<8x96xi1>, vector<8x96xf32>
        %563 = vector.extract_strided_slice %562 {offsets = [0, 0], sizes = [8, 48], strides = [1, 1]} : vector<8x96xf32> to vector<8x48xf32>
        %564 = vector.extract_strided_slice %562 {offsets = [0, 48], sizes = [8, 48], strides = [1, 1]} : vector<8x96xf32> to vector<8x48xf32>
        %565 = arith.minimumf %563, %564 : vector<8x48xf32>
        %566 = math.sqrt %565 : vector<8x48xf32>
        %567 = vector.broadcast %403 : vector<8x1xf32> to vector<8x48xf32>
        %568 = arith.mulf %566, %567 : vector<8x48xf32>
        %569 = arith.addf %arg8, %568 : vector<8x48xf32>
        scf.yield %569 : vector<8x48xf32>
      }
      %c16_i32_323 = arith.constant 16 : i32
      %c6_324 = arith.constant 6 : index
      %c0_325 = arith.constant 0 : index
      %339 = vector.load %arg6[%c6_324, %c0_325] : memref<8x48xf32, #tpu.memory_space<vmem>>, vector<1x48xf32>
      %cst_326 = arith.constant dense<0.000000e+00> : vector<48xf32>
      %340 = vector.multi_reduction <add>, %338, %cst_326 [0] : vector<8x48xf32> to vector<48xf32>
      %341 = vector.shape_cast %340 : vector<48xf32> to vector<1x48xf32>
      %342 = arith.addf %339, %341 : vector<1x48xf32>
      %c6_327 = arith.constant 6 : index
      %c0_328 = arith.constant 0 : index
      %343 = vector.load %arg6[%c6_327, %c0_328] : memref<8x48xf32, #tpu.memory_space<vmem>>, vector<1x48xf32>
      tpu.vector_store %arg6[%c6_327, %c0_328], %342 {strides = array<i32>} : memref<8x48xf32, #tpu.memory_space<vmem>>, vector<1x48xf32>,
      %c245 = arith.constant 245 : index
      %c0_329 = arith.constant 0 : index
      %344 = vector.load %arg4[%c245, %c0_329] : memref<280x96xf32, #tpu.memory_space<vmem>>, vector<1x96xf32>
      %c246 = arith.constant 246 : index
      %c0_330 = arith.constant 0 : index
      %345 = vector.load %arg4[%c246, %c0_330] : memref<280x96xf32, #tpu.memory_space<vmem>>, vector<1x96xf32>
      %c247 = arith.constant 247 : index
      %c0_331 = arith.constant 0 : index
      %346 = vector.load %arg4[%c247, %c0_331] : memref<280x96xf32, #tpu.memory_space<vmem>>, vector<1x96xf32>
      %c248 = arith.constant 248 : index
      %c0_332 = arith.constant 0 : index
      %347 = vector.load %arg4[%c248, %c0_332] : memref<280x96xf32, #tpu.memory_space<vmem>>, vector<1x96xf32>
      %c249 = arith.constant 249 : index
      %c0_333 = arith.constant 0 : index
      %348 = vector.load %arg4[%c249, %c0_333] : memref<280x96xf32, #tpu.memory_space<vmem>>, vector<1x96xf32>
      %c250 = arith.constant 250 : index
      %c0_334 = arith.constant 0 : index
      %349 = vector.load %arg4[%c250, %c0_334] : memref<280x96xf32, #tpu.memory_space<vmem>>, vector<1x96xf32>
      %c251 = arith.constant 251 : index
      %c0_335 = arith.constant 0 : index
      %350 = vector.load %arg4[%c251, %c0_335] : memref<280x96xf32, #tpu.memory_space<vmem>>, vector<1x96xf32>
      %c252 = arith.constant 252 : index
      %c0_336 = arith.constant 0 : index
      %351 = vector.load %arg4[%c252, %c0_336] : memref<280x96xf32, #tpu.memory_space<vmem>>, vector<1x96xf32>
      %c253 = arith.constant 253 : index
      %c0_337 = arith.constant 0 : index
      %352 = vector.load %arg4[%c253, %c0_337] : memref<280x96xf32, #tpu.memory_space<vmem>>, vector<1x96xf32>
      %c254 = arith.constant 254 : index
      %c0_338 = arith.constant 0 : index
      %353 = vector.load %arg4[%c254, %c0_338] : memref<280x96xf32, #tpu.memory_space<vmem>>, vector<1x96xf32>
      %c255 = arith.constant 255 : index
      %c0_339 = arith.constant 0 : index
      %354 = vector.load %arg4[%c255, %c0_339] : memref<280x96xf32, #tpu.memory_space<vmem>>, vector<1x96xf32>
      %c256 = arith.constant 256 : index
      %c0_340 = arith.constant 0 : index
      %355 = vector.load %arg4[%c256, %c0_340] : memref<280x96xf32, #tpu.memory_space<vmem>>, vector<1x96xf32>
      %c257 = arith.constant 257 : index
      %c0_341 = arith.constant 0 : index
      %356 = vector.load %arg4[%c257, %c0_341] : memref<280x96xf32, #tpu.memory_space<vmem>>, vector<1x96xf32>
      %c258 = arith.constant 258 : index
      %c0_342 = arith.constant 0 : index
      %357 = vector.load %arg4[%c258, %c0_342] : memref<280x96xf32, #tpu.memory_space<vmem>>, vector<1x96xf32>
      %c259 = arith.constant 259 : index
      %c0_343 = arith.constant 0 : index
      %358 = vector.load %arg4[%c259, %c0_343] : memref<280x96xf32, #tpu.memory_space<vmem>>, vector<1x96xf32>
      %c260 = arith.constant 260 : index
      %c0_344 = arith.constant 0 : index
      %359 = vector.load %arg4[%c260, %c0_344] : memref<280x96xf32, #tpu.memory_space<vmem>>, vector<1x96xf32>
      %c261 = arith.constant 261 : index
      %c0_345 = arith.constant 0 : index
      %360 = vector.load %arg4[%c261, %c0_345] : memref<280x96xf32, #tpu.memory_space<vmem>>, vector<1x96xf32>
      %c262 = arith.constant 262 : index
      %c0_346 = arith.constant 0 : index
      %361 = vector.load %arg4[%c262, %c0_346] : memref<280x96xf32, #tpu.memory_space<vmem>>, vector<1x96xf32>
      %c263 = arith.constant 263 : index
      %c0_347 = arith.constant 0 : index
      %362 = vector.load %arg4[%c263, %c0_347] : memref<280x96xf32, #tpu.memory_space<vmem>>, vector<1x96xf32>
      %c264 = arith.constant 264 : index
      %c0_348 = arith.constant 0 : index
      %363 = vector.load %arg4[%c264, %c0_348] : memref<280x96xf32, #tpu.memory_space<vmem>>, vector<1x96xf32>
      %c265 = arith.constant 265 : index
      %c0_349 = arith.constant 0 : index
      %364 = vector.load %arg4[%c265, %c0_349] : memref<280x96xf32, #tpu.memory_space<vmem>>, vector<1x96xf32>
      %c266 = arith.constant 266 : index
      %c0_350 = arith.constant 0 : index
      %365 = vector.load %arg4[%c266, %c0_350] : memref<280x96xf32, #tpu.memory_space<vmem>>, vector<1x96xf32>
      %c267 = arith.constant 267 : index
      %c0_351 = arith.constant 0 : index
      %366 = vector.load %arg4[%c267, %c0_351] : memref<280x96xf32, #tpu.memory_space<vmem>>, vector<1x96xf32>
      %c268 = arith.constant 268 : index
      %c0_352 = arith.constant 0 : index
      %367 = vector.load %arg4[%c268, %c0_352] : memref<280x96xf32, #tpu.memory_space<vmem>>, vector<1x96xf32>
      %c269 = arith.constant 269 : index
      %c0_353 = arith.constant 0 : index
      %368 = vector.load %arg4[%c269, %c0_353] : memref<280x96xf32, #tpu.memory_space<vmem>>, vector<1x96xf32>
      %c270 = arith.constant 270 : index
      %c0_354 = arith.constant 0 : index
      %369 = vector.load %arg4[%c270, %c0_354] : memref<280x96xf32, #tpu.memory_space<vmem>>, vector<1x96xf32>
      %c271 = arith.constant 271 : index
      %c0_355 = arith.constant 0 : index
      %370 = vector.load %arg4[%c271, %c0_355] : memref<280x96xf32, #tpu.memory_space<vmem>>, vector<1x96xf32>
      %c272 = arith.constant 272 : index
      %c0_356 = arith.constant 0 : index
      %371 = vector.load %arg4[%c272, %c0_356] : memref<280x96xf32, #tpu.memory_space<vmem>>, vector<1x96xf32>
      %c273 = arith.constant 273 : index
      %c0_357 = arith.constant 0 : index
      %372 = vector.load %arg4[%c273, %c0_357] : memref<280x96xf32, #tpu.memory_space<vmem>>, vector<1x96xf32>
      %c274 = arith.constant 274 : index
      %c0_358 = arith.constant 0 : index
      %373 = vector.load %arg4[%c274, %c0_358] : memref<280x96xf32, #tpu.memory_space<vmem>>, vector<1x96xf32>
      %c275 = arith.constant 275 : index
      %c0_359 = arith.constant 0 : index
      %374 = vector.load %arg4[%c275, %c0_359] : memref<280x96xf32, #tpu.memory_space<vmem>>, vector<1x96xf32>
      %c276 = arith.constant 276 : index
      %c0_360 = arith.constant 0 : index
      %375 = vector.load %arg4[%c276, %c0_360] : memref<280x96xf32, #tpu.memory_space<vmem>>, vector<1x96xf32>
      %c277 = arith.constant 277 : index
      %c0_361 = arith.constant 0 : index
      %376 = vector.load %arg4[%c277, %c0_361] : memref<280x96xf32, #tpu.memory_space<vmem>>, vector<1x96xf32>
      %c278 = arith.constant 278 : index
      %c0_362 = arith.constant 0 : index
      %377 = vector.load %arg4[%c278, %c0_362] : memref<280x96xf32, #tpu.memory_space<vmem>>, vector<1x96xf32>
      %c279 = arith.constant 279 : index
      %c0_363 = arith.constant 0 : index
      %378 = vector.load %arg4[%c279, %c0_363] : memref<280x96xf32, #tpu.memory_space<vmem>>, vector<1x96xf32>
      %cst_364 = arith.constant 5.000000e-01 : f32
      %379 = vector.broadcast %cst_364 : f32 to vector<1x96xf32>
      %380 = arith.cmpf ogt, %378, %379 : vector<1x96xf32>
      %c8_i32_365 = arith.constant 8 : i32
      %381 = arith.muli %arg0, %c8_i32_365 : i32
      %c7_i32 = arith.constant 7 : i32
      %382 = arith.addi %381, %c7_i32 : i32
      %383 = arith.sitofp %382 : i32 to f32
      %cst_366 = arith.constant 0.000000e+00 : f32
      %384 = vector.broadcast %cst_366 : f32 to vector<8x48xf32>
      %c0_i32_367 = arith.constant 0 : i32
      %c16_i32_368 = arith.constant 16 : i32
      %385 = arith.addi %c0_i32_367, %c16_i32_368 : i32
      %c1_i32_369 = arith.constant 1 : i32
      %386 = scf.for %arg7 = %c0_i32_367 to %385 step %c1_i32_369 iter_args(%arg8 = %384) -> (vector<8x48xf32>)  : i32 {
        %c8_i32_376 = arith.constant 8 : i32
        %392 = arith.muli %arg7, %c8_i32_376 : i32
        %393 = tpu.assume_multiple %392, 8 : i32
        %394 = arith.index_cast %393 : i32 to index
        %c0_377 = arith.constant 0 : index
        %395 = vector.load %arg5[%394, %c0_377] : memref<128x4xf32, #tpu.memory_space<vmem>>, vector<8x4xf32>
        %396 = vector.extract_strided_slice %395 {offsets = [0, 0], sizes = [8, 1], strides = [1, 1]} : vector<8x4xf32> to vector<8x1xf32>
        %397 = vector.extract_strided_slice %395 {offsets = [0, 1], sizes = [8, 1], strides = [1, 1]} : vector<8x4xf32> to vector<8x1xf32>
        %398 = vector.extract_strided_slice %395 {offsets = [0, 2], sizes = [8, 1], strides = [1, 1]} : vector<8x4xf32> to vector<8x1xf32>
        %399 = vector.extract_strided_slice %395 {offsets = [0, 3], sizes = [8, 1], strides = [1, 1]} : vector<8x4xf32> to vector<8x1xf32>
        %400 = vector.broadcast %383 : f32 to vector<8x1xf32>
        %401 = arith.cmpf oeq, %399, %400 : vector<8x1xf32>
        %402 = arith.extui %401 : vector<8x1xi1> to vector<8x1xi32>
        %403 = arith.sitofp %402 : vector<8x1xi32> to vector<8x1xf32>
        %404 = vector.broadcast %396 : vector<8x1xf32> to vector<8x96xf32>
        %405 = vector.broadcast %344 : vector<1x96xf32> to vector<8x96xf32>
        %406 = arith.subf %404, %405 : vector<8x96xf32>
        %407 = vector.broadcast %397 : vector<8x1xf32> to vector<8x96xf32>
        %408 = vector.broadcast %345 : vector<1x96xf32> to vector<8x96xf32>
        %409 = arith.subf %407, %408 : vector<8x96xf32>
        %410 = vector.broadcast %398 : vector<8x1xf32> to vector<8x96xf32>
        %411 = vector.broadcast %346 : vector<1x96xf32> to vector<8x96xf32>
        %412 = arith.subf %410, %411 : vector<8x96xf32>
        %413 = vector.broadcast %396 : vector<8x1xf32> to vector<8x96xf32>
        %414 = vector.broadcast %347 : vector<1x96xf32> to vector<8x96xf32>
        %415 = arith.subf %413, %414 : vector<8x96xf32>
        %416 = vector.broadcast %397 : vector<8x1xf32> to vector<8x96xf32>
        %417 = vector.broadcast %348 : vector<1x96xf32> to vector<8x96xf32>
        %418 = arith.subf %416, %417 : vector<8x96xf32>
        %419 = vector.broadcast %398 : vector<8x1xf32> to vector<8x96xf32>
        %420 = vector.broadcast %349 : vector<1x96xf32> to vector<8x96xf32>
        %421 = arith.subf %419, %420 : vector<8x96xf32>
        %422 = vector.broadcast %396 : vector<8x1xf32> to vector<8x96xf32>
        %423 = vector.broadcast %350 : vector<1x96xf32> to vector<8x96xf32>
        %424 = arith.subf %422, %423 : vector<8x96xf32>
        %425 = vector.broadcast %397 : vector<8x1xf32> to vector<8x96xf32>
        %426 = vector.broadcast %351 : vector<1x96xf32> to vector<8x96xf32>
        %427 = arith.subf %425, %426 : vector<8x96xf32>
        %428 = vector.broadcast %398 : vector<8x1xf32> to vector<8x96xf32>
        %429 = vector.broadcast %352 : vector<1x96xf32> to vector<8x96xf32>
        %430 = arith.subf %428, %429 : vector<8x96xf32>
        %431 = vector.broadcast %353 : vector<1x96xf32> to vector<8x96xf32>
        %432 = arith.mulf %406, %431 : vector<8x96xf32>
        %433 = vector.broadcast %354 : vector<1x96xf32> to vector<8x96xf32>
        %434 = arith.mulf %409, %433 : vector<8x96xf32>
        %435 = arith.addf %432, %434 : vector<8x96xf32>
        %436 = vector.broadcast %355 : vector<1x96xf32> to vector<8x96xf32>
        %437 = arith.mulf %412, %436 : vector<8x96xf32>
        %438 = arith.addf %435, %437 : vector<8x96xf32>
        %439 = arith.mulf %438, %438 : vector<8x96xf32>
        %440 = vector.broadcast %356 : vector<1x96xf32> to vector<8x96xf32>
        %441 = arith.mulf %439, %440 : vector<8x96xf32>
        %442 = vector.broadcast %357 : vector<1x96xf32> to vector<8x96xf32>
        %443 = arith.mulf %406, %442 : vector<8x96xf32>
        %444 = vector.broadcast %358 : vector<1x96xf32> to vector<8x96xf32>
        %445 = arith.mulf %409, %444 : vector<8x96xf32>
        %446 = arith.addf %443, %445 : vector<8x96xf32>
        %447 = vector.broadcast %359 : vector<1x96xf32> to vector<8x96xf32>
        %448 = arith.mulf %412, %447 : vector<8x96xf32>
        %449 = arith.addf %446, %448 : vector<8x96xf32>
        %450 = vector.broadcast %360 : vector<1x96xf32> to vector<8x96xf32>
        %451 = arith.mulf %415, %450 : vector<8x96xf32>
        %452 = vector.broadcast %361 : vector<1x96xf32> to vector<8x96xf32>
        %453 = arith.mulf %418, %452 : vector<8x96xf32>
        %454 = arith.addf %451, %453 : vector<8x96xf32>
        %455 = vector.broadcast %362 : vector<1x96xf32> to vector<8x96xf32>
        %456 = arith.mulf %421, %455 : vector<8x96xf32>
        %457 = arith.addf %454, %456 : vector<8x96xf32>
        %458 = vector.broadcast %363 : vector<1x96xf32> to vector<8x96xf32>
        %459 = arith.mulf %424, %458 : vector<8x96xf32>
        %460 = vector.broadcast %364 : vector<1x96xf32> to vector<8x96xf32>
        %461 = arith.mulf %427, %460 : vector<8x96xf32>
        %462 = arith.addf %459, %461 : vector<8x96xf32>
        %463 = vector.broadcast %365 : vector<1x96xf32> to vector<8x96xf32>
        %464 = arith.mulf %430, %463 : vector<8x96xf32>
        %465 = arith.addf %462, %464 : vector<8x96xf32>
        %cst_378 = arith.constant 0.000000e+00 : f32
        %466 = vector.broadcast %cst_378 : f32 to vector<8x96xf32>
        %467 = arith.cmpf oge, %449, %466 : vector<8x96xf32>
        %cst_379 = arith.constant 0.000000e+00 : f32
        %468 = vector.broadcast %cst_379 : f32 to vector<8x96xf32>
        %469 = arith.cmpf oge, %457, %468 : vector<8x96xf32>
        %470 = arith.andi %467, %469 : vector<8x96xi1>
        %cst_380 = arith.constant 0.000000e+00 : f32
        %471 = vector.broadcast %cst_380 : f32 to vector<8x96xf32>
        %472 = arith.cmpf oge, %465, %471 : vector<8x96xf32>
        %473 = arith.andi %470, %472 : vector<8x96xi1>
        %474 = vector.broadcast %380 : vector<1x96xi1> to vector<8x96xi1>
        %475 = arith.andi %473, %474 : vector<8x96xi1>
        %476 = vector.broadcast %366 : vector<1x96xf32> to vector<8x96xf32>
        %477 = arith.mulf %406, %476 : vector<8x96xf32>
        %478 = vector.broadcast %367 : vector<1x96xf32> to vector<8x96xf32>
        %479 = arith.mulf %409, %478 : vector<8x96xf32>
        %480 = arith.addf %477, %479 : vector<8x96xf32>
        %481 = vector.broadcast %368 : vector<1x96xf32> to vector<8x96xf32>
        %482 = arith.mulf %412, %481 : vector<8x96xf32>
        %483 = arith.addf %480, %482 : vector<8x96xf32>
        %484 = vector.broadcast %375 : vector<1x96xf32> to vector<8x96xf32>
        %485 = arith.mulf %483, %484 : vector<8x96xf32>
        %cst_381 = arith.constant 0.000000e+00 : f32
        %cst_382 = arith.constant 1.000000e+00 : f32
        %486 = vector.broadcast %cst_381 : f32 to vector<8x96xf32>
        %487 = arith.maximumf %486, %485 : vector<8x96xf32>
        %488 = vector.broadcast %cst_382 : f32 to vector<8x96xf32>
        %489 = arith.minimumf %488, %487 : vector<8x96xf32>
        %490 = vector.broadcast %366 : vector<1x96xf32> to vector<8x96xf32>
        %491 = arith.mulf %489, %490 : vector<8x96xf32>
        %492 = arith.subf %406, %491 : vector<8x96xf32>
        %493 = vector.broadcast %367 : vector<1x96xf32> to vector<8x96xf32>
        %494 = arith.mulf %489, %493 : vector<8x96xf32>
        %495 = arith.subf %409, %494 : vector<8x96xf32>
        %496 = vector.broadcast %368 : vector<1x96xf32> to vector<8x96xf32>
        %497 = arith.mulf %489, %496 : vector<8x96xf32>
        %498 = arith.subf %412, %497 : vector<8x96xf32>
        %499 = arith.mulf %492, %492 : vector<8x96xf32>
        %500 = arith.mulf %495, %495 : vector<8x96xf32>
        %501 = arith.addf %499, %500 : vector<8x96xf32>
        %502 = arith.mulf %498, %498 : vector<8x96xf32>
        %503 = arith.addf %501, %502 : vector<8x96xf32>
        %504 = vector.broadcast %369 : vector<1x96xf32> to vector<8x96xf32>
        %505 = arith.mulf %415, %504 : vector<8x96xf32>
        %506 = vector.broadcast %370 : vector<1x96xf32> to vector<8x96xf32>
        %507 = arith.mulf %418, %506 : vector<8x96xf32>
        %508 = arith.addf %505, %507 : vector<8x96xf32>
        %509 = vector.broadcast %371 : vector<1x96xf32> to vector<8x96xf32>
        %510 = arith.mulf %421, %509 : vector<8x96xf32>
        %511 = arith.addf %508, %510 : vector<8x96xf32>
        %512 = vector.broadcast %376 : vector<1x96xf32> to vector<8x96xf32>
        %513 = arith.mulf %511, %512 : vector<8x96xf32>
        %cst_383 = arith.constant 0.000000e+00 : f32
        %cst_384 = arith.constant 1.000000e+00 : f32
        %514 = vector.broadcast %cst_383 : f32 to vector<8x96xf32>
        %515 = arith.maximumf %514, %513 : vector<8x96xf32>
        %516 = vector.broadcast %cst_384 : f32 to vector<8x96xf32>
        %517 = arith.minimumf %516, %515 : vector<8x96xf32>
        %518 = vector.broadcast %369 : vector<1x96xf32> to vector<8x96xf32>
        %519 = arith.mulf %517, %518 : vector<8x96xf32>
        %520 = arith.subf %415, %519 : vector<8x96xf32>
        %521 = vector.broadcast %370 : vector<1x96xf32> to vector<8x96xf32>
        %522 = arith.mulf %517, %521 : vector<8x96xf32>
        %523 = arith.subf %418, %522 : vector<8x96xf32>
        %524 = vector.broadcast %371 : vector<1x96xf32> to vector<8x96xf32>
        %525 = arith.mulf %517, %524 : vector<8x96xf32>
        %526 = arith.subf %421, %525 : vector<8x96xf32>
        %527 = arith.mulf %520, %520 : vector<8x96xf32>
        %528 = arith.mulf %523, %523 : vector<8x96xf32>
        %529 = arith.addf %527, %528 : vector<8x96xf32>
        %530 = arith.mulf %526, %526 : vector<8x96xf32>
        %531 = arith.addf %529, %530 : vector<8x96xf32>
        %532 = vector.broadcast %372 : vector<1x96xf32> to vector<8x96xf32>
        %533 = arith.mulf %424, %532 : vector<8x96xf32>
        %534 = vector.broadcast %373 : vector<1x96xf32> to vector<8x96xf32>
        %535 = arith.mulf %427, %534 : vector<8x96xf32>
        %536 = arith.addf %533, %535 : vector<8x96xf32>
        %537 = vector.broadcast %374 : vector<1x96xf32> to vector<8x96xf32>
        %538 = arith.mulf %430, %537 : vector<8x96xf32>
        %539 = arith.addf %536, %538 : vector<8x96xf32>
        %540 = vector.broadcast %377 : vector<1x96xf32> to vector<8x96xf32>
        %541 = arith.mulf %539, %540 : vector<8x96xf32>
        %cst_385 = arith.constant 0.000000e+00 : f32
        %cst_386 = arith.constant 1.000000e+00 : f32
        %542 = vector.broadcast %cst_385 : f32 to vector<8x96xf32>
        %543 = arith.maximumf %542, %541 : vector<8x96xf32>
        %544 = vector.broadcast %cst_386 : f32 to vector<8x96xf32>
        %545 = arith.minimumf %544, %543 : vector<8x96xf32>
        %546 = vector.broadcast %372 : vector<1x96xf32> to vector<8x96xf32>
        %547 = arith.mulf %545, %546 : vector<8x96xf32>
        %548 = arith.subf %424, %547 : vector<8x96xf32>
        %549 = vector.broadcast %373 : vector<1x96xf32> to vector<8x96xf32>
        %550 = arith.mulf %545, %549 : vector<8x96xf32>
        %551 = arith.subf %427, %550 : vector<8x96xf32>
        %552 = vector.broadcast %374 : vector<1x96xf32> to vector<8x96xf32>
        %553 = arith.mulf %545, %552 : vector<8x96xf32>
        %554 = arith.subf %430, %553 : vector<8x96xf32>
        %555 = arith.mulf %548, %548 : vector<8x96xf32>
        %556 = arith.mulf %551, %551 : vector<8x96xf32>
        %557 = arith.addf %555, %556 : vector<8x96xf32>
        %558 = arith.mulf %554, %554 : vector<8x96xf32>
        %559 = arith.addf %557, %558 : vector<8x96xf32>
        %560 = arith.minimumf %531, %559 : vector<8x96xf32>
        %561 = arith.minimumf %503, %560 : vector<8x96xf32>
        %562 = arith.select %475, %441, %561 : vector<8x96xi1>, vector<8x96xf32>
        %563 = vector.extract_strided_slice %562 {offsets = [0, 0], sizes = [8, 48], strides = [1, 1]} : vector<8x96xf32> to vector<8x48xf32>
        %564 = vector.extract_strided_slice %562 {offsets = [0, 48], sizes = [8, 48], strides = [1, 1]} : vector<8x96xf32> to vector<8x48xf32>
        %565 = arith.minimumf %563, %564 : vector<8x48xf32>
        %566 = math.sqrt %565 : vector<8x48xf32>
        %567 = vector.broadcast %403 : vector<8x1xf32> to vector<8x48xf32>
        %568 = arith.mulf %566, %567 : vector<8x48xf32>
        %569 = arith.addf %arg8, %568 : vector<8x48xf32>
        scf.yield %569 : vector<8x48xf32>
      }
      %c16_i32_370 = arith.constant 16 : i32
      %c7_371 = arith.constant 7 : index
      %c0_372 = arith.constant 0 : index
      %387 = vector.load %arg6[%c7_371, %c0_372] : memref<8x48xf32, #tpu.memory_space<vmem>>, vector<1x48xf32>
      %cst_373 = arith.constant dense<0.000000e+00> : vector<48xf32>
      %388 = vector.multi_reduction <add>, %386, %cst_373 [0] : vector<8x48xf32> to vector<48xf32>
      %389 = vector.shape_cast %388 : vector<48xf32> to vector<1x48xf32>
      %390 = arith.addf %387, %389 : vector<1x48xf32>
      %c7_374 = arith.constant 7 : index
      %c0_375 = arith.constant 0 : index
      %391 = vector.load %arg6[%c7_374, %c0_375] : memref<8x48xf32, #tpu.memory_space<vmem>>, vector<1x48xf32>
      tpu.vector_store %arg6[%c7_374, %c0_375], %390 {strides = array<i32>} : memref<8x48xf32, #tpu.memory_space<vmem>>, vector<1x48xf32>,
    } else {
    }
    return
  }
  func.func @transform_0(%arg0: i32, %arg1: i32, %arg2: memref<8xi32, #tpu.memory_space<smem>>, %arg3: memref<8xi32, #tpu.memory_space<smem>>) -> (i32, i32) {
    %c0_i32 = arith.constant 0 : i32
    %c0_i32_0 = arith.constant 0 : i32
    return %arg0, %c0_i32 : i32, i32
  }
  func.func @transform_1(%arg0: i32, %arg1: i32, %arg2: memref<8xi32, #tpu.memory_space<smem>>, %arg3: memref<8xi32, #tpu.memory_space<smem>>) -> (i32, i32) {
    %0 = arith.index_cast %arg0 : i32 to index
    %1 = memref.load %arg3[%0] : memref<8xi32, #tpu.memory_space<smem>>
    %c1_i32 = arith.constant 1 : i32
    %2 = arith.subi %1, %c1_i32 : i32
    %c0_i32 = arith.constant 0 : i32
    %3 = arith.maxsi %2, %c0_i32 : i32
    %4 = arith.index_cast %arg0 : i32 to index
    %5 = memref.load %arg2[%4] : memref<8xi32, #tpu.memory_space<smem>>
    %6 = arith.minsi %arg1, %3 : i32
    %7 = arith.addi %5, %6 : i32
    %c0_i32_0 = arith.constant 0 : i32
    %c0_i32_1 = arith.constant 0 : i32
    return %7, %c0_i32_0 : i32, i32
  }
  func.func @transform_2(%arg0: i32, %arg1: i32, %arg2: memref<8xi32, #tpu.memory_space<smem>>, %arg3: memref<8xi32, #tpu.memory_space<smem>>) -> (i32, i32) {
    %c0_i32 = arith.constant 0 : i32
    %c0_i32_0 = arith.constant 0 : i32
    return %arg0, %c0_i32 : i32, i32
  }
}

</mosaic_0001>

<llo_original>
// kernel: custom-call
$region0: #{custom-call}
  %s0 = inlined_call_operand.vmem [shape: u32[9], index: 0, kind: output, shape index: {}]

// kernel: point_triangle_distance.1
$region0: #{point_triangle_distance.1}
  #allocation0 [shape = 'u32[]', space=smem, size = 0x4, offset = 0x4, fixed_abs, tag = 'smem constant byte address 0x4 - core index']
  #allocation1 [shape = 'u32[144,128]{1,0:T(1,128)}', space=vmem, size = 0x12000, scoped, tag = 'internal scratch']
  #allocation2 [shape = 's32[1]{0}', space=sflag, size = 0x4, scoped, tag = 'scoped memory for point_triangle_distance.1']
  #allocation3 [shape = 'u8[512]{0}', space=smem, size = 0x200, scoped, tag = 'prefetched SMEM operand 0']
  #allocation4 [shape = 'u8[512]{0}', space=smem, size = 0x200, scoped, tag = 'prefetched SMEM operand 1']
  %s0 = inlined_call_operand.vmem [shape: s32[8], index: 0, kind: input, shape index: {}]
  %s1 = inlined_call_operand.vmem [shape: s32[8], index: 1, kind: input, shape index: {}]
  %s2 = inlined_call_operand.vmem [shape: f32[2240,96], index: 2, kind: input, shape index: {}]
  %s3 = inlined_call_operand.vmem [shape: f32[128,4], index: 3, kind: input, shape index: {}]
  %s4 = inlined_call_operand.vmem [shape: f32[64,48], index: 4, kind: output, shape index: {}]
  %s5 = sld [smem:[#allocation0]]
  $region105: #{point_triangle_distance.1} parent=0
    _
  %s7 = ssub.s32 1, %s5
  %s8 = scalar_select 0, %s7, %s5
  %s9 = sshll.u32 %s0, 4
  %s10 = int_to_ptr.vmem [resolvable:$true] %s9
  %12 = dma.vmem_to_smem %s10, 16, [#allocation3], [#allocation2]
  %s13 = sshll.u32 %s1, 4
  %s14 = int_to_ptr.vmem [resolvable:$true] %s13
  %16 = dma.vmem_to_smem %s14, 16, [#allocation4], [#allocation2]
  %17 = dma.done [#allocation2], 32
  %18 = sfence
  loop: start=0, step=1, limit=10
  $region2: #{point_triangle_distance.1} parent=0 // loop_pre_header
    _
  $region3: #{point_triangle_distance.1} parent=0 // loop_header
    %s20 = sphi 0, %s24
    %p21 = scmp.ge.s32.totalorder %s20, 10
    %s27 = sphi 0, %s39
    %s28 = sphi 0, %s35
    %s29 = sphi 0, %s27
    %s30 = sphi 0, %s28
    %s31 = sphi 0, %s29
    %s32 = sphi 0, %s30
    %s42 = sphi 0, %s44
    %s45 = sphi 0, %s42
    %s46 = sphi 0, %s45
    %s62 = sphi 0, %s46
    %s84 = sphi 0, %s86
    %s87 = sphi 0, %s84
    %s88 = sphi 0, %s87
    %s104 = sphi 0, %s88
    %s110 = sphi 0, %s112
    %s113 = sphi 0, %s110
    %s114 = sphi 0, %s113
    %s130 = sphi 0, %s114
  $region4: #{point_triangle_distance.1} parent=0 // loop_header_branch
    %23 = sbr.rel (%p21) target = $region8
  $region5: #{point_triangle_distance.1} parent=0 // loop_body
    %s25 = ssub.s32 %s20, 1
    %s26 = ssub.s32 %s20, 2
    %s33 = sadd.s32 1, %s28
    %p34 = scmp.ge.s32.totalorder %s33, 1
    %s35 = scalar_select %p34, 0, %s33
    %s36 = sadd.s32 1, %s27
    %s37 = scalar_select %p34, %s36, %s27
    %p38 = scmp.ge.s32.totalorder %s37, 8
    %s39 = scalar_select %p38, 0, %s37
    %s40 = ssub.s32 %s27, %s39
    %p41 = scmp.eq.s32.totalorder %s40, 0
    %s43 = sadd.s32 %s42, 1
    %s44 = scalar_select %p41, %s42, %s43
    %p47 = pneg %p41
    %p48 = scmp.eq.s32.totalorder %s20, 7
    %p49 = por %p47, %p48
    %p50 = scmp.ne.s32.totalorder %s42, %s45
    %p51 = scmp.eq.s32.totalorder %s20, 0
    %p52 = por %p50, %p51
    %p53 = scmp.ne.s32.totalorder %s42, %s45
    %p54 = scmp.eq.s32.totalorder %s25, 7
    %p55 = por %p53, %p54
    %p56 = scmp.ne.s32.totalorder %s45, %s46
    %p57 = scmp.eq.s32.totalorder %s25, 0
    %p58 = por %p56, %p57
    %p59 = scmp.ne.s32.totalorder %s45, %s46
    %p60 = scmp.eq.s32.totalorder %s26, 7
    %p61 = por %p59, %p60
    %p63 = scmp.ne.s32.totalorder %s46, %s62
    %p64 = scmp.eq.s32.totalorder %s26, 0
    %p65 = por %p63, %p64
    %s66 = sld [smem:[#allocation4 + %s27]]
    %s67 = ssub.s32 %s66, 1
    %p68 = scmp.gt.s32.totalorder %s67, 0
    %s69 = scalar_select %p68, %s67, 0
    %s70 = sld [smem:[#allocation3 + %s27]]
    %p71 = scmp.lt.s32.totalorder %s28, %s69
    %s72 = scalar_select %p71, %s28, %s69
    %s73 = sadd.s32 %s70, %s72
    %s74 = sld [smem:[#allocation4 + %s39]]
    %s75 = ssub.s32 %s74, 1
    %p76 = scmp.gt.s32.totalorder %s75, 0
    %s77 = scalar_select %p76, %s75, 0
    %s78 = sld [smem:[#allocation3 + %s39]]
    %p79 = scmp.lt.s32.totalorder %s35, %s77
    %s80 = scalar_select %p79, %s35, %s77
    %s81 = sadd.s32 %s78, %s80
    %s82 = ssub.s32 %s73, %s81
    %p83 = scmp.eq.s32.totalorder %s82, 0
    %s85 = sadd.s32 %s84, 1
    %s86 = scalar_select %p83, %s84, %s85
    %p89 = pneg %p83
    %p90 = scmp.eq.s32.totalorder %s20, 7
    %p91 = por %p89, %p90
    %p92 = scmp.ne.s32.totalorder %s84, %s87
    %p93 = scmp.eq.s32.totalorder %s20, 0
    %p94 = por %p92, %p93
    %p95 = scmp.ne.s32.totalorder %s84, %s87
    %p96 = scmp.eq.s32.totalorder %s25, 7
    %p97 = por %p95, %p96
    %p98 = scmp.ne.s32.totalorder %s87, %s88
    %p99 = scmp.eq.s32.totalorder %s25, 0
    %p100 = por %p98, %p99
    %p101 = scmp.ne.s32.totalorder %s87, %s88
    %p102 = scmp.eq.s32.totalorder %s26, 7
    %p103 = por %p101, %p102
    %p105 = scmp.ne.s32.totalorder %s88, %s104
    %p106 = scmp.eq.s32.totalorder %s26, 0
    %p107 = por %p105, %p106
    %s108 = ssub.s32 %s27, %s39
    %p109 = scmp.eq.s32.totalorder %s108, 0
    %s111 = sadd.s32 %s110, 1
    %s112 = scalar_select %p109, %s110, %s111
    %p115 = pneg %p109
    %p116 = scmp.eq.s32.totalorder %s20, 7
    %p117 = por %p115, %p116
    %p118 = scmp.ne.s32.totalorder %s110, %s113
    %p119 = scmp.eq.s32.totalorder %s20, 0
    %p120 = por %p118, %p119
    %p121 = scmp.ne.s32.totalorder %s110, %s113
    %p122 = scmp.eq.s32.totalorder %s25, 7
    %p123 = por %p121, %p122
    %p124 = scmp.ne.s32.totalorder %s113, %s114
    %p125 = scmp.eq.s32.totalorder %s25, 0
    %p126 = por %p124, %p125
    %p127 = scmp.ne.s32.totalorder %s113, %s114
    %p128 = scmp.eq.s32.totalorder %s26, 7
    %p129 = por %p127, %p128
    %p131 = scmp.ne.s32.totalorder %s114, %s130
    %p132 = scmp.eq.s32.totalorder %s26, 0
    %p133 = por %p131, %p132
    %p134 = scmp.le.s32.totalorder 1, %s20
    %p135 = scmp.lt.s32.totalorder %s20, 9
    %p136 = pnand %p134, %p135
    %p137 = pneg %p136
    // Predicated region
    $region9: #{point_triangle_distance.1} parent=5 // pred_check
      _
    $region10: #{point_triangle_distance.1} parent=5 // pred_check_branch
      %139 = sbr.rel (%p136) target = $region12
    $region11: #{point_triangle_distance.1} parent=5 // pred_region
      %s140 = ssub.s32 %s20, 1
    $region12: #{point_triangle_distance.1} parent=5 // pred_fallthru
      _
    %p141 = scmp.lt.s32.totalorder %s20, 8
    // Predicated region
    $region13: #{point_triangle_distance.1} parent=5 // pred_check
      %p142 = pneg %p141
    $region14: #{point_triangle_distance.1} parent=5 // pred_check_branch
      %144 = sbr.rel (%p142) target = $region16
    $region15: #{point_triangle_distance.1} parent=5 // pred_region
      // Predicated region
      $region17: #{point_triangle_distance.1} parent=15 // pred_check
        %p145 = pneg %p52
      $region18: #{point_triangle_distance.1} parent=15 // pred_check_branch
        %147 = sbr.rel (%p145) target = $region20
      $region19: #{point_triangle_distance.1} parent=15 // pred_region
        %s148 = smul.u32 35, %s27
        %p149 = scmp.lt.s32.totalorder %s148, 279
        %s150 = scalar_select %p149, %s148, 279
        %s151 = smul.addr %s150, 8
        %s152 = scalar_lea.vmem %s2, %s151
        %s153 = smul.u32 35, %s27
      $region20: #{point_triangle_distance.1} parent=15 // pred_fallthru
        _
      // Predicated region
      $region21: #{point_triangle_distance.1} parent=15 // pred_check
        %p154 = pneg %p94
      $region22: #{point_triangle_distance.1} parent=15 // pred_check_branch
        %156 = sbr.rel (%p154) target = $region24
      $region23: #{point_triangle_distance.1} parent=15 // pred_region
        %s157 = sld [smem:[#allocation4 + %s27]]
        %s158 = ssub.s32 %s157, 1
        %p159 = scmp.gt.s32.totalorder %s158, 0
        %s160 = scalar_select %p159, %s158, 0
        %s161 = sld [smem:[#allocation3 + %s27]]
        %p162 = scmp.lt.s32.totalorder %s28, %s160
        %s163 = scalar_select %p162, %s28, %s160
        %s164 = sadd.s32 %s161, %s163
        %s165 = smul.u32 16, %s164
        %p166 = scmp.lt.s32.totalorder %s165, 15
        %s167 = scalar_select %p166, %s165, 15
        %s168 = smul.addr %s167, 8
        %s169 = scalar_lea.vmem %s3, %s168
        %s170 = sld [smem:[#allocation4 + %s27]]
        %s171 = ssub.s32 %s170, 1
        %p172 = scmp.gt.s32.totalorder %s171, 0
        %s173 = scalar_select %p172, %s171, 0
        %s174 = sld [smem:[#allocation3 + %s27]]
        %p175 = scmp.lt.s32.totalorder %s28, %s173
        %s176 = scalar_select %p175, %s28, %s173
        %s177 = sadd.s32 %s174, %s176
        %s178 = smul.u32 16, %s177
      $region24: #{point_triangle_distance.1} parent=15 // pred_fallthru
        _
    $region16: #{point_triangle_distance.1} parent=5 // pred_fallthru
      _
    %p179 = scmp.le.s32.totalorder 1, %s20
    %p180 = scmp.lt.s32.totalorder %s20, 9
    %p181 = pnand %p179, %p180
    %p182 = pneg %p181
    // Predicated region
    $region25: #{point_triangle_distance.1} parent=5 // pred_check
      _
    $region26: #{point_triangle_distance.1} parent=5 // pred_check_branch
      %184 = sbr.rel (%p181) target = $region28
    $region27: #{point_triangle_distance.1} parent=5 // pred_region
      %s185 = ssub.s32 %s20, 1
      %s186 = smul.u32 35, %s29
      %p187 = scmp.lt.s32.totalorder %s186, 279
      %s188 = scalar_select %p187, %s186, 279
      %s189 = smul.addr %s188, 8
      %s190 = scalar_lea.vmem %s2, %s189
      %p191 = pneg %p58
      %p192 = pneg %p55
      %s193 = sld [smem:[#allocation4 + %s29]]
      %s194 = ssub.s32 %s193, 1
      %p195 = scmp.gt.s32.totalorder %s194, 0
      %s196 = scalar_select %p195, %s194, 0
      %s197 = sld [smem:[#allocation3 + %s29]]
      %p198 = scmp.lt.s32.totalorder %s30, %s196
      %s199 = scalar_select %p198, %s30, %s196
      %s200 = sadd.s32 %s197, %s199
      %s201 = smul.u32 16, %s200
      %p202 = scmp.lt.s32.totalorder %s201, 15
      %s203 = scalar_select %p202, %s201, 15
      %s204 = smul.addr %s203, 8
      %s205 = scalar_lea.vmem %s3, %s204
      %p206 = pneg %p100
      %p207 = pneg %p97
      %p208 = pneg %p126
      %p209 = pneg %p123
      %p210 = scmp.lt.s32.totalorder %s29, 7
      %s211 = scalar_select %p210, %s29, 7
      %s212 = smul.addr %s211, 8
      %s213 = scalar_lea.vmem %s4, %s212
      %s214 = smul.u32 35, %s29
      %p215 = scmp.lt.s32.totalorder %s214, 279
      %s216 = scalar_select %p215, %s214, 279
      %s217 = smul.addr %s216, 8
      %s218 = scalar_lea.vmem %s2, %s217
      %s219 = smul.u32 35, %s29
      %s220 = sld [smem:[#allocation4 + %s29]]
      %s221 = ssub.s32 %s220, 1
      %p222 = scmp.gt.s32.totalorder %s221, 0
      %s223 = scalar_select %p222, %s221, 0
      %s224 = sld [smem:[#allocation3 + %s29]]
      %p225 = scmp.lt.s32.totalorder %s30, %s223
      %s226 = scalar_select %p225, %s30, %s223
      %s227 = sadd.s32 %s224, %s226
      %s228 = smul.u32 16, %s227
      %p229 = scmp.lt.s32.totalorder %s228, 15
      %s230 = scalar_select %p229, %s228, 15
      %s231 = smul.addr %s230, 8
      %s232 = scalar_lea.vmem %s3, %s231
      %s233 = sld [smem:[#allocation4 + %s29]]
      %s234 = ssub.s32 %s233, 1
      %p235 = scmp.gt.s32.totalorder %s234, 0
      %s236 = scalar_select %p235, %s234, 0
      %s237 = sld [smem:[#allocation3 + %s29]]
      %p238 = scmp.lt.s32.totalorder %s30, %s236
      %s239 = scalar_select %p238, %s30, %s236
      %s240 = sadd.s32 %s237, %s239
      %s241 = smul.u32 16, %s240
      %p242 = scmp.lt.s32.totalorder %s29, 7
      %s243 = scalar_select %p242, %s29, 7
      %s244 = smul.addr %s243, 8
      %s245 = scalar_lea.vmem %s4, %s244
      %p246 = scmp.eq.s32.totalorder %s30, 0
      // Predicated region
      $region29: #{point_triangle_distance.1} parent=27 // pred_check
        %p247 = pneg %p246
      $region30: #{point_triangle_distance.1} parent=27 // pred_check_branch
        %249 = sbr.rel (%p247) target = $region32
      $region31: #{point_triangle_distance.1} parent=27 // pred_region
        %vm250 = vcmask 392192
        %251 = vst.msk [vmem:[%s245] sm:$0xff] %vm250, 0.0
      $region32: #{point_triangle_distance.1} parent=27 // pred_fallthru
        _
      %s252 = sld [smem:[#allocation4 + %s29]]
      %p253 = scmp.lt.s32.totalorder %s30, %s252
      // Predicated region
      $region33: #{point_triangle_distance.1} parent=27 // pred_check
        %p254 = pneg %p253
      $region34: #{point_triangle_distance.1} parent=27 // pred_check_branch
        %256 = sbr.rel (%p254) target = $region36
      $region35: #{point_triangle_distance.1} parent=27 // pred_region
        %v257 = vld [vmem:[%s218] sm:$0x1]
        %v258 = vld [vmem:[%s218 + $0x1] sm:$0x1]
        %v259 = vld [vmem:[%s218 + $0x2] sm:$0x1]
        %v260 = vld [vmem:[%s218 + $0x3] sm:$0x1]
        %v261 = vld [vmem:[%s218 + $0x4] sm:$0x1]
        %v262 = vld [vmem:[%s218 + $0x5] sm:$0x1]
        %v263 = vld [vmem:[%s218 + $0x6] sm:$0x1]
        %v264 = vld [vmem:[%s218 + $0x7] sm:$0x1]
        %v265 = vld [vmem:[%s218 + $0x8] sm:$0x1]
        %v266 = vld [vmem:[%s218 + $0x9] sm:$0x1]
        %v267 = vld [vmem:[%s218 + $0xa] sm:$0x1]
        %v268 = vld [vmem:[%s218 + $0xb] sm:$0x1]
        %v269 = vld [vmem:[%s218 + $0xc] sm:$0x1]
        %v270 = vld [vmem:[%s218 + $0xd] sm:$0x1]
        %v271 = vld [vmem:[%s218 + $0xe] sm:$0x1]
        %v272 = vld [vmem:[%s218 + $0xf] sm:$0x1]
        %v273 = vld [vmem:[%s218 + $0x10] sm:$0x1]
        %v274 = vld [vmem:[%s218 + $0x11] sm:$0x1]
        %v275 = vld [vmem:[%s218 + $0x12] sm:$0x1]
        %v276 = vld [vmem:[%s218 + $0x13] sm:$0x1]
        %v277 = vld [vmem:[%s218 + $0x14] sm:$0x1]
        %v278 = vld [vmem:[%s218 + $0x15] sm:$0x1]
        %v279 = vld [vmem:[%s218 + $0x16] sm:$0x1]
        %v280 = vld [vmem:[%s218 + $0x17] sm:$0x1]
        %v281 = vld [vmem:[%s218 + $0x18] sm:$0x1]
        %v282 = vld [vmem:[%s218 + $0x19] sm:$0x1]
        %v283 = vld [vmem:[%s218 + $0x1a] sm:$0x1]
        %v284 = vld [vmem:[%s218 + $0x1b] sm:$0x1]
        %v285 = vld [vmem:[%s218 + $0x1c] sm:$0x1]
        %v286 = vld [vmem:[%s218 + $0x1d] sm:$0x1]
        %v287 = vld [vmem:[%s218 + $0x1e] sm:$0x1]
        %v288 = vld [vmem:[%s218 + $0x1f] sm:$0x1]
        %v289 = vld [vmem:[%s218 + $0x20] sm:$0x1]
        %v290 = vld [vmem:[%s218 + $0x21] sm:$0x1]
        %v291 = vld [vmem:[%s218 + $0x22] sm:$0x1]
        %vm292 = vcmp.gt.f32.partialorder %v291, 0.5
        %s293 = smul.u32 %s29, 8
        %s294 = scvt.s32.f32 %s293
        loop: start=0, step=1, limit=16
        $region37: #{point_triangle_distance.1} parent=35 // loop_pre_header
          _
        $region38: #{point_triangle_distance.1} parent=35 // loop_header
          %s296 = sphi 0, %s300
          %p297 = scmp.ge.s32.totalorder %s296, 16
          %v301 = vphi 0.0, %v579
        $region39: #{point_triangle_distance.1} parent=35 // loop_header_branch
          %299 = sbr.rel (%p297) target = $region43
        $region40: #{point_triangle_distance.1} parent=35 // loop_body
          %s302 = smul.u32 %s296, 8
          %s303 = scalar_lea.vmem %s232, %s302
          %v304 = vld [vmem:[%s303] sm:$0xff]
          %v305 = vstv %s294
          %vm306 = vcmp.eq.f32.partialorder %v304, %v305
          %v307 = vsel %vm306, 1, 0
          %v308 = vcvt.s32.f32 %v307
          %310 = vset.pattern.permute.xlu0 0
          %311 = vperm.xlu0 %310, %v304
          %v312 = vpop.permute.xlu0 %311
          %v314 = vlaneseq
          %v315 = vshrl.u32 %v314, 7
          %v316 = vsub.s32 0, %v315
          %v317 = vrot.slane %v257, %v316
          %v318 = vsub.f32 %v312, %v317
          %319 = vset.pattern.permute.xlu0 1
          %320 = vperm.xlu0 %319, %v304
          %v321 = vpop.permute.xlu0 %320
          %v323 = vlaneseq
          %v324 = vshrl.u32 %v323, 7
          %v325 = vsub.s32 0, %v324
          %v326 = vrot.slane %v258, %v325
          %v327 = vsub.f32 %v321, %v326
          %328 = vset.pattern.permute.xlu0 2
          %329 = vperm.xlu0 %328, %v304
          %v330 = vpop.permute.xlu0 %329
          %v332 = vlaneseq
          %v333 = vshrl.u32 %v332, 7
          %v334 = vsub.s32 0, %v333
          %v335 = vrot.slane %v259, %v334
          %v336 = vsub.f32 %v330, %v335
          %v337 = vlaneseq
          %v338 = vshrl.u32 %v337, 7
          %v339 = vsub.s32 0, %v338
          %v340 = vrot.slane %v260, %v339
          %v341 = vsub.f32 %v312, %v340
          %v342 = vlaneseq
          %v343 = vshrl.u32 %v342, 7
          %v344 = vsub.s32 0, %v343
          %v345 = vrot.slane %v261, %v344
          %v346 = vsub.f32 %v321, %v345
          %v347 = vlaneseq
          %v348 = vshrl.u32 %v347, 7
          %v349 = vsub.s32 0, %v348
          %v350 = vrot.slane %v262, %v349
          %v351 = vsub.f32 %v330, %v350
          %v352 = vlaneseq
          %v353 = vshrl.u32 %v352, 7
          %v354 = vsub.s32 0, %v353
          %v355 = vrot.slane %v263, %v354
          %v356 = vsub.f32 %v312, %v355
          %v357 = vlaneseq
          %v358 = vshrl.u32 %v357, 7
          %v359 = vsub.s32 0, %v358
          %v360 = vrot.slane %v264, %v359
          %v361 = vsub.f32 %v321, %v360
          %v362 = vlaneseq
          %v363 = vshrl.u32 %v362, 7
          %v364 = vsub.s32 0, %v363
          %v365 = vrot.slane %v265, %v364
          %v366 = vsub.f32 %v330, %v365
          %v367 = vlaneseq
          %v368 = vshrl.u32 %v367, 7
          %v369 = vsub.s32 0, %v368
          %v370 = vrot.slane %v266, %v369
          %v371 = vmul.f32 %v318, %v370
          %v372 = vlaneseq
          %v373 = vshrl.u32 %v372, 7
          %v374 = vsub.s32 0, %v373
          %v375 = vrot.slane %v267, %v374
          %v376 = vmul.f32 %v327, %v375
          %v377 = vadd.f32 %v371, %v376
          %v378 = vlaneseq
          %v379 = vshrl.u32 %v378, 7
          %v380 = vsub.s32 0, %v379
          %v381 = vrot.slane %v268, %v380
          %v382 = vmul.f32 %v336, %v381
          %v383 = vadd.f32 %v377, %v382
          %v384 = vmul.f32 %v383, %v383
          %v385 = vlaneseq
          %v386 = vshrl.u32 %v385, 7
          %v387 = vsub.s32 0, %v386
          %v388 = vrot.slane %v269, %v387
          %v389 = vmul.f32 %v384, %v388
          %v390 = vlaneseq
          %v391 = vshrl.u32 %v390, 7
          %v392 = vsub.s32 0, %v391
          %v393 = vrot.slane %v270, %v392
          %v394 = vmul.f32 %v318, %v393
          %v395 = vlaneseq
          %v396 = vshrl.u32 %v395, 7
          %v397 = vsub.s32 0, %v396
          %v398 = vrot.slane %v271, %v397
          %v399 = vmul.f32 %v327, %v398
          %v400 = vadd.f32 %v394, %v399
          %v401 = vlaneseq
          %v402 = vshrl.u32 %v401, 7
          %v403 = vsub.s32 0, %v402
          %v404 = vrot.slane %v272, %v403
          %v405 = vmul.f32 %v336, %v404
          %v406 = vadd.f32 %v400, %v405
          %v407 = vlaneseq
          %v408 = vshrl.u32 %v407, 7
          %v409 = vsub.s32 0, %v408
          %v410 = vrot.slane %v273, %v409
          %v411 = vmul.f32 %v341, %v410
          %v412 = vlaneseq
          %v413 = vshrl.u32 %v412, 7
          %v414 = vsub.s32 0, %v413
          %v415 = vrot.slane %v274, %v414
          %v416 = vmul.f32 %v346, %v415
          %v417 = vadd.f32 %v411, %v416
          %v418 = vlaneseq
          %v419 = vshrl.u32 %v418, 7
          %v420 = vsub.s32 0, %v419
          %v421 = vrot.slane %v275, %v420
          %v422 = vmul.f32 %v351, %v421
          %v423 = vadd.f32 %v417, %v422
          %v424 = vlaneseq
          %v425 = vshrl.u32 %v424, 7
          %v426 = vsub.s32 0, %v425
          %v427 = vrot.slane %v276, %v426
          %v428 = vmul.f32 %v356, %v427
          %v429 = vlaneseq
          %v430 = vshrl.u32 %v429, 7
          %v431 = vsub.s32 0, %v430
          %v432 = vrot.slane %v277, %v431
          %v433 = vmul.f32 %v361, %v432
          %v434 = vadd.f32 %v428, %v433
          %v435 = vlaneseq
          %v436 = vshrl.u32 %v435, 7
          %v437 = vsub.s32 0, %v436
          %v438 = vrot.slane %v278, %v437
          %v439 = vmul.f32 %v366, %v438
          %v440 = vadd.f32 %v434, %v439
          %vm441 = vcmp.ge.f32.partialorder %v406, 0.0
          %vm442 = vcmp.ge.f32.partialorder %v423, 0.0
          %vm443 = vmand %vm441, %vm442
          %vm444 = vcmp.ge.f32.partialorder %v440, 0.0
          %vm445 = vmand %vm443, %vm444
          %v446 = vsel %vm292, 1, 0
          %v447 = vlaneseq
          %v448 = vshrl.u32 %v447, 7
          %v449 = vsub.s32 0, %v448
          %v450 = vrot.slane %v446, %v449
          %vm451 = vcmp.eq.s32.totalorder %v450, 1
          %vm452 = vmand %vm445, %vm451
          %v453 = vlaneseq
          %v454 = vshrl.u32 %v453, 7
          %v455 = vsub.s32 0, %v454
          %v456 = vrot.slane %v279, %v455
          %v457 = vmul.f32 %v318, %v456
          %v458 = vlaneseq
          %v459 = vshrl.u32 %v458, 7
          %v460 = vsub.s32 0, %v459
          %v461 = vrot.slane %v280, %v460
          %v462 = vmul.f32 %v327, %v461
          %v463 = vadd.f32 %v457, %v462
          %v464 = vlaneseq
          %v465 = vshrl.u32 %v464, 7
          %v466 = vsub.s32 0, %v465
          %v467 = vrot.slane %v281, %v466
          %v468 = vmul.f32 %v336, %v467
          %v469 = vadd.f32 %v463, %v468
          %v470 = vlaneseq
          %v471 = vshrl.u32 %v470, 7
          %v472 = vsub.s32 0, %v471
          %v473 = vrot.slane %v288, %v472
          %v474 = vmul.f32 %v469, %v473
          %v475 = vmax.f32 %v474, 0.0
          %v476 = vmin.f32 %v475, 1.0
          %v477 = vmul.f32 %v476, %v456
          %v478 = vsub.f32 %v318, %v477
          %v479 = vmul.f32 %v476, %v461
          %v480 = vsub.f32 %v327, %v479
          %v481 = vmul.f32 %v476, %v467
          %v482 = vsub.f32 %v336, %v481
          %v483 = vmul.f32 %v478, %v478
          %v484 = vmul.f32 %v480, %v480
          %v485 = vadd.f32 %v483, %v484
          %v486 = vmul.f32 %v482, %v482
          %v487 = vadd.f32 %v485, %v486
          %v488 = vlaneseq
          %v489 = vshrl.u32 %v488, 7
          %v490 = vsub.s32 0, %v489
          %v491 = vrot.slane %v282, %v490
          %v492 = vmul.f32 %v341, %v491
          %v493 = vlaneseq
          %v494 = vshrl.u32 %v493, 7
          %v495 = vsub.s32 0, %v494
          %v496 = vrot.slane %v283, %v495
          %v497 = vmul.f32 %v346, %v496
          %v498 = vadd.f32 %v492, %v497
          %v499 = vlaneseq
          %v500 = vshrl.u32 %v499, 7
          %v501 = vsub.s32 0, %v500
          %v502 = vrot.slane %v284, %v501
          %v503 = vmul.f32 %v351, %v502
          %v504 = vadd.f32 %v498, %v503
          %v505 = vlaneseq
          %v506 = vshrl.u32 %v505, 7
          %v507 = vsub.s32 0, %v506
          %v508 = vrot.slane %v289, %v507
          %v509 = vmul.f32 %v504, %v508
          %v510 = vmax.f32 %v509, 0.0
          %v511 = vmin.f32 %v510, 1.0
          %v512 = vmul.f32 %v511, %v491
          %v513 = vsub.f32 %v341, %v512
          %v514 = vmul.f32 %v511, %v496
          %v515 = vsub.f32 %v346, %v514
          %v516 = vmul.f32 %v511, %v502
          %v517 = vsub.f32 %v351, %v516
          %v518 = vmul.f32 %v513, %v513
          %v519 = vmul.f32 %v515, %v515
          %v520 = vadd.f32 %v518, %v519
          %v521 = vmul.f32 %v517, %v517
          %v522 = vadd.f32 %v520, %v521
          %v523 = vlaneseq
          %v524 = vshrl.u32 %v523, 7
          %v525 = vsub.s32 0, %v524
          %v526 = vrot.slane %v285, %v525
          %v527 = vmul.f32 %v356, %v526
          %v528 = vlaneseq
          %v529 = vshrl.u32 %v528, 7
          %v530 = vsub.s32 0, %v529
          %v531 = vrot.slane %v286, %v530
          %v532 = vmul.f32 %v361, %v531
          %v533 = vadd.f32 %v527, %v532
          %v534 = vlaneseq
          %v535 = vshrl.u32 %v534, 7
          %v536 = vsub.s32 0, %v535
          %v537 = vrot.slane %v287, %v536
          %v538 = vmul.f32 %v366, %v537
          %v539 = vadd.f32 %v533, %v538
          %v540 = vlaneseq
          %v541 = vshrl.u32 %v540, 7
          %v542 = vsub.s32 0, %v541
          %v543 = vrot.slane %v290, %v542
          %v544 = vmul.f32 %v539, %v543
          %v545 = vmax.f32 %v544, 0.0
          %v546 = vmin.f32 %v545, 1.0
          %v547 = vmul.f32 %v546, %v526
          %v548 = vsub.f32 %v356, %v547
          %v549 = vmul.f32 %v546, %v531
          %v550 = vsub.f32 %v361, %v549
          %v551 = vmul.f32 %v546, %v537
          %v552 = vsub.f32 %v366, %v551
          %v553 = vmul.f32 %v548, %v548
          %v554 = vmul.f32 %v550, %v550
          %v555 = vadd.f32 %v553, %v554
          %v556 = vmul.f32 %v552, %v552
          %v557 = vadd.f32 %v555, %v556
          %v558 = vmin.f32 %v522, %v557
          %v559 = vmin.f32 %v487, %v558
          %v560 = vsel %vm452, %v389, %v559
          %562 = vrot.lane.b32.xlu0 %v560, 80
          %v563 = vpop.permute.xlu0 %562
          %v565 = vmin.f32 %v560, %v563
          %v566 = vrsqrt.pop %v565
          %v567 = vmul.f32 %v565, %v566
          %vm568 = vcmp.eq.f32.partialorder %v565, inf
          %v569 = vsel %vm568, %v565, %v567
          %vm570 = vcmp.eq.f32.partialorder %v565, 0.0
          %v571 = vand.u32 %v565, 2147483648
          %v572 = vsel %vm570, %v571, %v569
          %574 = vset.pattern.permute.xlu0 3
          %575 = vperm.xlu0 %574, %v308
          %v576 = vpop.permute.xlu0 %575
          %v578 = vmul.f32 %v572, %v576
          %v579 = vadd.f32 %v301, %v578
        $region41: #{point_triangle_distance.1} parent=35 // loop_footer
          %s300 = sadd.s32 1, %s296
        $region42: #{point_triangle_distance.1} parent=35 // loop_footer_branch
          %295 = sbr.rel target = $region38
        $region43: #{point_triangle_distance.1} parent=35 // loop_exit
          _
        %v580 = vld [vmem:[%s245] sm:$0x1]
        %vm581 = vcmask 392192
        %v582 = vsel %vm581, %v301, 0.0
        %v583 = vrot.slane %v582, 4
        %v584 = vadd.f32 %v582, %v583
        %v585 = vrot.slane %v584, 2
        %v586 = vadd.f32 %v584, %v585
        %v587 = vrot.slane %v586, 1
        %v588 = vadd.f32 %v586, %v587
        %v589 = vadd.f32 %v580, %v588
        %vm590 = vcmask 385024
        %591 = vst.msk [vmem:[%s245] sm:$0x1] %vm590, %v589
        %v592 = vld [vmem:[%s218 + $0x23] sm:$0x1]
        %v593 = vld [vmem:[%s218 + $0x24] sm:$0x1]
        %v594 = vld [vmem:[%s218 + $0x25] sm:$0x1]
        %v595 = vld [vmem:[%s218 + $0x26] sm:$0x1]
        %v596 = vld [vmem:[%s218 + $0x27] sm:$0x1]
        %v597 = vld [vmem:[%s218 + $0x28] sm:$0x1]
        %v598 = vld [vmem:[%s218 + $0x29] sm:$0x1]
        %v599 = vld [vmem:[%s218 + $0x2a] sm:$0x1]
        %v600 = vld [vmem:[%s218 + $0x2b] sm:$0x1]
        %v601 = vld [vmem:[%s218 + $0x2c] sm:$0x1]
        %v602 = vld [vmem:[%s218 + $0x2d] sm:$0x1]
        %v603 = vld [vmem:[%s218 + $0x2e] sm:$0x1]
        %v604 = vld [vmem:[%s218 + $0x2f] sm:$0x1]
        %v605 = vld [vmem:[%s218 + $0x30] sm:$0x1]
        %v606 = vld [vmem:[%s218 + $0x31] sm:$0x1]
        %v607 = vld [vmem:[%s218 + $0x32] sm:$0x1]
        %v608 = vld [vmem:[%s218 + $0x33] sm:$0x1]
        %v609 = vld [vmem:[%s218 + $0x34] sm:$0x1]
        %v610 = vld [vmem:[%s218 + $0x35] sm:$0x1]
        %v611 = vld [vmem:[%s218 + $0x36] sm:$0x1]
        %v612 = vld [vmem:[%s218 + $0x37] sm:$0x1]
        %v613 = vld [vmem:[%s218 + $0x38] sm:$0x1]
        %v614 = vld [vmem:[%s218 + $0x39] sm:$0x1]
        %v615 = vld [vmem:[%s218 + $0x3a] sm:$0x1]
        %v616 = vld [vmem:[%s218 + $0x3b] sm:$0x1]
        %v617 = vld [vmem:[%s218 + $0x3c] sm:$0x1]
        %v618 = vld [vmem:[%s218 + $0x3d] sm:$0x1]
        %v619 = vld [vmem:[%s218 + $0x3e] sm:$0x1]
        %v620 = vld [vmem:[%s218 + $0x3f] sm:$0x1]
        %v621 = vld [vmem:[%s218 + $0x40] sm:$0x1]
        %v622 = vld [vmem:[%s218 + $0x41] sm:$0x1]
        %v623 = vld [vmem:[%s218 + $0x42] sm:$0x1]
        %v624 = vld [vmem:[%s218 + $0x43] sm:$0x1]
        %v625 = vld [vmem:[%s218 + $0x44] sm:$0x1]
        %v626 = vld [vmem:[%s218 + $0x45] sm:$0x1]
        %vm627 = vcmp.gt.f32.partialorder %v626, 0.5
        %s628 = sadd.s32 %s293, 1
        %s629 = scvt.s32.f32 %s628
        loop: start=0, step=1, limit=16
        $region44: #{point_triangle_distance.1} parent=35 // loop_pre_header
          _
        $region45: #{point_triangle_distance.1} parent=35 // loop_header
          %s631 = sphi 0, %s635
          %p632 = scmp.ge.s32.totalorder %s631, 16
          %v636 = vphi 0.0, %v914
        $region46: #{point_triangle_distance.1} parent=35 // loop_header_branch
          %634 = sbr.rel (%p632) target = $region50
        $region47: #{point_triangle_distance.1} parent=35 // loop_body
          %s637 = smul.u32 %s631, 8
          %s638 = scalar_lea.vmem %s232, %s637
          %v639 = vld [vmem:[%s638] sm:$0xff]
          %v640 = vstv %s629
          %vm641 = vcmp.eq.f32.partialorder %v639, %v640
          %v642 = vsel %vm641, 1, 0
          %v643 = vcvt.s32.f32 %v642
          %645 = vset.pattern.permute.xlu0 0
          %646 = vperm.xlu0 %645, %v639
          %v647 = vpop.permute.xlu0 %646
          %v649 = vlaneseq
          %v650 = vshrl.u32 %v649, 7
          %v651 = vsub.s32 0, %v650
          %v652 = vrot.slane %v592, %v651
          %v653 = vsub.f32 %v647, %v652
          %654 = vset.pattern.permute.xlu0 1
          %655 = vperm.xlu0 %654, %v639
          %v656 = vpop.permute.xlu0 %655
          %v658 = vlaneseq
          %v659 = vshrl.u32 %v658, 7
          %v660 = vsub.s32 0, %v659
          %v661 = vrot.slane %v593, %v660
          %v662 = vsub.f32 %v656, %v661
          %663 = vset.pattern.permute.xlu0 2
          %664 = vperm.xlu0 %663, %v639
          %v665 = vpop.permute.xlu0 %664
          %v667 = vlaneseq
          %v668 = vshrl.u32 %v667, 7
          %v669 = vsub.s32 0, %v668
          %v670 = vrot.slane %v594, %v669
          %v671 = vsub.f32 %v665, %v670
          %v672 = vlaneseq
          %v673 = vshrl.u32 %v672, 7
          %v674 = vsub.s32 0, %v673
          %v675 = vrot.slane %v595, %v674
          %v676 = vsub.f32 %v647, %v675
          %v677 = vlaneseq
          %v678 = vshrl.u32 %v677, 7
          %v679 = vsub.s32 0, %v678
          %v680 = vrot.slane %v596, %v679
          %v681 = vsub.f32 %v656, %v680
          %v682 = vlaneseq
          %v683 = vshrl.u32 %v682, 7
          %v684 = vsub.s32 0, %v683
          %v685 = vrot.slane %v597, %v684
          %v686 = vsub.f32 %v665, %v685
          %v687 = vlaneseq
          %v688 = vshrl.u32 %v687, 7
          %v689 = vsub.s32 0, %v688
          %v690 = vrot.slane %v598, %v689
          %v691 = vsub.f32 %v647, %v690
          %v692 = vlaneseq
          %v693 = vshrl.u32 %v692, 7
          %v694 = vsub.s32 0, %v693
          %v695 = vrot.slane %v599, %v694
          %v696 = vsub.f32 %v656, %v695
          %v697 = vlaneseq
          %v698 = vshrl.u32 %v697, 7
          %v699 = vsub.s32 0, %v698
          %v700 = vrot.slane %v600, %v699
          %v701 = vsub.f32 %v665, %v700
          %v702 = vlaneseq
          %v703 = vshrl.u32 %v702, 7
          %v704 = vsub.s32 0, %v703
          %v705 = vrot.slane %v601, %v704
          %v706 = vmul.f32 %v653, %v705
          %v707 = vlaneseq
          %v708 = vshrl.u32 %v707, 7
          %v709 = vsub.s32 0, %v708
          %v710 = vrot.slane %v602, %v709
          %v711 = vmul.f32 %v662, %v710
          %v712 = vadd.f32 %v706, %v711
          %v713 = vlaneseq
          %v714 = vshrl.u32 %v713, 7
          %v715 = vsub.s32 0, %v714
          %v716 = vrot.slane %v603, %v715
          %v717 = vmul.f32 %v671, %v716
          %v718 = vadd.f32 %v712, %v717
          %v719 = vmul.f32 %v718, %v718
          %v720 = vlaneseq
          %v721 = vshrl.u32 %v720, 7
          %v722 = vsub.s32 0, %v721
          %v723 = vrot.slane %v604, %v722
          %v724 = vmul.f32 %v719, %v723
          %v725 = vlaneseq
          %v726 = vshrl.u32 %v725, 7
          %v727 = vsub.s32 0, %v726
          %v728 = vrot.slane %v605, %v727
          %v729 = vmul.f32 %v653, %v728
          %v730 = vlaneseq
          %v731 = vshrl.u32 %v730, 7
          %v732 = vsub.s32 0, %v731
          %v733 = vrot.slane %v606, %v732
          %v734 = vmul.f32 %v662, %v733
          %v735 = vadd.f32 %v729, %v734
          %v736 = vlaneseq
          %v737 = vshrl.u32 %v736, 7
          %v738 = vsub.s32 0, %v737
          %v739 = vrot.slane %v607, %v738
          %v740 = vmul.f32 %v671, %v739
          %v741 = vadd.f32 %v735, %v740
          %v742 = vlaneseq
          %v743 = vshrl.u32 %v742, 7
          %v744 = vsub.s32 0, %v743
          %v745 = vrot.slane %v608, %v744
          %v746 = vmul.f32 %v676, %v745
          %v747 = vlaneseq
          %v748 = vshrl.u32 %v747, 7
          %v749 = vsub.s32 0, %v748
          %v750 = vrot.slane %v609, %v749
          %v751 = vmul.f32 %v681, %v750
          %v752 = vadd.f32 %v746, %v751
          %v753 = vlaneseq
          %v754 = vshrl.u32 %v753, 7
          %v755 = vsub.s32 0, %v754
          %v756 = vrot.slane %v610, %v755
          %v757 = vmul.f32 %v686, %v756
          %v758 = vadd.f32 %v752, %v757
          %v759 = vlaneseq
          %v760 = vshrl.u32 %v759, 7
          %v761 = vsub.s32 0, %v760
          %v762 = vrot.slane %v611, %v761
          %v763 = vmul.f32 %v691, %v762
          %v764 = vlaneseq
          %v765 = vshrl.u32 %v764, 7
          %v766 = vsub.s32 0, %v765
          %v767 = vrot.slane %v612, %v766
          %v768 = vmul.f32 %v696, %v767
          %v769 = vadd.f32 %v763, %v768
          %v770 = vlaneseq
          %v771 = vshrl.u32 %v770, 7
          %v772 = vsub.s32 0, %v771
          %v773 = vrot.slane %v613, %v772
          %v774 = vmul.f32 %v701, %v773
          %v775 = vadd.f32 %v769, %v774
          %vm776 = vcmp.ge.f32.partialorder %v741, 0.0
          %vm777 = vcmp.ge.f32.partialorder %v758, 0.0
          %vm778 = vmand %vm776, %vm777
          %vm779 = vcmp.ge.f32.partialorder %v775, 0.0
          %vm780 = vmand %vm778, %vm779
          %v781 = vsel %vm627, 1, 0
          %v782 = vlaneseq
          %v783 = vshrl.u32 %v782, 7
          %v784 = vsub.s32 0, %v783
          %v785 = vrot.slane %v781, %v784
          %vm786 = vcmp.eq.s32.totalorder %v785, 1
          %vm787 = vmand %vm780, %vm786
          %v788 = vlaneseq
          %v789 = vshrl.u32 %v788, 7
          %v790 = vsub.s32 0, %v789
          %v791 = vrot.slane %v614, %v790
          %v792 = vmul.f32 %v653, %v791
          %v793 = vlaneseq
          %v794 = vshrl.u32 %v793, 7
          %v795 = vsub.s32 0, %v794
          %v796 = vrot.slane %v615, %v795
          %v797 = vmul.f32 %v662, %v796
          %v798 = vadd.f32 %v792, %v797
          %v799 = vlaneseq
          %v800 = vshrl.u32 %v799, 7
          %v801 = vsub.s32 0, %v800
          %v802 = vrot.slane %v616, %v801
          %v803 = vmul.f32 %v671, %v802
          %v804 = vadd.f32 %v798, %v803
          %v805 = vlaneseq
          %v806 = vshrl.u32 %v805, 7
          %v807 = vsub.s32 0, %v806
          %v808 = vrot.slane %v623, %v807
          %v809 = vmul.f32 %v804, %v808
          %v810 = vmax.f32 %v809, 0.0
          %v811 = vmin.f32 %v810, 1.0
          %v812 = vmul.f32 %v811, %v791
          %v813 = vsub.f32 %v653, %v812
          %v814 = vmul.f32 %v811, %v796
          %v815 = vsub.f32 %v662, %v814
          %v816 = vmul.f32 %v811, %v802
          %v817 = vsub.f32 %v671, %v816
          %v818 = vmul.f32 %v813, %v813
          %v819 = vmul.f32 %v815, %v815
          %v820 = vadd.f32 %v818, %v819
          %v821 = vmul.f32 %v817, %v817
          %v822 = vadd.f32 %v820, %v821
          %v823 = vlaneseq
          %v824 = vshrl.u32 %v823, 7
          %v825 = vsub.s32 0, %v824
          %v826 = vrot.slane %v617, %v825
          %v827 = vmul.f32 %v676, %v826
          %v828 = vlaneseq
          %v829 = vshrl.u32 %v828, 7
          %v830 = vsub.s32 0, %v829
          %v831 = vrot.slane %v618, %v830
          %v832 = vmul.f32 %v681, %v831
          %v833 = vadd.f32 %v827, %v832
          %v834 = vlaneseq
          %v835 = vshrl.u32 %v834, 7
          %v836 = vsub.s32 0, %v835
          %v837 = vrot.slane %v619, %v836
          %v838 = vmul.f32 %v686, %v837
          %v839 = vadd.f32 %v833, %v838
          %v840 = vlaneseq
          %v841 = vshrl.u32 %v840, 7
          %v842 = vsub.s32 0, %v841
          %v843 = vrot.slane %v624, %v842
          %v844 = vmul.f32 %v839, %v843
          %v845 = vmax.f32 %v844, 0.0
          %v846 = vmin.f32 %v845, 1.0
          %v847 = vmul.f32 %v846, %v826
          %v848 = vsub.f32 %v676, %v847
          %v849 = vmul.f32 %v846, %v831
          %v850 = vsub.f32 %v681, %v849
          %v851 = vmul.f32 %v846, %v837
          %v852 = vsub.f32 %v686, %v851
          %v853 = vmul.f32 %v848, %v848
          %v854 = vmul.f32 %v850, %v850
          %v855 = vadd.f32 %v853, %v854
          %v856 = vmul.f32 %v852, %v852
          %v857 = vadd.f32 %v855, %v856
          %v858 = vlaneseq
          %v859 = vshrl.u32 %v858, 7
          %v860 = vsub.s32 0, %v859
          %v861 = vrot.slane %v620, %v860
          %v862 = vmul.f32 %v691, %v861
          %v863 = vlaneseq
          %v864 = vshrl.u32 %v863, 7
          %v865 = vsub.s32 0, %v864
          %v866 = vrot.slane %v621, %v865
          %v867 = vmul.f32 %v696, %v866
          %v868 = vadd.f32 %v862, %v867
          %v869 = vlaneseq
          %v870 = vshrl.u32 %v869, 7
          %v871 = vsub.s32 0, %v870
          %v872 = vrot.slane %v622, %v871
          %v873 = vmul.f32 %v701, %v872
          %v874 = vadd.f32 %v868, %v873
          %v875 = vlaneseq
          %v876 = vshrl.u32 %v875, 7
          %v877 = vsub.s32 0, %v876
          %v878 = vrot.slane %v625, %v877
          %v879 = vmul.f32 %v874, %v878
          %v880 = vmax.f32 %v879, 0.0
          %v881 = vmin.f32 %v880, 1.0
          %v882 = vmul.f32 %v881, %v861
          %v883 = vsub.f32 %v691, %v882
          %v884 = vmul.f32 %v881, %v866
          %v885 = vsub.f32 %v696, %v884
          %v886 = vmul.f32 %v881, %v872
          %v887 = vsub.f32 %v701, %v886
          %v888 = vmul.f32 %v883, %v883
          %v889 = vmul.f32 %v885, %v885
          %v890 = vadd.f32 %v888, %v889
          %v891 = vmul.f32 %v887, %v887
          %v892 = vadd.f32 %v890, %v891
          %v893 = vmin.f32 %v857, %v892
          %v894 = vmin.f32 %v822, %v893
          %v895 = vsel %vm787, %v724, %v894
          %897 = vrot.lane.b32.xlu0 %v895, 80
          %v898 = vpop.permute.xlu0 %897
          %v900 = vmin.f32 %v895, %v898
          %v901 = vrsqrt.pop %v900
          %v902 = vmul.f32 %v900, %v901
          %vm903 = vcmp.eq.f32.partialorder %v900, inf
          %v904 = vsel %vm903, %v900, %v902
          %vm905 = vcmp.eq.f32.partialorder %v900, 0.0
          %v906 = vand.u32 %v900, 2147483648
          %v907 = vsel %vm905, %v906, %v904
          %909 = vset.pattern.permute.xlu0 3
          %910 = vperm.xlu0 %909, %v643
          %v911 = vpop.permute.xlu0 %910
          %v913 = vmul.f32 %v907, %v911
          %v914 = vadd.f32 %v636, %v913
        $region48: #{point_triangle_distance.1} parent=35 // loop_footer
          %s635 = sadd.s32 1, %s631
        $region49: #{point_triangle_distance.1} parent=35 // loop_footer_branch
          %630 = sbr.rel target = $region45
        $region50: #{point_triangle_distance.1} parent=35 // loop_exit
          _
        %v915 = vld [vmem:[%s245 + $0x1] sm:$0x1]
        %v916 = vsel %vm581, %v636, 0.0
        %v917 = vrot.slane %v916, 4
        %v918 = vadd.f32 %v916, %v917
        %v919 = vrot.slane %v918, 2
        %v920 = vadd.f32 %v918, %v919
        %v921 = vrot.slane %v920, 1
        %v922 = vadd.f32 %v920, %v921
        %v923 = vadd.f32 %v915, %v922
        %924 = vst.msk [vmem:[%s245 + $0x1] sm:$0x1] %vm590, %v923
        %v925 = vld [vmem:[%s218 + $0x46] sm:$0x1]
        %v926 = vld [vmem:[%s218 + $0x47] sm:$0x1]
        %v927 = vld [vmem:[%s218 + $0x48] sm:$0x1]
        %v928 = vld [vmem:[%s218 + $0x49] sm:$0x1]
        %v929 = vld [vmem:[%s218 + $0x4a] sm:$0x1]
        %v930 = vld [vmem:[%s218 + $0x4b] sm:$0x1]
        %v931 = vld [vmem:[%s218 + $0x4c] sm:$0x1]
        %v932 = vld [vmem:[%s218 + $0x4d] sm:$0x1]
        %v933 = vld [vmem:[%s218 + $0x4e] sm:$0x1]
        %v934 = vld [vmem:[%s218 + $0x4f] sm:$0x1]
        %v935 = vld [vmem:[%s218 + $0x50] sm:$0x1]
        %v936 = vld [vmem:[%s218 + $0x51] sm:$0x1]
        %v937 = vld [vmem:[%s218 + $0x52] sm:$0x1]
        %v938 = vld [vmem:[%s218 + $0x53] sm:$0x1]
        %v939 = vld [vmem:[%s218 + $0x54] sm:$0x1]
        %v940 = vld [vmem:[%s218 + $0x55] sm:$0x1]
        %v941 = vld [vmem:[%s218 + $0x56] sm:$0x1]
        %v942 = vld [vmem:[%s218 + $0x57] sm:$0x1]
        %v943 = vld [vmem:[%s218 + $0x58] sm:$0x1]
        %v944 = vld [vmem:[%s218 + $0x59] sm:$0x1]
        %v945 = vld [vmem:[%s218 + $0x5a] sm:$0x1]
        %v946 = vld [vmem:[%s218 + $0x5b] sm:$0x1]
        %v947 = vld [vmem:[%s218 + $0x5c] sm:$0x1]
        %v948 = vld [vmem:[%s218 + $0x5d] sm:$0x1]
        %v949 = vld [vmem:[%s218 + $0x5e] sm:$0x1]
        %v950 = vld [vmem:[%s218 + $0x5f] sm:$0x1]
        %v951 = vld [vmem:[%s218 + $0x60] sm:$0x1]
        %v952 = vld [vmem:[%s218 + $0x61] sm:$0x1]
        %v953 = vld [vmem:[%s218 + $0x62] sm:$0x1]
        %v954 = vld [vmem:[%s218 + $0x63] sm:$0x1]
        %v955 = vld [vmem:[%s218 + $0x64] sm:$0x1]
        %v956 = vld [vmem:[%s218 + $0x65] sm:$0x1]
        %v957 = vld [vmem:[%s218 + $0x66] sm:$0x1]
        %v958 = vld [vmem:[%s218 + $0x67] sm:$0x1]
        %v959 = vld [vmem:[%s218 + $0x68] sm:$0x1]
        %vm960 = vcmp.gt.f32.partialorder %v959, 0.5
        %s961 = sadd.s32 %s293, 2
        %s962 = scvt.s32.f32 %s961
        loop: start=0, step=1, limit=16
        $region51: #{point_triangle_distance.1} parent=35 // loop_pre_header
          _
        $region52: #{point_triangle_distance.1} parent=35 // loop_header
          %s964 = sphi 0, %s968
          %p965 = scmp.ge.s32.totalorder %s964, 16
          %v969 = vphi 0.0, %v1247
        $region53: #{point_triangle_distance.1} parent=35 // loop_header_branch
          %967 = sbr.rel (%p965) target = $region57
        $region54: #{point_triangle_distance.1} parent=35 // loop_body
          %s970 = smul.u32 %s964, 8
          %s971 = scalar_lea.vmem %s232, %s970
          %v972 = vld [vmem:[%s971] sm:$0xff]
          %v973 = vstv %s962
          %vm974 = vcmp.eq.f32.partialorder %v972, %v973
          %v975 = vsel %vm974, 1, 0
          %v976 = vcvt.s32.f32 %v975
          %978 = vset.pattern.permute.xlu0 0
          %979 = vperm.xlu0 %978, %v972
          %v980 = vpop.permute.xlu0 %979
          %v982 = vlaneseq
          %v983 = vshrl.u32 %v982, 7
          %v984 = vsub.s32 0, %v983
          %v985 = vrot.slane %v925, %v984
          %v986 = vsub.f32 %v980, %v985
          %987 = vset.pattern.permute.xlu0 1
          %988 = vperm.xlu0 %987, %v972
          %v989 = vpop.permute.xlu0 %988
          %v991 = vlaneseq
          %v992 = vshrl.u32 %v991, 7
          %v993 = vsub.s32 0, %v992
          %v994 = vrot.slane %v926, %v993
          %v995 = vsub.f32 %v989, %v994
          %996 = vset.pattern.permute.xlu0 2
          %997 = vperm.xlu0 %996, %v972
          %v998 = vpop.permute.xlu0 %997
          %v1000 = vlaneseq
          %v1001 = vshrl.u32 %v1000, 7
          %v1002 = vsub.s32 0, %v1001
          %v1003 = vrot.slane %v927, %v1002
          %v1004 = vsub.f32 %v998, %v1003
          %v1005 = vlaneseq
          %v1006 = vshrl.u32 %v1005, 7
          %v1007 = vsub.s32 0, %v1006
          %v1008 = vrot.slane %v928, %v1007
          %v1009 = vsub.f32 %v980, %v1008
          %v1010 = vlaneseq
          %v1011 = vshrl.u32 %v1010, 7
          %v1012 = vsub.s32 0, %v1011
          %v1013 = vrot.slane %v929, %v1012
          %v1014 = vsub.f32 %v989, %v1013
          %v1015 = vlaneseq
          %v1016 = vshrl.u32 %v1015, 7
          %v1017 = vsub.s32 0, %v1016
          %v1018 = vrot.slane %v930, %v1017
          %v1019 = vsub.f32 %v998, %v1018
          %v1020 = vlaneseq
          %v1021 = vshrl.u32 %v1020, 7
          %v1022 = vsub.s32 0, %v1021
          %v1023 = vrot.slane %v931, %v1022
          %v1024 = vsub.f32 %v980, %v1023
          %v1025 = vlaneseq
          %v1026 = vshrl.u32 %v1025, 7
          %v1027 = vsub.s32 0, %v1026
          %v1028 = vrot.slane %v932, %v1027
          %v1029 = vsub.f32 %v989, %v1028
          %v1030 = vlaneseq
          %v1031 = vshrl.u32 %v1030, 7
          %v1032 = vsub.s32 0, %v1031
          %v1033 = vrot.slane %v933, %v1032
          %v1034 = vsub.f32 %v998, %v1033
          %v1035 = vlaneseq
          %v1036 = vshrl.u32 %v1035, 7
          %v1037 = vsub.s32 0, %v1036
          %v1038 = vrot.slane %v934, %v1037
          %v1039 = vmul.f32 %v986, %v1038
          %v1040 = vlaneseq
          %v1041 = vshrl.u32 %v1040, 7
          %v1042 = vsub.s32 0, %v1041
          %v1043 = vrot.slane %v935, %v1042
          %v1044 = vmul.f32 %v995, %v1043
          %v1045 = vadd.f32 %v1039, %v1044
          %v1046 = vlaneseq
          %v1047 = vshrl.u32 %v1046, 7
          %v1048 = vsub.s32 0, %v1047
          %v1049 = vrot.slane %v936, %v1048
          %v1050 = vmul.f32 %v1004, %v1049
          %v1051 = vadd.f32 %v1045, %v1050
          %v1052 = vmul.f32 %v1051, %v1051
          %v1053 = vlaneseq
          %v1054 = vshrl.u32 %v1053, 7
          %v1055 = vsub.s32 0, %v1054
          %v1056 = vrot.slane %v937, %v1055
          %v1057 = vmul.f32 %v1052, %v1056
          %v1058 = vlaneseq
          %v1059 = vshrl.u32 %v1058, 7
          %v1060 = vsub.s32 0, %v1059
          %v1061 = vrot.slane %v938, %v1060
          %v1062 = vmul.f32 %v986, %v1061
          %v1063 = vlaneseq
          %v1064 = vshrl.u32 %v1063, 7
          %v1065 = vsub.s32 0, %v1064
          %v1066 = vrot.slane %v939, %v1065
          %v1067 = vmul.f32 %v995, %v1066
          %v1068 = vadd.f32 %v1062, %v1067
          %v1069 = vlaneseq
          %v1070 = vshrl.u32 %v1069, 7
          %v1071 = vsub.s32 0, %v1070
          %v1072 = vrot.slane %v940, %v1071
          %v1073 = vmul.f32 %v1004, %v1072
          %v1074 = vadd.f32 %v1068, %v1073
          %v1075 = vlaneseq
          %v1076 = vshrl.u32 %v1075, 7
          %v1077 = vsub.s32 0, %v1076
          %v1078 = vrot.slane %v941, %v1077
          %v1079 = vmul.f32 %v1009, %v1078
          %v1080 = vlaneseq
          %v1081 = vshrl.u32 %v1080, 7
          %v1082 = vsub.s32 0, %v1081
          %v1083 = vrot.slane %v942, %v1082
          %v1084 = vmul.f32 %v1014, %v1083
          %v1085 = vadd.f32 %v1079, %v1084
          %v1086 = vlaneseq
          %v1087 = vshrl.u32 %v1086, 7
          %v1088 = vsub.s32 0, %v1087
          %v1089 = vrot.slane %v943, %v1088
          %v1090 = vmul.f32 %v1019, %v1089
          %v1091 = vadd.f32 %v1085, %v1090
          %v1092 = vlaneseq
          %v1093 = vshrl.u32 %v1092, 7
          %v1094 = vsub.s32 0, %v1093
          %v1095 = vrot.slane %v944, %v1094
          %v1096 = vmul.f32 %v1024, %v1095
          %v1097 = vlaneseq
          %v1098 = vshrl.u32 %v1097, 7
          %v1099 = vsub.s32 0, %v1098
          %v1100 = vrot.slane %v945, %v1099
          %v1101 = vmul.f32 %v1029, %v1100
          %v1102 = vadd.f32 %v1096, %v1101
          %v1103 = vlaneseq
          %v1104 = vshrl.u32 %v1103, 7
          %v1105 = vsub.s32 0, %v1104
          %v1106 = vrot.slane %v946, %v1105
          %v1107 = vmul.f32 %v1034, %v1106
          %v1108 = vadd.f32 %v1102, %v1107
          %vm1109 = vcmp.ge.f32.partialorder %v1074, 0.0
          %vm1110 = vcmp.ge.f32.partialorder %v1091, 0.0
          %vm1111 = vmand %vm1109, %vm1110
          %vm1112 = vcmp.ge.f32.partialorder %v1108, 0.0
          %vm1113 = vmand %vm1111, %vm1112
          %v1114 = vsel %vm960, 1, 0
          %v1115 = vlaneseq
          %v1116 = vshrl.u32 %v1115, 7
          %v1117 = vsub.s32 0, %v1116
          %v1118 = vrot.slane %v1114, %v1117
          %vm1119 = vcmp.eq.s32.totalorder %v1118, 1
          %vm1120 = vmand %vm1113, %vm1119
          %v1121 = vlaneseq
          %v1122 = vshrl.u32 %v1121, 7
          %v1123 = vsub.s32 0, %v1122
          %v1124 = vrot.slane %v947, %v1123
          %v1125 = vmul.f32 %v986, %v1124
          %v1126 = vlaneseq
          %v1127 = vshrl.u32 %v1126, 7
          %v1128 = vsub.s32 0, %v1127
          %v1129 = vrot.slane %v948, %v1128
          %v1130 = vmul.f32 %v995, %v1129
          %v1131 = vadd.f32 %v1125, %v1130
          %v1132 = vlaneseq
          %v1133 = vshrl.u32 %v1132, 7
          %v1134 = vsub.s32 0, %v1133
          %v1135 = vrot.slane %v949, %v1134
          %v1136 = vmul.f32 %v1004, %v1135
          %v1137 = vadd.f32 %v1131, %v1136
          %v1138 = vlaneseq
          %v1139 = vshrl.u32 %v1138, 7
          %v1140 = vsub.s32 0, %v1139
          %v1141 = vrot.slane %v956, %v1140
          %v1142 = vmul.f32 %v1137, %v1141
          %v1143 = vmax.f32 %v1142, 0.0
          %v1144 = vmin.f32 %v1143, 1.0
          %v1145 = vmul.f32 %v1144, %v1124
          %v1146 = vsub.f32 %v986, %v1145
          %v1147 = vmul.f32 %v1144, %v1129
          %v1148 = vsub.f32 %v995, %v1147
          %v1149 = vmul.f32 %v1144, %v1135
          %v1150 = vsub.f32 %v1004, %v1149
          %v1151 = vmul.f32 %v1146, %v1146
          %v1152 = vmul.f32 %v1148, %v1148
          %v1153 = vadd.f32 %v1151, %v1152
          %v1154 = vmul.f32 %v1150, %v1150
          %v1155 = vadd.f32 %v1153, %v1154
          %v1156 = vlaneseq
          %v1157 = vshrl.u32 %v1156, 7
          %v1158 = vsub.s32 0, %v1157
          %v1159 = vrot.slane %v950, %v1158
          %v1160 = vmul.f32 %v1009, %v1159
          %v1161 = vlaneseq
          %v1162 = vshrl.u32 %v1161, 7
          %v1163 = vsub.s32 0, %v1162
          %v1164 = vrot.slane %v951, %v1163
          %v1165 = vmul.f32 %v1014, %v1164
          %v1166 = vadd.f32 %v1160, %v1165
          %v1167 = vlaneseq
          %v1168 = vshrl.u32 %v1167, 7
          %v1169 = vsub.s32 0, %v1168
          %v1170 = vrot.slane %v952, %v1169
          %v1171 = vmul.f32 %v1019, %v1170
          %v1172 = vadd.f32 %v1166, %v1171
          %v1173 = vlaneseq
          %v1174 = vshrl.u32 %v1173, 7
          %v1175 = vsub.s32 0, %v1174
          %v1176 = vrot.slane %v957, %v1175
          %v1177 = vmul.f32 %v1172, %v1176
          %v1178 = vmax.f32 %v1177, 0.0
          %v1179 = vmin.f32 %v1178, 1.0
          %v1180 = vmul.f32 %v1179, %v1159
          %v1181 = vsub.f32 %v1009, %v1180
          %v1182 = vmul.f32 %v1179, %v1164
          %v1183 = vsub.f32 %v1014, %v1182
          %v1184 = vmul.f32 %v1179, %v1170
          %v1185 = vsub.f32 %v1019, %v1184
          %v1186 = vmul.f32 %v1181, %v1181
          %v1187 = vmul.f32 %v1183, %v1183
          %v1188 = vadd.f32 %v1186, %v1187
          %v1189 = vmul.f32 %v1185, %v1185
          %v1190 = vadd.f32 %v1188, %v1189
          %v1191 = vlaneseq
          %v1192 = vshrl.u32 %v1191, 7
          %v1193 = vsub.s32 0, %v1192
          %v1194 = vrot.slane %v953, %v1193
          %v1195 = vmul.f32 %v1024, %v1194
          %v1196 = vlaneseq
          %v1197 = vshrl.u32 %v1196, 7
          %v1198 = vsub.s32 0, %v1197
          %v1199 = vrot.slane %v954, %v1198
          %v1200 = vmul.f32 %v1029, %v1199
          %v1201 = vadd.f32 %v1195, %v1200
          %v1202 = vlaneseq
          %v1203 = vshrl.u32 %v1202, 7
          %v1204 = vsub.s32 0, %v1203
          %v1205 = vrot.slane %v955, %v1204
          %v1206 = vmul.f32 %v1034, %v1205
          %v1207 = vadd.f32 %v1201, %v1206
          %v1208 = vlaneseq
          %v1209 = vshrl.u32 %v1208, 7
          %v1210 = vsub.s32 0, %v1209
          %v1211 = vrot.slane %v958, %v1210
          %v1212 = vmul.f32 %v1207, %v1211
          %v1213 = vmax.f32 %v1212, 0.0
          %v1214 = vmin.f32 %v1213, 1.0
          %v1215 = vmul.f32 %v1214, %v1194
          %v1216 = vsub.f32 %v1024, %v1215
          %v1217 = vmul.f32 %v1214, %v1199
          %v1218 = vsub.f32 %v1029, %v1217
          %v1219 = vmul.f32 %v1214, %v1205
          %v1220 = vsub.f32 %v1034, %v1219
          %v1221 = vmul.f32 %v1216, %v1216
          %v1222 = vmul.f32 %v1218, %v1218
          %v1223 = vadd.f32 %v1221, %v1222
          %v1224 = vmul.f32 %v1220, %v1220
          %v1225 = vadd.f32 %v1223, %v1224
          %v1226 = vmin.f32 %v1190, %v1225
          %v1227 = vmin.f32 %v1155, %v1226
          %v1228 = vsel %vm1120, %v1057, %v1227
          %1230 = vrot.lane.b32.xlu0 %v1228, 80
          %v1231 = vpop.permute.xlu0 %1230
          %v1233 = vmin.f32 %v1228, %v1231
          %v1234 = vrsqrt.pop %v1233
          %v1235 = vmul.f32 %v1233, %v1234
          %vm1236 = vcmp.eq.f32.partialorder %v1233, inf
          %v1237 = vsel %vm1236, %v1233, %v1235
          %vm1238 = vcmp.eq.f32.partialorder %v1233, 0.0
          %v1239 = vand.u32 %v1233, 2147483648
          %v1240 = vsel %vm1238, %v1239, %v1237
          %1242 = vset.pattern.permute.xlu0 3
          %1243 = vperm.xlu0 %1242, %v976
          %v1244 = vpop.permute.xlu0 %1243
          %v1246 = vmul.f32 %v1240, %v1244
          %v1247 = vadd.f32 %v969, %v1246
        $region55: #{point_triangle_distance.1} parent=35 // loop_footer
          %s968 = sadd.s32 1, %s964
        $region56: #{point_triangle_distance.1} parent=35 // loop_footer_branch
          %963 = sbr.rel target = $region52
        $region57: #{point_triangle_distance.1} parent=35 // loop_exit
          _
        %v1248 = vld [vmem:[%s245 + $0x2] sm:$0x1]
        %v1249 = vsel %vm581, %v969, 0.0
        %v1250 = vrot.slane %v1249, 4
        %v1251 = vadd.f32 %v1249, %v1250
        %v1252 = vrot.slane %v1251, 2
        %v1253 = vadd.f32 %v1251, %v1252
        %v1254 = vrot.slane %v1253, 1
        %v1255 = vadd.f32 %v1253, %v1254
        %v1256 = vadd.f32 %v1248, %v1255
        %1257 = vst.msk [vmem:[%s245 + $0x2] sm:$0x1] %vm590, %v1256
        %v1258 = vld [vmem:[%s218 + $0x69] sm:$0x1]
        %v1259 = vld [vmem:[%s218 + $0x6a] sm:$0x1]
        %v1260 = vld [vmem:[%s218 + $0x6b] sm:$0x1]
        %v1261 = vld [vmem:[%s218 + $0x6c] sm:$0x1]
        %v1262 = vld [vmem:[%s218 + $0x6d] sm:$0x1]
        %v1263 = vld [vmem:[%s218 + $0x6e] sm:$0x1]
        %v1264 = vld [vmem:[%s218 + $0x6f] sm:$0x1]
        %v1265 = vld [vmem:[%s218 + $0x70] sm:$0x1]
        %v1266 = vld [vmem:[%s218 + $0x71] sm:$0x1]
        %v1267 = vld [vmem:[%s218 + $0x72] sm:$0x1]
        %v1268 = vld [vmem:[%s218 + $0x73] sm:$0x1]
        %v1269 = vld [vmem:[%s218 + $0x74] sm:$0x1]
        %v1270 = vld [vmem:[%s218 + $0x75] sm:$0x1]
        %v1271 = vld [vmem:[%s218 + $0x76] sm:$0x1]
        %v1272 = vld [vmem:[%s218 + $0x77] sm:$0x1]
        %v1273 = vld [vmem:[%s218 + $0x78] sm:$0x1]
        %v1274 = vld [vmem:[%s218 + $0x79] sm:$0x1]
        %v1275 = vld [vmem:[%s218 + $0x7a] sm:$0x1]
        %v1276 = vld [vmem:[%s218 + $0x7b] sm:$0x1]
        %v1277 = vld [vmem:[%s218 + $0x7c] sm:$0x1]
        %v1278 = vld [vmem:[%s218 + $0x7d] sm:$0x1]
        %v1279 = vld [vmem:[%s218 + $0x7e] sm:$0x1]
        %v1280 = vld [vmem:[%s218 + $0x7f] sm:$0x1]
        %v1281 = vld [vmem:[%s218 + $0x80] sm:$0x1]
        %v1282 = vld [vmem:[%s218 + $0x81] sm:$0x1]
        %v1283 = vld [vmem:[%s218 + $0x82] sm:$0x1]
        %v1284 = vld [vmem:[%s218 + $0x83] sm:$0x1]
        %v1285 = vld [vmem:[%s218 + $0x84] sm:$0x1]
        %v1286 = vld [vmem:[%s218 + $0x85] sm:$0x1]
        %v1287 = vld [vmem:[%s218 + $0x86] sm:$0x1]
        %v1288 = vld [vmem:[%s218 + $0x87] sm:$0x1]
        %v1289 = vld [vmem:[%s218 + $0x88] sm:$0x1]
        %v1290 = vld [vmem:[%s218 + $0x89] sm:$0x1]
        %v1291 = vld [vmem:[%s218 + $0x8a] sm:$0x1]
        %v1292 = vld [vmem:[%s218 + $0x8b] sm:$0x1]
        %vm1293 = vcmp.gt.f32.partialorder %v1292, 0.5
        %s1294 = sadd.s32 %s293, 3
        %s1295 = scvt.s32.f32 %s1294
        loop: start=0, step=1, limit=16
        $region58: #{point_triangle_distance.1} parent=35 // loop_pre_header
          _
        $region59: #{point_triangle_distance.1} parent=35 // loop_header
          %s1297 = sphi 0, %s1301
          %p1298 = scmp.ge.s32.totalorder %s1297, 16
          %v1302 = vphi 0.0, %v1580
        $region60: #{point_triangle_distance.1} parent=35 // loop_header_branch
          %1300 = sbr.rel (%p1298) target = $region64
        $region61: #{point_triangle_distance.1} parent=35 // loop_body
          %s1303 = smul.u32 %s1297, 8
          %s1304 = scalar_lea.vmem %s232, %s1303
          %v1305 = vld [vmem:[%s1304] sm:$0xff]
          %v1306 = vstv %s1295
          %vm1307 = vcmp.eq.f32.partialorder %v1305, %v1306
          %v1308 = vsel %vm1307, 1, 0
          %v1309 = vcvt.s32.f32 %v1308
          %1311 = vset.pattern.permute.xlu0 0
          %1312 = vperm.xlu0 %1311, %v1305
          %v1313 = vpop.permute.xlu0 %1312
          %v1315 = vlaneseq
          %v1316 = vshrl.u32 %v1315, 7
          %v1317 = vsub.s32 0, %v1316
          %v1318 = vrot.slane %v1258, %v1317
          %v1319 = vsub.f32 %v1313, %v1318
          %1320 = vset.pattern.permute.xlu0 1
          %1321 = vperm.xlu0 %1320, %v1305
          %v1322 = vpop.permute.xlu0 %1321
          %v1324 = vlaneseq
          %v1325 = vshrl.u32 %v1324, 7
          %v1326 = vsub.s32 0, %v1325
          %v1327 = vrot.slane %v1259, %v1326
          %v1328 = vsub.f32 %v1322, %v1327
          %1329 = vset.pattern.permute.xlu0 2
          %1330 = vperm.xlu0 %1329, %v1305
          %v1331 = vpop.permute.xlu0 %1330
          %v1333 = vlaneseq
          %v1334 = vshrl.u32 %v1333, 7
          %v1335 = vsub.s32 0, %v1334
          %v1336 = vrot.slane %v1260, %v1335
          %v1337 = vsub.f32 %v1331, %v1336
          %v1338 = vlaneseq
          %v1339 = vshrl.u32 %v1338, 7
          %v1340 = vsub.s32 0, %v1339
          %v1341 = vrot.slane %v1261, %v1340
          %v1342 = vsub.f32 %v1313, %v1341
          %v1343 = vlaneseq
          %v1344 = vshrl.u32 %v1343, 7
          %v1345 = vsub.s32 0, %v1344
          %v1346 = vrot.slane %v1262, %v1345
          %v1347 = vsub.f32 %v1322, %v1346
          %v1348 = vlaneseq
          %v1349 = vshrl.u32 %v1348, 7
          %v1350 = vsub.s32 0, %v1349
          %v1351 = vrot.slane %v1263, %v1350
          %v1352 = vsub.f32 %v1331, %v1351
          %v1353 = vlaneseq
          %v1354 = vshrl.u32 %v1353, 7
          %v1355 = vsub.s32 0, %v1354
          %v1356 = vrot.slane %v1264, %v1355
          %v1357 = vsub.f32 %v1313, %v1356
          %v1358 = vlaneseq
          %v1359 = vshrl.u32 %v1358, 7
          %v1360 = vsub.s32 0, %v1359
          %v1361 = vrot.slane %v1265, %v1360
          %v1362 = vsub.f32 %v1322, %v1361
          %v1363 = vlaneseq
          %v1364 = vshrl.u32 %v1363, 7
          %v1365 = vsub.s32 0, %v1364
          %v1366 = vrot.slane %v1266, %v1365
          %v1367 = vsub.f32 %v1331, %v1366
          %v1368 = vlaneseq
          %v1369 = vshrl.u32 %v1368, 7
          %v1370 = vsub.s32 0, %v1369
          %v1371 = vrot.slane %v1267, %v1370
          %v1372 = vmul.f32 %v1319, %v1371
          %v1373 = vlaneseq
          %v1374 = vshrl.u32 %v1373, 7
          %v1375 = vsub.s32 0, %v1374
          %v1376 = vrot.slane %v1268, %v1375
          %v1377 = vmul.f32 %v1328, %v1376
          %v1378 = vadd.f32 %v1372, %v1377
          %v1379 = vlaneseq
          %v1380 = vshrl.u32 %v1379, 7
          %v1381 = vsub.s32 0, %v1380
          %v1382 = vrot.slane %v1269, %v1381
          %v1383 = vmul.f32 %v1337, %v1382
          %v1384 = vadd.f32 %v1378, %v1383
          %v1385 = vmul.f32 %v1384, %v1384
          %v1386 = vlaneseq
          %v1387 = vshrl.u32 %v1386, 7
          %v1388 = vsub.s32 0, %v1387
          %v1389 = vrot.slane %v1270, %v1388
          %v1390 = vmul.f32 %v1385, %v1389
          %v1391 = vlaneseq
          %v1392 = vshrl.u32 %v1391, 7
          %v1393 = vsub.s32 0, %v1392
          %v1394 = vrot.slane %v1271, %v1393
          %v1395 = vmul.f32 %v1319, %v1394
          %v1396 = vlaneseq
          %v1397 = vshrl.u32 %v1396, 7
          %v1398 = vsub.s32 0, %v1397
          %v1399 = vrot.slane %v1272, %v1398
          %v1400 = vmul.f32 %v1328, %v1399
          %v1401 = vadd.f32 %v1395, %v1400
          %v1402 = vlaneseq
          %v1403 = vshrl.u32 %v1402, 7
          %v1404 = vsub.s32 0, %v1403
          %v1405 = vrot.slane %v1273, %v1404
          %v1406 = vmul.f32 %v1337, %v1405
          %v1407 = vadd.f32 %v1401, %v1406
          %v1408 = vlaneseq
          %v1409 = vshrl.u32 %v1408, 7
          %v1410 = vsub.s32 0, %v1409
          %v1411 = vrot.slane %v1274, %v1410
          %v1412 = vmul.f32 %v1342, %v1411
          %v1413 = vlaneseq
          %v1414 = vshrl.u32 %v1413, 7
          %v1415 = vsub.s32 0, %v1414
          %v1416 = vrot.slane %v1275, %v1415
          %v1417 = vmul.f32 %v1347, %v1416
          %v1418 = vadd.f32 %v1412, %v1417
          %v1419 = vlaneseq
          %v1420 = vshrl.u32 %v1419, 7
          %v1421 = vsub.s32 0, %v1420
          %v1422 = vrot.slane %v1276, %v1421
          %v1423 = vmul.f32 %v1352, %v1422
          %v1424 = vadd.f32 %v1418, %v1423
          %v1425 = vlaneseq
          %v1426 = vshrl.u32 %v1425, 7
          %v1427 = vsub.s32 0, %v1426
          %v1428 = vrot.slane %v1277, %v1427
          %v1429 = vmul.f32 %v1357, %v1428
          %v1430 = vlaneseq
          %v1431 = vshrl.u32 %v1430, 7
          %v1432 = vsub.s32 0, %v1431
          %v1433 = vrot.slane %v1278, %v1432
          %v1434 = vmul.f32 %v1362, %v1433
          %v1435 = vadd.f32 %v1429, %v1434
          %v1436 = vlaneseq
          %v1437 = vshrl.u32 %v1436, 7
          %v1438 = vsub.s32 0, %v1437
          %v1439 = vrot.slane %v1279, %v1438
          %v1440 = vmul.f32 %v1367, %v1439
          %v1441 = vadd.f32 %v1435, %v1440
          %vm1442 = vcmp.ge.f32.partialorder %v1407, 0.0
          %vm1443 = vcmp.ge.f32.partialorder %v1424, 0.0
          %vm1444 = vmand %vm1442, %vm1443
          %vm1445 = vcmp.ge.f32.partialorder %v1441, 0.0
          %vm1446 = vmand %vm1444, %vm1445
          %v1447 = vsel %vm1293, 1, 0
          %v1448 = vlaneseq
          %v1449 = vshrl.u32 %v1448, 7
          %v1450 = vsub.s32 0, %v1449
          %v1451 = vrot.slane %v1447, %v1450
          %vm1452 = vcmp.eq.s32.totalorder %v1451, 1
          %vm1453 = vmand %vm1446, %vm1452
          %v1454 = vlaneseq
          %v1455 = vshrl.u32 %v1454, 7
          %v1456 = vsub.s32 0, %v1455
          %v1457 = vrot.slane %v1280, %v1456
          %v1458 = vmul.f32 %v1319, %v1457
          %v1459 = vlaneseq
          %v1460 = vshrl.u32 %v1459, 7
          %v1461 = vsub.s32 0, %v1460
          %v1462 = vrot.slane %v1281, %v1461
          %v1463 = vmul.f32 %v1328, %v1462
          %v1464 = vadd.f32 %v1458, %v1463
          %v1465 = vlaneseq
          %v1466 = vshrl.u32 %v1465, 7
          %v1467 = vsub.s32 0, %v1466
          %v1468 = vrot.slane %v1282, %v1467
          %v1469 = vmul.f32 %v1337, %v1468
          %v1470 = vadd.f32 %v1464, %v1469
          %v1471 = vlaneseq
          %v1472 = vshrl.u32 %v1471, 7
          %v1473 = vsub.s32 0, %v1472
          %v1474 = vrot.slane %v1289, %v1473
          %v1475 = vmul.f32 %v1470, %v1474
          %v1476 = vmax.f32 %v1475, 0.0
          %v1477 = vmin.f32 %v1476, 1.0
          %v1478 = vmul.f32 %v1477, %v1457
          %v1479 = vsub.f32 %v1319, %v1478
          %v1480 = vmul.f32 %v1477, %v1462
          %v1481 = vsub.f32 %v1328, %v1480
          %v1482 = vmul.f32 %v1477, %v1468
          %v1483 = vsub.f32 %v1337, %v1482
          %v1484 = vmul.f32 %v1479, %v1479
          %v1485 = vmul.f32 %v1481, %v1481
          %v1486 = vadd.f32 %v1484, %v1485
          %v1487 = vmul.f32 %v1483, %v1483
          %v1488 = vadd.f32 %v1486, %v1487
          %v1489 = vlaneseq
          %v1490 = vshrl.u32 %v1489, 7
          %v1491 = vsub.s32 0, %v1490
          %v1492 = vrot.slane %v1283, %v1491
          %v1493 = vmul.f32 %v1342, %v1492
          %v1494 = vlaneseq
          %v1495 = vshrl.u32 %v1494, 7
          %v1496 = vsub.s32 0, %v1495
          %v1497 = vrot.slane %v1284, %v1496
          %v1498 = vmul.f32 %v1347, %v1497
          %v1499 = vadd.f32 %v1493, %v1498
          %v1500 = vlaneseq
          %v1501 = vshrl.u32 %v1500, 7
          %v1502 = vsub.s32 0, %v1501
          %v1503 = vrot.slane %v1285, %v1502
          %v1504 = vmul.f32 %v1352, %v1503
          %v1505 = vadd.f32 %v1499, %v1504
          %v1506 = vlaneseq
          %v1507 = vshrl.u32 %v1506, 7
          %v1508 = vsub.s32 0, %v1507
          %v1509 = vrot.slane %v1290, %v1508
          %v1510 = vmul.f32 %v1505, %v1509
          %v1511 = vmax.f32 %v1510, 0.0
          %v1512 = vmin.f32 %v1511, 1.0
          %v1513 = vmul.f32 %v1512, %v1492
          %v1514 = vsub.f32 %v1342, %v1513
          %v1515 = vmul.f32 %v1512, %v1497
          %v1516 = vsub.f32 %v1347, %v1515
          %v1517 = vmul.f32 %v1512, %v1503
          %v1518 = vsub.f32 %v1352, %v1517
          %v1519 = vmul.f32 %v1514, %v1514
          %v1520 = vmul.f32 %v1516, %v1516
          %v1521 = vadd.f32 %v1519, %v1520
          %v1522 = vmul.f32 %v1518, %v1518
          %v1523 = vadd.f32 %v1521, %v1522
          %v1524 = vlaneseq
          %v1525 = vshrl.u32 %v1524, 7
          %v1526 = vsub.s32 0, %v1525
          %v1527 = vrot.slane %v1286, %v1526
          %v1528 = vmul.f32 %v1357, %v1527
          %v1529 = vlaneseq
          %v1530 = vshrl.u32 %v1529, 7
          %v1531 = vsub.s32 0, %v1530
          %v1532 = vrot.slane %v1287, %v1531
          %v1533 = vmul.f32 %v1362, %v1532
          %v1534 = vadd.f32 %v1528, %v1533
          %v1535 = vlaneseq
          %v1536 = vshrl.u32 %v1535, 7
          %v1537 = vsub.s32 0, %v1536
          %v1538 = vrot.slane %v1288, %v1537
          %v1539 = vmul.f32 %v1367, %v1538
          %v1540 = vadd.f32 %v1534, %v1539
          %v1541 = vlaneseq
          %v1542 = vshrl.u32 %v1541, 7
          %v1543 = vsub.s32 0, %v1542
          %v1544 = vrot.slane %v1291, %v1543
          %v1545 = vmul.f32 %v1540, %v1544
          %v1546 = vmax.f32 %v1545, 0.0
          %v1547 = vmin.f32 %v1546, 1.0
          %v1548 = vmul.f32 %v1547, %v1527
          %v1549 = vsub.f32 %v1357, %v1548
          %v1550 = vmul.f32 %v1547, %v1532
          %v1551 = vsub.f32 %v1362, %v1550
          %v1552 = vmul.f32 %v1547, %v1538
          %v1553 = vsub.f32 %v1367, %v1552
          %v1554 = vmul.f32 %v1549, %v1549
          %v1555 = vmul.f32 %v1551, %v1551
          %v1556 = vadd.f32 %v1554, %v1555
          %v1557 = vmul.f32 %v1553, %v1553
          %v1558 = vadd.f32 %v1556, %v1557
          %v1559 = vmin.f32 %v1523, %v1558
          %v1560 = vmin.f32 %v1488, %v1559
          %v1561 = vsel %vm1453, %v1390, %v1560
          %1563 = vrot.lane.b32.xlu0 %v1561, 80
          %v1564 = vpop.permute.xlu0 %1563
          %v1566 = vmin.f32 %v1561, %v1564
          %v1567 = vrsqrt.pop %v1566
          %v1568 = vmul.f32 %v1566, %v1567
          %vm1569 = vcmp.eq.f32.partialorder %v1566, inf
          %v1570 = vsel %vm1569, %v1566, %v1568
          %vm1571 = vcmp.eq.f32.partialorder %v1566, 0.0
          %v1572 = vand.u32 %v1566, 2147483648
          %v1573 = vsel %vm1571, %v1572, %v1570
          %1575 = vset.pattern.permute.xlu0 3
          %1576 = vperm.xlu0 %1575, %v1309
          %v1577 = vpop.permute.xlu0 %1576
          %v1579 = vmul.f32 %v1573, %v1577
          %v1580 = vadd.f32 %v1302, %v1579
        $region62: #{point_triangle_distance.1} parent=35 // loop_footer
          %s1301 = sadd.s32 1, %s1297
        $region63: #{point_triangle_distance.1} parent=35 // loop_footer_branch
          %1296 = sbr.rel target = $region59
        $region64: #{point_triangle_distance.1} parent=35 // loop_exit
          _
        %v1581 = vld [vmem:[%s245 + $0x3] sm:$0x1]
        %v1582 = vsel %vm581, %v1302, 0.0
        %v1583 = vrot.slane %v1582, 4
        %v1584 = vadd.f32 %v1582, %v1583
        %v1585 = vrot.slane %v1584, 2
        %v1586 = vadd.f32 %v1584, %v1585
        %v1587 = vrot.slane %v1586, 1
        %v1588 = vadd.f32 %v1586, %v1587
        %v1589 = vadd.f32 %v1581, %v1588
        %1590 = vst.msk [vmem:[%s245 + $0x3] sm:$0x1] %vm590, %v1589
        %v1591 = vld [vmem:[%s218 + $0x8c] sm:$0x1]
        %v1592 = vld [vmem:[%s218 + $0x8d] sm:$0x1]
        %v1593 = vld [vmem:[%s218 + $0x8e] sm:$0x1]
        %v1594 = vld [vmem:[%s218 + $0x8f] sm:$0x1]
        %v1595 = vld [vmem:[%s218 + $0x90] sm:$0x1]
        %v1596 = vld [vmem:[%s218 + $0x91] sm:$0x1]
        %v1597 = vld [vmem:[%s218 + $0x92] sm:$0x1]
        %v1598 = vld [vmem:[%s218 + $0x93] sm:$0x1]
        %v1599 = vld [vmem:[%s218 + $0x94] sm:$0x1]
        %v1600 = vld [vmem:[%s218 + $0x95] sm:$0x1]
        %v1601 = vld [vmem:[%s218 + $0x96] sm:$0x1]
        %v1602 = vld [vmem:[%s218 + $0x97] sm:$0x1]
        %v1603 = vld [vmem:[%s218 + $0x98] sm:$0x1]
        %v1604 = vld [vmem:[%s218 + $0x99] sm:$0x1]
        %v1605 = vld [vmem:[%s218 + $0x9a] sm:$0x1]
        %v1606 = vld [vmem:[%s218 + $0x9b] sm:$0x1]
        %v1607 = vld [vmem:[%s218 + $0x9c] sm:$0x1]
        %v1608 = vld [vmem:[%s218 + $0x9d] sm:$0x1]
        %v1609 = vld [vmem:[%s218 + $0x9e] sm:$0x1]
        %v1610 = vld [vmem:[%s218 + $0x9f] sm:$0x1]
        %v1611 = vld [vmem:[%s218 + $0xa0] sm:$0x1]
        %v1612 = vld [vmem:[%s218 + $0xa1] sm:$0x1]
        %v1613 = vld [vmem:[%s218 + $0xa2] sm:$0x1]
        %v1614 = vld [vmem:[%s218 + $0xa3] sm:$0x1]
        %v1615 = vld [vmem:[%s218 + $0xa4] sm:$0x1]
        %v1616 = vld [vmem:[%s218 + $0xa5] sm:$0x1]
        %v1617 = vld [vmem:[%s218 + $0xa6] sm:$0x1]
        %v1618 = vld [vmem:[%s218 + $0xa7] sm:$0x1]
        %v1619 = vld [vmem:[%s218 + $0xa8] sm:$0x1]
        %v1620 = vld [vmem:[%s218 + $0xa9] sm:$0x1]
        %v1621 = vld [vmem:[%s218 + $0xaa] sm:$0x1]
        %v1622 = vld [vmem:[%s218 + $0xab] sm:$0x1]
        %v1623 = vld [vmem:[%s218 + $0xac] sm:$0x1]
        %v1624 = vld [vmem:[%s218 + $0xad] sm:$0x1]
        %v1625 = vld [vmem:[%s218 + $0xae] sm:$0x1]
        %vm1626 = vcmp.gt.f32.partialorder %v1625, 0.5
        %s1627 = sadd.s32 %s293, 4
        %s1628 = scvt.s32.f32 %s1627
        loop: start=0, step=1, limit=16
        $region65: #{point_triangle_distance.1} parent=35 // loop_pre_header
          _
        $region66: #{point_triangle_distance.1} parent=35 // loop_header
          %s1630 = sphi 0, %s1634
          %p1631 = scmp.ge.s32.totalorder %s1630, 16
          %v1635 = vphi 0.0, %v1913
        $region67: #{point_triangle_distance.1} parent=35 // loop_header_branch
          %1633 = sbr.rel (%p1631) target = $region71
        $region68: #{point_triangle_distance.1} parent=35 // loop_body
          %s1636 = smul.u32 %s1630, 8
          %s1637 = scalar_lea.vmem %s232, %s1636
          %v1638 = vld [vmem:[%s1637] sm:$0xff]
          %v1639 = vstv %s1628
          %vm1640 = vcmp.eq.f32.partialorder %v1638, %v1639
          %v1641 = vsel %vm1640, 1, 0
          %v1642 = vcvt.s32.f32 %v1641
          %1644 = vset.pattern.permute.xlu0 0
          %1645 = vperm.xlu0 %1644, %v1638
          %v1646 = vpop.permute.xlu0 %1645
          %v1648 = vlaneseq
          %v1649 = vshrl.u32 %v1648, 7
          %v1650 = vsub.s32 0, %v1649
          %v1651 = vrot.slane %v1591, %v1650
          %v1652 = vsub.f32 %v1646, %v1651
          %1653 = vset.pattern.permute.xlu0 1
          %1654 = vperm.xlu0 %1653, %v1638
          %v1655 = vpop.permute.xlu0 %1654
          %v1657 = vlaneseq
          %v1658 = vshrl.u32 %v1657, 7
          %v1659 = vsub.s32 0, %v1658
          %v1660 = vrot.slane %v1592, %v1659
          %v1661 = vsub.f32 %v1655, %v1660
          %1662 = vset.pattern.permute.xlu0 2
          %1663 = vperm.xlu0 %1662, %v1638
          %v1664 = vpop.permute.xlu0 %1663
          %v1666 = vlaneseq
          %v1667 = vshrl.u32 %v1666, 7
          %v1668 = vsub.s32 0, %v1667
          %v1669 = vrot.slane %v1593, %v1668
          %v1670 = vsub.f32 %v1664, %v1669
          %v1671 = vlaneseq
          %v1672 = vshrl.u32 %v1671, 7
          %v1673 = vsub.s32 0, %v1672
          %v1674 = vrot.slane %v1594, %v1673
          %v1675 = vsub.f32 %v1646, %v1674
          %v1676 = vlaneseq
          %v1677 = vshrl.u32 %v1676, 7
          %v1678 = vsub.s32 0, %v1677
          %v1679 = vrot.slane %v1595, %v1678
          %v1680 = vsub.f32 %v1655, %v1679
          %v1681 = vlaneseq
          %v1682 = vshrl.u32 %v1681, 7
          %v1683 = vsub.s32 0, %v1682
          %v1684 = vrot.slane %v1596, %v1683
          %v1685 = vsub.f32 %v1664, %v1684
          %v1686 = vlaneseq
          %v1687 = vshrl.u32 %v1686, 7
          %v1688 = vsub.s32 0, %v1687
          %v1689 = vrot.slane %v1597, %v1688
          %v1690 = vsub.f32 %v1646, %v1689
          %v1691 = vlaneseq
          %v1692 = vshrl.u32 %v1691, 7
          %v1693 = vsub.s32 0, %v1692
          %v1694 = vrot.slane %v1598, %v1693
          %v1695 = vsub.f32 %v1655, %v1694
          %v1696 = vlaneseq
          %v1697 = vshrl.u32 %v1696, 7
          %v1698 = vsub.s32 0, %v1697
          %v1699 = vrot.slane %v1599, %v1698
          %v1700 = vsub.f32 %v1664, %v1699
          %v1701 = vlaneseq
          %v1702 = vshrl.u32 %v1701, 7
          %v1703 = vsub.s32 0, %v1702
          %v1704 = vrot.slane %v1600, %v1703
          %v1705 = vmul.f32 %v1652, %v1704
          %v1706 = vlaneseq
          %v1707 = vshrl.u32 %v1706, 7
          %v1708 = vsub.s32 0, %v1707
          %v1709 = vrot.slane %v1601, %v1708
          %v1710 = vmul.f32 %v1661, %v1709
          %v1711 = vadd.f32 %v1705, %v1710
          %v1712 = vlaneseq
          %v1713 = vshrl.u32 %v1712, 7
          %v1714 = vsub.s32 0, %v1713
          %v1715 = vrot.slane %v1602, %v1714
          %v1716 = vmul.f32 %v1670, %v1715
          %v1717 = vadd.f32 %v1711, %v1716
          %v1718 = vmul.f32 %v1717, %v1717
          %v1719 = vlaneseq
          %v1720 = vshrl.u32 %v1719, 7
          %v1721 = vsub.s32 0, %v1720
          %v1722 = vrot.slane %v1603, %v1721
          %v1723 = vmul.f32 %v1718, %v1722
          %v1724 = vlaneseq
          %v1725 = vshrl.u32 %v1724, 7
          %v1726 = vsub.s32 0, %v1725
          %v1727 = vrot.slane %v1604, %v1726
          %v1728 = vmul.f32 %v1652, %v1727
          %v1729 = vlaneseq
          %v1730 = vshrl.u32 %v1729, 7
          %v1731 = vsub.s32 0, %v1730
          %v1732 = vrot.slane %v1605, %v1731
          %v1733 = vmul.f32 %v1661, %v1732
          %v1734 = vadd.f32 %v1728, %v1733
          %v1735 = vlaneseq
          %v1736 = vshrl.u32 %v1735, 7
          %v1737 = vsub.s32 0, %v1736
          %v1738 = vrot.slane %v1606, %v1737
          %v1739 = vmul.f32 %v1670, %v1738
          %v1740 = vadd.f32 %v1734, %v1739
          %v1741 = vlaneseq
          %v1742 = vshrl.u32 %v1741, 7
          %v1743 = vsub.s32 0, %v1742
          %v1744 = vrot.slane %v1607, %v1743
          %v1745 = vmul.f32 %v1675, %v1744
          %v1746 = vlaneseq
          %v1747 = vshrl.u32 %v1746, 7
          %v1748 = vsub.s32 0, %v1747
          %v1749 = vrot.slane %v1608, %v1748
          %v1750 = vmul.f32 %v1680, %v1749
          %v1751 = vadd.f32 %v1745, %v1750
          %v1752 = vlaneseq
          %v1753 = vshrl.u32 %v1752, 7
          %v1754 = vsub.s32 0, %v1753
          %v1755 = vrot.slane %v1609, %v1754
          %v1756 = vmul.f32 %v1685, %v1755
          %v1757 = vadd.f32 %v1751, %v1756
          %v1758 = vlaneseq
          %v1759 = vshrl.u32 %v1758, 7
          %v1760 = vsub.s32 0, %v1759
          %v1761 = vrot.slane %v1610, %v1760
          %v1762 = vmul.f32 %v1690, %v1761
          %v1763 = vlaneseq
          %v1764 = vshrl.u32 %v1763, 7
          %v1765 = vsub.s32 0, %v1764
          %v1766 = vrot.slane %v1611, %v1765
          %v1767 = vmul.f32 %v1695, %v1766
          %v1768 = vadd.f32 %v1762, %v1767
          %v1769 = vlaneseq
          %v1770 = vshrl.u32 %v1769, 7
          %v1771 = vsub.s32 0, %v1770
          %v1772 = vrot.slane %v1612, %v1771
          %v1773 = vmul.f32 %v1700, %v1772
          %v1774 = vadd.f32 %v1768, %v1773
          %vm1775 = vcmp.ge.f32.partialorder %v1740, 0.0
          %vm1776 = vcmp.ge.f32.partialorder %v1757, 0.0
          %vm1777 = vmand %vm1775, %vm1776
          %vm1778 = vcmp.ge.f32.partialorder %v1774, 0.0
          %vm1779 = vmand %vm1777, %vm1778
          %v1780 = vsel %vm1626, 1, 0
          %v1781 = vlaneseq
          %v1782 = vshrl.u32 %v1781, 7
          %v1783 = vsub.s32 0, %v1782
          %v1784 = vrot.slane %v1780, %v1783
          %vm1785 = vcmp.eq.s32.totalorder %v1784, 1
          %vm1786 = vmand %vm1779, %vm1785
          %v1787 = vlaneseq
          %v1788 = vshrl.u32 %v1787, 7
          %v1789 = vsub.s32 0, %v1788
          %v1790 = vrot.slane %v1613, %v1789
          %v1791 = vmul.f32 %v1652, %v1790
          %v1792 = vlaneseq
          %v1793 = vshrl.u32 %v1792, 7
          %v1794 = vsub.s32 0, %v1793
          %v1795 = vrot.slane %v1614, %v1794
          %v1796 = vmul.f32 %v1661, %v1795
          %v1797 = vadd.f32 %v1791, %v1796
          %v1798 = vlaneseq
          %v1799 = vshrl.u32 %v1798, 7
          %v1800 = vsub.s32 0, %v1799
          %v1801 = vrot.slane %v1615, %v1800
          %v1802 = vmul.f32 %v1670, %v1801
          %v1803 = vadd.f32 %v1797, %v1802
          %v1804 = vlaneseq
          %v1805 = vshrl.u32 %v1804, 7
          %v1806 = vsub.s32 0, %v1805
          %v1807 = vrot.slane %v1622, %v1806
          %v1808 = vmul.f32 %v1803, %v1807
          %v1809 = vmax.f32 %v1808, 0.0
          %v1810 = vmin.f32 %v1809, 1.0
          %v1811 = vmul.f32 %v1810, %v1790
          %v1812 = vsub.f32 %v1652, %v1811
          %v1813 = vmul.f32 %v1810, %v1795
          %v1814 = vsub.f32 %v1661, %v1813
          %v1815 = vmul.f32 %v1810, %v1801
          %v1816 = vsub.f32 %v1670, %v1815
          %v1817 = vmul.f32 %v1812, %v1812
          %v1818 = vmul.f32 %v1814, %v1814
          %v1819 = vadd.f32 %v1817, %v1818
          %v1820 = vmul.f32 %v1816, %v1816
          %v1821 = vadd.f32 %v1819, %v1820
          %v1822 = vlaneseq
          %v1823 = vshrl.u32 %v1822, 7
          %v1824 = vsub.s32 0, %v1823
          %v1825 = vrot.slane %v1616, %v1824
          %v1826 = vmul.f32 %v1675, %v1825
          %v1827 = vlaneseq
          %v1828 = vshrl.u32 %v1827, 7
          %v1829 = vsub.s32 0, %v1828
          %v1830 = vrot.slane %v1617, %v1829
          %v1831 = vmul.f32 %v1680, %v1830
          %v1832 = vadd.f32 %v1826, %v1831
          %v1833 = vlaneseq
          %v1834 = vshrl.u32 %v1833, 7
          %v1835 = vsub.s32 0, %v1834
          %v1836 = vrot.slane %v1618, %v1835
          %v1837 = vmul.f32 %v1685, %v1836
          %v1838 = vadd.f32 %v1832, %v1837
          %v1839 = vlaneseq
          %v1840 = vshrl.u32 %v1839, 7
          %v1841 = vsub.s32 0, %v1840
          %v1842 = vrot.slane %v1623, %v1841
          %v1843 = vmul.f32 %v1838, %v1842
          %v1844 = vmax.f32 %v1843, 0.0
          %v1845 = vmin.f32 %v1844, 1.0
          %v1846 = vmul.f32 %v1845, %v1825
          %v1847 = vsub.f32 %v1675, %v1846
          %v1848 = vmul.f32 %v1845, %v1830
          %v1849 = vsub.f32 %v1680, %v1848
          %v1850 = vmul.f32 %v1845, %v1836
          %v1851 = vsub.f32 %v1685, %v1850
          %v1852 = vmul.f32 %v1847, %v1847
          %v1853 = vmul.f32 %v1849, %v1849
          %v1854 = vadd.f32 %v1852, %v1853
          %v1855 = vmul.f32 %v1851, %v1851
          %v1856 = vadd.f32 %v1854, %v1855
          %v1857 = vlaneseq
          %v1858 = vshrl.u32 %v1857, 7
          %v1859 = vsub.s32 0, %v1858
          %v1860 = vrot.slane %v1619, %v1859
          %v1861 = vmul.f32 %v1690, %v1860
          %v1862 = vlaneseq
          %v1863 = vshrl.u32 %v1862, 7
          %v1864 = vsub.s32 0, %v1863
          %v1865 = vrot.slane %v1620, %v1864
          %v1866 = vmul.f32 %v1695, %v1865
          %v1867 = vadd.f32 %v1861, %v1866
          %v1868 = vlaneseq
          %v1869 = vshrl.u32 %v1868, 7
          %v1870 = vsub.s32 0, %v1869
          %v1871 = vrot.slane %v1621, %v1870
          %v1872 = vmul.f32 %v1700, %v1871
          %v1873 = vadd.f32 %v1867, %v1872
          %v1874 = vlaneseq
          %v1875 = vshrl.u32 %v1874, 7
          %v1876 = vsub.s32 0, %v1875
          %v1877 = vrot.slane %v1624, %v1876
          %v1878 = vmul.f32 %v1873, %v1877
          %v1879 = vmax.f32 %v1878, 0.0
          %v1880 = vmin.f32 %v1879, 1.0
          %v1881 = vmul.f32 %v1880, %v1860
          %v1882 = vsub.f32 %v1690, %v1881
          %v1883 = vmul.f32 %v1880, %v1865
          %v1884 = vsub.f32 %v1695, %v1883
          %v1885 = vmul.f32 %v1880, %v1871
          %v1886 = vsub.f32 %v1700, %v1885
          %v1887 = vmul.f32 %v1882, %v1882
          %v1888 = vmul.f32 %v1884, %v1884
          %v1889 = vadd.f32 %v1887, %v1888
          %v1890 = vmul.f32 %v1886, %v1886
          %v1891 = vadd.f32 %v1889, %v1890
          %v1892 = vmin.f32 %v1856, %v1891
          %v1893 = vmin.f32 %v1821, %v1892
          %v1894 = vsel %vm1786, %v1723, %v1893
          %1896 = vrot.lane.b32.xlu0 %v1894, 80
          %v1897 = vpop.permute.xlu0 %1896
          %v1899 = vmin.f32 %v1894, %v1897
          %v1900 = vrsqrt.pop %v1899
          %v1901 = vmul.f32 %v1899, %v1900
          %vm1902 = vcmp.eq.f32.partialorder %v1899, inf
          %v1903 = vsel %vm1902, %v1899, %v1901
          %vm1904 = vcmp.eq.f32.partialorder %v1899, 0.0
          %v1905 = vand.u32 %v1899, 2147483648
          %v1906 = vsel %vm1904, %v1905, %v1903
          %1908 = vset.pattern.permute.xlu0 3
          %1909 = vperm.xlu0 %1908, %v1642
          %v1910 = vpop.permute.xlu0 %1909
          %v1912 = vmul.f32 %v1906, %v1910
          %v1913 = vadd.f32 %v1635, %v1912
        $region69: #{point_triangle_distance.1} parent=35 // loop_footer
          %s1634 = sadd.s32 1, %s1630
        $region70: #{point_triangle_distance.1} parent=35 // loop_footer_branch
          %1629 = sbr.rel target = $region66
        $region71: #{point_triangle_distance.1} parent=35 // loop_exit
          _
        %v1914 = vld [vmem:[%s245 + $0x4] sm:$0x1]
        %v1915 = vsel %vm581, %v1635, 0.0
        %v1916 = vrot.slane %v1915, 4
        %v1917 = vadd.f32 %v1915, %v1916
        %v1918 = vrot.slane %v1917, 2
        %v1919 = vadd.f32 %v1917, %v1918
        %v1920 = vrot.slane %v1919, 1
        %v1921 = vadd.f32 %v1919, %v1920
        %v1922 = vadd.f32 %v1914, %v1921
        %1923 = vst.msk [vmem:[%s245 + $0x4] sm:$0x1] %vm590, %v1922
        %v1924 = vld [vmem:[%s218 + $0xaf] sm:$0x1]
        %v1925 = vld [vmem:[%s218 + $0xb0] sm:$0x1]
        %v1926 = vld [vmem:[%s218 + $0xb1] sm:$0x1]
        %v1927 = vld [vmem:[%s218 + $0xb2] sm:$0x1]
        %v1928 = vld [vmem:[%s218 + $0xb3] sm:$0x1]
        %v1929 = vld [vmem:[%s218 + $0xb4] sm:$0x1]
        %v1930 = vld [vmem:[%s218 + $0xb5] sm:$0x1]
        %v1931 = vld [vmem:[%s218 + $0xb6] sm:$0x1]
        %v1932 = vld [vmem:[%s218 + $0xb7] sm:$0x1]
        %v1933 = vld [vmem:[%s218 + $0xb8] sm:$0x1]
        %v1934 = vld [vmem:[%s218 + $0xb9] sm:$0x1]
        %v1935 = vld [vmem:[%s218 + $0xba] sm:$0x1]
        %v1936 = vld [vmem:[%s218 + $0xbb] sm:$0x1]
        %v1937 = vld [vmem:[%s218 + $0xbc] sm:$0x1]
        %v1938 = vld [vmem:[%s218 + $0xbd] sm:$0x1]
        %v1939 = vld [vmem:[%s218 + $0xbe] sm:$0x1]
        %v1940 = vld [vmem:[%s218 + $0xbf] sm:$0x1]
        %v1941 = vld [vmem:[%s218 + $0xc0] sm:$0x1]
        %v1942 = vld [vmem:[%s218 + $0xc1] sm:$0x1]
        %v1943 = vld [vmem:[%s218 + $0xc2] sm:$0x1]
        %v1944 = vld [vmem:[%s218 + $0xc3] sm:$0x1]
        %v1945 = vld [vmem:[%s218 + $0xc4] sm:$0x1]
        %v1946 = vld [vmem:[%s218 + $0xc5] sm:$0x1]
        %v1947 = vld [vmem:[%s218 + $0xc6] sm:$0x1]
        %v1948 = vld [vmem:[%s218 + $0xc7] sm:$0x1]
        %v1949 = vld [vmem:[%s218 + $0xc8] sm:$0x1]
        %v1950 = vld [vmem:[%s218 + $0xc9] sm:$0x1]
        %v1951 = vld [vmem:[%s218 + $0xca] sm:$0x1]
        %v1952 = vld [vmem:[%s218 + $0xcb] sm:$0x1]
        %v1953 = vld [vmem:[%s218 + $0xcc] sm:$0x1]
        %v1954 = vld [vmem:[%s218 + $0xcd] sm:$0x1]
        %v1955 = vld [vmem:[%s218 + $0xce] sm:$0x1]
        %v1956 = vld [vmem:[%s218 + $0xcf] sm:$0x1]
        %v1957 = vld [vmem:[%s218 + $0xd0] sm:$0x1]
        %v1958 = vld [vmem:[%s218 + $0xd1] sm:$0x1]
        %vm1959 = vcmp.gt.f32.partialorder %v1958, 0.5
        %s1960 = sadd.s32 %s293, 5
        %s1961 = scvt.s32.f32 %s1960
        loop: start=0, step=1, limit=16
        $region72: #{point_triangle_distance.1} parent=35 // loop_pre_header
          _
        $region73: #{point_triangle_distance.1} parent=35 // loop_header
          %s1963 = sphi 0, %s1967
          %p1964 = scmp.ge.s32.totalorder %s1963, 16
          %v1968 = vphi 0.0, %v2246
        $region74: #{point_triangle_distance.1} parent=35 // loop_header_branch
          %1966 = sbr.rel (%p1964) target = $region78
        $region75: #{point_triangle_distance.1} parent=35 // loop_body
          %s1969 = smul.u32 %s1963, 8
          %s1970 = scalar_lea.vmem %s232, %s1969
          %v1971 = vld [vmem:[%s1970] sm:$0xff]
          %v1972 = vstv %s1961
          %vm1973 = vcmp.eq.f32.partialorder %v1971, %v1972
          %v1974 = vsel %vm1973, 1, 0
          %v1975 = vcvt.s32.f32 %v1974
          %1977 = vset.pattern.permute.xlu0 0
          %1978 = vperm.xlu0 %1977, %v1971
          %v1979 = vpop.permute.xlu0 %1978
          %v1981 = vlaneseq
          %v1982 = vshrl.u32 %v1981, 7
          %v1983 = vsub.s32 0, %v1982
          %v1984 = vrot.slane %v1924, %v1983
          %v1985 = vsub.f32 %v1979, %v1984
          %1986 = vset.pattern.permute.xlu0 1
          %1987 = vperm.xlu0 %1986, %v1971
          %v1988 = vpop.permute.xlu0 %1987
          %v1990 = vlaneseq
          %v1991 = vshrl.u32 %v1990, 7
          %v1992 = vsub.s32 0, %v1991
          %v1993 = vrot.slane %v1925, %v1992
          %v1994 = vsub.f32 %v1988, %v1993
          %1995 = vset.pattern.permute.xlu0 2
          %1996 = vperm.xlu0 %1995, %v1971
          %v1997 = vpop.permute.xlu0 %1996
          %v1999 = vlaneseq
          %v2000 = vshrl.u32 %v1999, 7
          %v2001 = vsub.s32 0, %v2000
          %v2002 = vrot.slane %v1926, %v2001
          %v2003 = vsub.f32 %v1997, %v2002
          %v2004 = vlaneseq
          %v2005 = vshrl.u32 %v2004, 7
          %v2006 = vsub.s32 0, %v2005
          %v2007 = vrot.slane %v1927, %v2006
          %v2008 = vsub.f32 %v1979, %v2007
          %v2009 = vlaneseq
          %v2010 = vshrl.u32 %v2009, 7
          %v2011 = vsub.s32 0, %v2010
          %v2012 = vrot.slane %v1928, %v2011
          %v2013 = vsub.f32 %v1988, %v2012
          %v2014 = vlaneseq
          %v2015 = vshrl.u32 %v2014, 7
          %v2016 = vsub.s32 0, %v2015
          %v2017 = vrot.slane %v1929, %v2016
          %v2018 = vsub.f32 %v1997, %v2017
          %v2019 = vlaneseq
          %v2020 = vshrl.u32 %v2019, 7
          %v2021 = vsub.s32 0, %v2020
          %v2022 = vrot.slane %v1930, %v2021
          %v2023 = vsub.f32 %v1979, %v2022
          %v2024 = vlaneseq
          %v2025 = vshrl.u32 %v2024, 7
          %v2026 = vsub.s32 0, %v2025
          %v2027 = vrot.slane %v1931, %v2026
          %v2028 = vsub.f32 %v1988, %v2027
          %v2029 = vlaneseq
          %v2030 = vshrl.u32 %v2029, 7
          %v2031 = vsub.s32 0, %v2030
          %v2032 = vrot.slane %v1932, %v2031
          %v2033 = vsub.f32 %v1997, %v2032
          %v2034 = vlaneseq
          %v2035 = vshrl.u32 %v2034, 7
          %v2036 = vsub.s32 0, %v2035
          %v2037 = vrot.slane %v1933, %v2036
          %v2038 = vmul.f32 %v1985, %v2037
          %v2039 = vlaneseq
          %v2040 = vshrl.u32 %v2039, 7
          %v2041 = vsub.s32 0, %v2040
          %v2042 = vrot.slane %v1934, %v2041
          %v2043 = vmul.f32 %v1994, %v2042
          %v2044 = vadd.f32 %v2038, %v2043
          %v2045 = vlaneseq
          %v2046 = vshrl.u32 %v2045, 7
          %v2047 = vsub.s32 0, %v2046
          %v2048 = vrot.slane %v1935, %v2047
          %v2049 = vmul.f32 %v2003, %v2048
          %v2050 = vadd.f32 %v2044, %v2049
          %v2051 = vmul.f32 %v2050, %v2050
          %v2052 = vlaneseq
          %v2053 = vshrl.u32 %v2052, 7
          %v2054 = vsub.s32 0, %v2053
          %v2055 = vrot.slane %v1936, %v2054
          %v2056 = vmul.f32 %v2051, %v2055
          %v2057 = vlaneseq
          %v2058 = vshrl.u32 %v2057, 7
          %v2059 = vsub.s32 0, %v2058
          %v2060 = vrot.slane %v1937, %v2059
          %v2061 = vmul.f32 %v1985, %v2060
          %v2062 = vlaneseq
          %v2063 = vshrl.u32 %v2062, 7
          %v2064 = vsub.s32 0, %v2063
          %v2065 = vrot.slane %v1938, %v2064
          %v2066 = vmul.f32 %v1994, %v2065
          %v2067 = vadd.f32 %v2061, %v2066
          %v2068 = vlaneseq
          %v2069 = vshrl.u32 %v2068, 7
          %v2070 = vsub.s32 0, %v2069
          %v2071 = vrot.slane %v1939, %v2070
          %v2072 = vmul.f32 %v2003, %v2071
          %v2073 = vadd.f32 %v2067, %v2072
          %v2074 = vlaneseq
          %v2075 = vshrl.u32 %v2074, 7
          %v2076 = vsub.s32 0, %v2075
          %v2077 = vrot.slane %v1940, %v2076
          %v2078 = vmul.f32 %v2008, %v2077
          %v2079 = vlaneseq
          %v2080 = vshrl.u32 %v2079, 7
          %v2081 = vsub.s32 0, %v2080
          %v2082 = vrot.slane %v1941, %v2081
          %v2083 = vmul.f32 %v2013, %v2082
          %v2084 = vadd.f32 %v2078, %v2083
          %v2085 = vlaneseq
          %v2086 = vshrl.u32 %v2085, 7
          %v2087 = vsub.s32 0, %v2086
          %v2088 = vrot.slane %v1942, %v2087
          %v2089 = vmul.f32 %v2018, %v2088
          %v2090 = vadd.f32 %v2084, %v2089
          %v2091 = vlaneseq
          %v2092 = vshrl.u32 %v2091, 7
          %v2093 = vsub.s32 0, %v2092
          %v2094 = vrot.slane %v1943, %v2093
          %v2095 = vmul.f32 %v2023, %v2094
          %v2096 = vlaneseq
          %v2097 = vshrl.u32 %v2096, 7
          %v2098 = vsub.s32 0, %v2097
          %v2099 = vrot.slane %v1944, %v2098
          %v2100 = vmul.f32 %v2028, %v2099
          %v2101 = vadd.f32 %v2095, %v2100
          %v2102 = vlaneseq
          %v2103 = vshrl.u32 %v2102, 7
          %v2104 = vsub.s32 0, %v2103
          %v2105 = vrot.slane %v1945, %v2104
          %v2106 = vmul.f32 %v2033, %v2105
          %v2107 = vadd.f32 %v2101, %v2106
          %vm2108 = vcmp.ge.f32.partialorder %v2073, 0.0
          %vm2109 = vcmp.ge.f32.partialorder %v2090, 0.0
          %vm2110 = vmand %vm2108, %vm2109
          %vm2111 = vcmp.ge.f32.partialorder %v2107, 0.0
          %vm2112 = vmand %vm2110, %vm2111
          %v2113 = vsel %vm1959, 1, 0
          %v2114 = vlaneseq
          %v2115 = vshrl.u32 %v2114, 7
          %v2116 = vsub.s32 0, %v2115
          %v2117 = vrot.slane %v2113, %v2116
          %vm2118 = vcmp.eq.s32.totalorder %v2117, 1
          %vm2119 = vmand %vm2112, %vm2118
          %v2120 = vlaneseq
          %v2121 = vshrl.u32 %v2120, 7
          %v2122 = vsub.s32 0, %v2121
          %v2123 = vrot.slane %v1946, %v2122
          %v2124 = vmul.f32 %v1985, %v2123
          %v2125 = vlaneseq
          %v2126 = vshrl.u32 %v2125, 7
          %v2127 = vsub.s32 0, %v2126
          %v2128 = vrot.slane %v1947, %v2127
          %v2129 = vmul.f32 %v1994, %v2128
          %v2130 = vadd.f32 %v2124, %v2129
          %v2131 = vlaneseq
          %v2132 = vshrl.u32 %v2131, 7
          %v2133 = vsub.s32 0, %v2132
          %v2134 = vrot.slane %v1948, %v2133
          %v2135 = vmul.f32 %v2003, %v2134
          %v2136 = vadd.f32 %v2130, %v2135
          %v2137 = vlaneseq
          %v2138 = vshrl.u32 %v2137, 7
          %v2139 = vsub.s32 0, %v2138
          %v2140 = vrot.slane %v1955, %v2139
          %v2141 = vmul.f32 %v2136, %v2140
          %v2142 = vmax.f32 %v2141, 0.0
          %v2143 = vmin.f32 %v2142, 1.0
          %v2144 = vmul.f32 %v2143, %v2123
          %v2145 = vsub.f32 %v1985, %v2144
          %v2146 = vmul.f32 %v2143, %v2128
          %v2147 = vsub.f32 %v1994, %v2146
          %v2148 = vmul.f32 %v2143, %v2134
          %v2149 = vsub.f32 %v2003, %v2148
          %v2150 = vmul.f32 %v2145, %v2145
          %v2151 = vmul.f32 %v2147, %v2147
          %v2152 = vadd.f32 %v2150, %v2151
          %v2153 = vmul.f32 %v2149, %v2149
          %v2154 = vadd.f32 %v2152, %v2153
          %v2155 = vlaneseq
          %v2156 = vshrl.u32 %v2155, 7
          %v2157 = vsub.s32 0, %v2156
          %v2158 = vrot.slane %v1949, %v2157
          %v2159 = vmul.f32 %v2008, %v2158
          %v2160 = vlaneseq
          %v2161 = vshrl.u32 %v2160, 7
          %v2162 = vsub.s32 0, %v2161
          %v2163 = vrot.slane %v1950, %v2162
          %v2164 = vmul.f32 %v2013, %v2163
          %v2165 = vadd.f32 %v2159, %v2164
          %v2166 = vlaneseq
          %v2167 = vshrl.u32 %v2166, 7
          %v2168 = vsub.s32 0, %v2167
          %v2169 = vrot.slane %v1951, %v2168
          %v2170 = vmul.f32 %v2018, %v2169
          %v2171 = vadd.f32 %v2165, %v2170
          %v2172 = vlaneseq
          %v2173 = vshrl.u32 %v2172, 7
          %v2174 = vsub.s32 0, %v2173
          %v2175 = vrot.slane %v1956, %v2174
          %v2176 = vmul.f32 %v2171, %v2175
          %v2177 = vmax.f32 %v2176, 0.0
          %v2178 = vmin.f32 %v2177, 1.0
          %v2179 = vmul.f32 %v2178, %v2158
          %v2180 = vsub.f32 %v2008, %v2179
          %v2181 = vmul.f32 %v2178, %v2163
          %v2182 = vsub.f32 %v2013, %v2181
          %v2183 = vmul.f32 %v2178, %v2169
          %v2184 = vsub.f32 %v2018, %v2183
          %v2185 = vmul.f32 %v2180, %v2180
          %v2186 = vmul.f32 %v2182, %v2182
          %v2187 = vadd.f32 %v2185, %v2186
          %v2188 = vmul.f32 %v2184, %v2184
          %v2189 = vadd.f32 %v2187, %v2188
          %v2190 = vlaneseq
          %v2191 = vshrl.u32 %v2190, 7
          %v2192 = vsub.s32 0, %v2191
          %v2193 = vrot.slane %v1952, %v2192
          %v2194 = vmul.f32 %v2023, %v2193
          %v2195 = vlaneseq
          %v2196 = vshrl.u32 %v2195, 7
          %v2197 = vsub.s32 0, %v2196
          %v2198 = vrot.slane %v1953, %v2197
          %v2199 = vmul.f32 %v2028, %v2198
          %v2200 = vadd.f32 %v2194, %v2199
          %v2201 = vlaneseq
          %v2202 = vshrl.u32 %v2201, 7
          %v2203 = vsub.s32 0, %v2202
          %v2204 = vrot.slane %v1954, %v2203
          %v2205 = vmul.f32 %v2033, %v2204
          %v2206 = vadd.f32 %v2200, %v2205
          %v2207 = vlaneseq
          %v2208 = vshrl.u32 %v2207, 7
          %v2209 = vsub.s32 0, %v2208
          %v2210 = vrot.slane %v1957, %v2209
          %v2211 = vmul.f32 %v2206, %v2210
          %v2212 = vmax.f32 %v2211, 0.0
          %v2213 = vmin.f32 %v2212, 1.0
          %v2214 = vmul.f32 %v2213, %v2193
          %v2215 = vsub.f32 %v2023, %v2214
          %v2216 = vmul.f32 %v2213, %v2198
          %v2217 = vsub.f32 %v2028, %v2216
          %v2218 = vmul.f32 %v2213, %v2204
          %v2219 = vsub.f32 %v2033, %v2218
          %v2220 = vmul.f32 %v2215, %v2215
          %v2221 = vmul.f32 %v2217, %v2217
          %v2222 = vadd.f32 %v2220, %v2221
          %v2223 = vmul.f32 %v2219, %v2219
          %v2224 = vadd.f32 %v2222, %v2223
          %v2225 = vmin.f32 %v2189, %v2224
          %v2226 = vmin.f32 %v2154, %v2225
          %v2227 = vsel %vm2119, %v2056, %v2226
          %2229 = vrot.lane.b32.xlu0 %v2227, 80
          %v2230 = vpop.permute.xlu0 %2229
          %v2232 = vmin.f32 %v2227, %v2230
          %v2233 = vrsqrt.pop %v2232
          %v2234 = vmul.f32 %v2232, %v2233
          %vm2235 = vcmp.eq.f32.partialorder %v2232, inf
          %v2236 = vsel %vm2235, %v2232, %v2234
          %vm2237 = vcmp.eq.f32.partialorder %v2232, 0.0
          %v2238 = vand.u32 %v2232, 2147483648
          %v2239 = vsel %vm2237, %v2238, %v2236
          %2241 = vset.pattern.permute.xlu0 3
          %2242 = vperm.xlu0 %2241, %v1975
          %v2243 = vpop.permute.xlu0 %2242
          %v2245 = vmul.f32 %v2239, %v2243
          %v2246 = vadd.f32 %v1968, %v2245
        $region76: #{point_triangle_distance.1} parent=35 // loop_footer
          %s1967 = sadd.s32 1, %s1963
        $region77: #{point_triangle_distance.1} parent=35 // loop_footer_branch
          %1962 = sbr.rel target = $region73
        $region78: #{point_triangle_distance.1} parent=35 // loop_exit
          _
        %v2247 = vld [vmem:[%s245 + $0x5] sm:$0x1]
        %v2248 = vsel %vm581, %v1968, 0.0
        %v2249 = vrot.slane %v2248, 4
        %v2250 = vadd.f32 %v2248, %v2249
        %v2251 = vrot.slane %v2250, 2
        %v2252 = vadd.f32 %v2250, %v2251
        %v2253 = vrot.slane %v2252, 1
        %v2254 = vadd.f32 %v2252, %v2253
        %v2255 = vadd.f32 %v2247, %v2254
        %2256 = vst.msk [vmem:[%s245 + $0x5] sm:$0x1] %vm590, %v2255
        %v2257 = vld [vmem:[%s218 + $0xd2] sm:$0x1]
        %v2258 = vld [vmem:[%s218 + $0xd3] sm:$0x1]
        %v2259 = vld [vmem:[%s218 + $0xd4] sm:$0x1]
        %v2260 = vld [vmem:[%s218 + $0xd5] sm:$0x1]
        %v2261 = vld [vmem:[%s218 + $0xd6] sm:$0x1]
        %v2262 = vld [vmem:[%s218 + $0xd7] sm:$0x1]
        %v2263 = vld [vmem:[%s218 + $0xd8] sm:$0x1]
        %v2264 = vld [vmem:[%s218 + $0xd9] sm:$0x1]
        %v2265 = vld [vmem:[%s218 + $0xda] sm:$0x1]
        %v2266 = vld [vmem:[%s218 + $0xdb] sm:$0x1]
        %v2267 = vld [vmem:[%s218 + $0xdc] sm:$0x1]
        %v2268 = vld [vmem:[%s218 + $0xdd] sm:$0x1]
        %v2269 = vld [vmem:[%s218 + $0xde] sm:$0x1]
        %v2270 = vld [vmem:[%s218 + $0xdf] sm:$0x1]
        %v2271 = vld [vmem:[%s218 + $0xe0] sm:$0x1]
        %v2272 = vld [vmem:[%s218 + $0xe1] sm:$0x1]
        %v2273 = vld [vmem:[%s218 + $0xe2] sm:$0x1]
        %v2274 = vld [vmem:[%s218 + $0xe3] sm:$0x1]
        %v2275 = vld [vmem:[%s218 + $0xe4] sm:$0x1]
        %v2276 = vld [vmem:[%s218 + $0xe5] sm:$0x1]
        %v2277 = vld [vmem:[%s218 + $0xe6] sm:$0x1]
        %v2278 = vld [vmem:[%s218 + $0xe7] sm:$0x1]
        %v2279 = vld [vmem:[%s218 + $0xe8] sm:$0x1]
        %v2280 = vld [vmem:[%s218 + $0xe9] sm:$0x1]
        %v2281 = vld [vmem:[%s218 + $0xea] sm:$0x1]
        %v2282 = vld [vmem:[%s218 + $0xeb] sm:$0x1]
        %v2283 = vld [vmem:[%s218 + $0xec] sm:$0x1]
        %v2284 = vld [vmem:[%s218 + $0xed] sm:$0x1]
        %v2285 = vld [vmem:[%s218 + $0xee] sm:$0x1]
        %v2286 = vld [vmem:[%s218 + $0xef] sm:$0x1]
        %v2287 = vld [vmem:[%s218 + $0xf0] sm:$0x1]
        %v2288 = vld [vmem:[%s218 + $0xf1] sm:$0x1]
        %v2289 = vld [vmem:[%s218 + $0xf2] sm:$0x1]
        %v2290 = vld [vmem:[%s218 + $0xf3] sm:$0x1]
        %v2291 = vld [vmem:[%s218 + $0xf4] sm:$0x1]
        %vm2292 = vcmp.gt.f32.partialorder %v2291, 0.5
        %s2293 = sadd.s32 %s293, 6
        %s2294 = scvt.s32.f32 %s2293
        loop: start=0, step=1, limit=16
        $region79: #{point_triangle_distance.1} parent=35 // loop_pre_header
          _
        $region80: #{point_triangle_distance.1} parent=35 // loop_header
          %s2296 = sphi 0, %s2300
          %p2297 = scmp.ge.s32.totalorder %s2296, 16
          %v2301 = vphi 0.0, %v2579
        $region81: #{point_triangle_distance.1} parent=35 // loop_header_branch
          %2299 = sbr.rel (%p2297) target = $region85
        $region82: #{point_triangle_distance.1} parent=35 // loop_body
          %s2302 = smul.u32 %s2296, 8
          %s2303 = scalar_lea.vmem %s232, %s2302
          %v2304 = vld [vmem:[%s2303] sm:$0xff]
          %v2305 = vstv %s2294
          %vm2306 = vcmp.eq.f32.partialorder %v2304, %v2305
          %v2307 = vsel %vm2306, 1, 0
          %v2308 = vcvt.s32.f32 %v2307
          %2310 = vset.pattern.permute.xlu0 0
          %2311 = vperm.xlu0 %2310, %v2304
          %v2312 = vpop.permute.xlu0 %2311
          %v2314 = vlaneseq
          %v2315 = vshrl.u32 %v2314, 7
          %v2316 = vsub.s32 0, %v2315
          %v2317 = vrot.slane %v2257, %v2316
          %v2318 = vsub.f32 %v2312, %v2317
          %2319 = vset.pattern.permute.xlu0 1
          %2320 = vperm.xlu0 %2319, %v2304
          %v2321 = vpop.permute.xlu0 %2320
          %v2323 = vlaneseq
          %v2324 = vshrl.u32 %v2323, 7
          %v2325 = vsub.s32 0, %v2324
          %v2326 = vrot.slane %v2258, %v2325
          %v2327 = vsub.f32 %v2321, %v2326
          %2328 = vset.pattern.permute.xlu0 2
          %2329 = vperm.xlu0 %2328, %v2304
          %v2330 = vpop.permute.xlu0 %2329
          %v2332 = vlaneseq
          %v2333 = vshrl.u32 %v2332, 7
          %v2334 = vsub.s32 0, %v2333
          %v2335 = vrot.slane %v2259, %v2334
          %v2336 = vsub.f32 %v2330, %v2335
          %v2337 = vlaneseq
          %v2338 = vshrl.u32 %v2337, 7
          %v2339 = vsub.s32 0, %v2338
          %v2340 = vrot.slane %v2260, %v2339
          %v2341 = vsub.f32 %v2312, %v2340
          %v2342 = vlaneseq
          %v2343 = vshrl.u32 %v2342, 7
          %v2344 = vsub.s32 0, %v2343
          %v2345 = vrot.slane %v2261, %v2344
          %v2346 = vsub.f32 %v2321, %v2345
          %v2347 = vlaneseq
          %v2348 = vshrl.u32 %v2347, 7
          %v2349 = vsub.s32 0, %v2348
          %v2350 = vrot.slane %v2262, %v2349
          %v2351 = vsub.f32 %v2330, %v2350
          %v2352 = vlaneseq
          %v2353 = vshrl.u32 %v2352, 7
          %v2354 = vsub.s32 0, %v2353
          %v2355 = vrot.slane %v2263, %v2354
          %v2356 = vsub.f32 %v2312, %v2355
          %v2357 = vlaneseq
          %v2358 = vshrl.u32 %v2357, 7
          %v2359 = vsub.s32 0, %v2358
          %v2360 = vrot.slane %v2264, %v2359
          %v2361 = vsub.f32 %v2321, %v2360
          %v2362 = vlaneseq
          %v2363 = vshrl.u32 %v2362, 7
          %v2364 = vsub.s32 0, %v2363
          %v2365 = vrot.slane %v2265, %v2364
          %v2366 = vsub.f32 %v2330, %v2365
          %v2367 = vlaneseq
          %v2368 = vshrl.u32 %v2367, 7
          %v2369 = vsub.s32 0, %v2368
          %v2370 = vrot.slane %v2266, %v2369
          %v2371 = vmul.f32 %v2318, %v2370
          %v2372 = vlaneseq
          %v2373 = vshrl.u32 %v2372, 7
          %v2374 = vsub.s32 0, %v2373
          %v2375 = vrot.slane %v2267, %v2374
          %v2376 = vmul.f32 %v2327, %v2375
          %v2377 = vadd.f32 %v2371, %v2376
          %v2378 = vlaneseq
          %v2379 = vshrl.u32 %v2378, 7
          %v2380 = vsub.s32 0, %v2379
          %v2381 = vrot.slane %v2268, %v2380
          %v2382 = vmul.f32 %v2336, %v2381
          %v2383 = vadd.f32 %v2377, %v2382
          %v2384 = vmul.f32 %v2383, %v2383
          %v2385 = vlaneseq
          %v2386 = vshrl.u32 %v2385, 7
          %v2387 = vsub.s32 0, %v2386
          %v2388 = vrot.slane %v2269, %v2387
          %v2389 = vmul.f32 %v2384, %v2388
          %v2390 = vlaneseq
          %v2391 = vshrl.u32 %v2390, 7
          %v2392 = vsub.s32 0, %v2391
          %v2393 = vrot.slane %v2270, %v2392
          %v2394 = vmul.f32 %v2318, %v2393
          %v2395 = vlaneseq
          %v2396 = vshrl.u32 %v2395, 7
          %v2397 = vsub.s32 0, %v2396
          %v2398 = vrot.slane %v2271, %v2397
          %v2399 = vmul.f32 %v2327, %v2398
          %v2400 = vadd.f32 %v2394, %v2399
          %v2401 = vlaneseq
          %v2402 = vshrl.u32 %v2401, 7
          %v2403 = vsub.s32 0, %v2402
          %v2404 = vrot.slane %v2272, %v2403
          %v2405 = vmul.f32 %v2336, %v2404
          %v2406 = vadd.f32 %v2400, %v2405
          %v2407 = vlaneseq
          %v2408 = vshrl.u32 %v2407, 7
          %v2409 = vsub.s32 0, %v2408
          %v2410 = vrot.slane %v2273, %v2409
          %v2411 = vmul.f32 %v2341, %v2410
          %v2412 = vlaneseq
          %v2413 = vshrl.u32 %v2412, 7
          %v2414 = vsub.s32 0, %v2413
          %v2415 = vrot.slane %v2274, %v2414
          %v2416 = vmul.f32 %v2346, %v2415
          %v2417 = vadd.f32 %v2411, %v2416
          %v2418 = vlaneseq
          %v2419 = vshrl.u32 %v2418, 7
          %v2420 = vsub.s32 0, %v2419
          %v2421 = vrot.slane %v2275, %v2420
          %v2422 = vmul.f32 %v2351, %v2421
          %v2423 = vadd.f32 %v2417, %v2422
          %v2424 = vlaneseq
          %v2425 = vshrl.u32 %v2424, 7
          %v2426 = vsub.s32 0, %v2425
          %v2427 = vrot.slane %v2276, %v2426
          %v2428 = vmul.f32 %v2356, %v2427
          %v2429 = vlaneseq
          %v2430 = vshrl.u32 %v2429, 7
          %v2431 = vsub.s32 0, %v2430
          %v2432 = vrot.slane %v2277, %v2431
          %v2433 = vmul.f32 %v2361, %v2432
          %v2434 = vadd.f32 %v2428, %v2433
          %v2435 = vlaneseq
          %v2436 = vshrl.u32 %v2435, 7
          %v2437 = vsub.s32 0, %v2436
          %v2438 = vrot.slane %v2278, %v2437
          %v2439 = vmul.f32 %v2366, %v2438
          %v2440 = vadd.f32 %v2434, %v2439
          %vm2441 = vcmp.ge.f32.partialorder %v2406, 0.0
          %vm2442 = vcmp.ge.f32.partialorder %v2423, 0.0
          %vm2443 = vmand %vm2441, %vm2442
          %vm2444 = vcmp.ge.f32.partialorder %v2440, 0.0
          %vm2445 = vmand %vm2443, %vm2444
          %v2446 = vsel %vm2292, 1, 0
          %v2447 = vlaneseq
          %v2448 = vshrl.u32 %v2447, 7
          %v2449 = vsub.s32 0, %v2448
          %v2450 = vrot.slane %v2446, %v2449
          %vm2451 = vcmp.eq.s32.totalorder %v2450, 1
          %vm2452 = vmand %vm2445, %vm2451
          %v2453 = vlaneseq
          %v2454 = vshrl.u32 %v2453, 7
          %v2455 = vsub.s32 0, %v2454
          %v2456 = vrot.slane %v2279, %v2455
          %v2457 = vmul.f32 %v2318, %v2456
          %v2458 = vlaneseq
          %v2459 = vshrl.u32 %v2458, 7
          %v2460 = vsub.s32 0, %v2459
          %v2461 = vrot.slane %v2280, %v2460
          %v2462 = vmul.f32 %v2327, %v2461
          %v2463 = vadd.f32 %v2457, %v2462
          %v2464 = vlaneseq
          %v2465 = vshrl.u32 %v2464, 7
          %v2466 = vsub.s32 0, %v2465
          %v2467 = vrot.slane %v2281, %v2466
          %v2468 = vmul.f32 %v2336, %v2467
          %v2469 = vadd.f32 %v2463, %v2468
          %v2470 = vlaneseq
          %v2471 = vshrl.u32 %v2470, 7
          %v2472 = vsub.s32 0, %v2471
          %v2473 = vrot.slane %v2288, %v2472
          %v2474 = vmul.f32 %v2469, %v2473
          %v2475 = vmax.f32 %v2474, 0.0
          %v2476 = vmin.f32 %v2475, 1.0
          %v2477 = vmul.f32 %v2476, %v2456
          %v2478 = vsub.f32 %v2318, %v2477
          %v2479 = vmul.f32 %v2476, %v2461
          %v2480 = vsub.f32 %v2327, %v2479
          %v2481 = vmul.f32 %v2476, %v2467
          %v2482 = vsub.f32 %v2336, %v2481
          %v2483 = vmul.f32 %v2478, %v2478
          %v2484 = vmul.f32 %v2480, %v2480
          %v2485 = vadd.f32 %v2483, %v2484
          %v2486 = vmul.f32 %v2482, %v2482
          %v2487 = vadd.f32 %v2485, %v2486
          %v2488 = vlaneseq
          %v2489 = vshrl.u32 %v2488, 7
          %v2490 = vsub.s32 0, %v2489
          %v2491 = vrot.slane %v2282, %v2490
          %v2492 = vmul.f32 %v2341, %v2491
          %v2493 = vlaneseq
          %v2494 = vshrl.u32 %v2493, 7
          %v2495 = vsub.s32 0, %v2494
          %v2496 = vrot.slane %v2283, %v2495
          %v2497 = vmul.f32 %v2346, %v2496
          %v2498 = vadd.f32 %v2492, %v2497
          %v2499 = vlaneseq
          %v2500 = vshrl.u32 %v2499, 7
          %v2501 = vsub.s32 0, %v2500
          %v2502 = vrot.slane %v2284, %v2501
          %v2503 = vmul.f32 %v2351, %v2502
          %v2504 = vadd.f32 %v2498, %v2503
          %v2505 = vlaneseq
          %v2506 = vshrl.u32 %v2505, 7
          %v2507 = vsub.s32 0, %v2506
          %v2508 = vrot.slane %v2289, %v2507
          %v2509 = vmul.f32 %v2504, %v2508
          %v2510 = vmax.f32 %v2509, 0.0
          %v2511 = vmin.f32 %v2510, 1.0
          %v2512 = vmul.f32 %v2511, %v2491
          %v2513 = vsub.f32 %v2341, %v2512
          %v2514 = vmul.f32 %v2511, %v2496
          %v2515 = vsub.f32 %v2346, %v2514
          %v2516 = vmul.f32 %v2511, %v2502
          %v2517 = vsub.f32 %v2351, %v2516
          %v2518 = vmul.f32 %v2513, %v2513
          %v2519 = vmul.f32 %v2515, %v2515
          %v2520 = vadd.f32 %v2518, %v2519
          %v2521 = vmul.f32 %v2517, %v2517
          %v2522 = vadd.f32 %v2520, %v2521
          %v2523 = vlaneseq
          %v2524 = vshrl.u32 %v2523, 7
          %v2525 = vsub.s32 0, %v2524
          %v2526 = vrot.slane %v2285, %v2525
          %v2527 = vmul.f32 %v2356, %v2526
          %v2528 = vlaneseq
          %v2529 = vshrl.u32 %v2528, 7
          %v2530 = vsub.s32 0, %v2529
          %v2531 = vrot.slane %v2286, %v2530
          %v2532 = vmul.f32 %v2361, %v2531
          %v2533 = vadd.f32 %v2527, %v2532
          %v2534 = vlaneseq
          %v2535 = vshrl.u32 %v2534, 7
          %v2536 = vsub.s32 0, %v2535
          %v2537 = vrot.slane %v2287, %v2536
          %v2538 = vmul.f32 %v2366, %v2537
          %v2539 = vadd.f32 %v2533, %v2538
          %v2540 = vlaneseq
          %v2541 = vshrl.u32 %v2540, 7
          %v2542 = vsub.s32 0, %v2541
          %v2543 = vrot.slane %v2290, %v2542
          %v2544 = vmul.f32 %v2539, %v2543
          %v2545 = vmax.f32 %v2544, 0.0
          %v2546 = vmin.f32 %v2545, 1.0
          %v2547 = vmul.f32 %v2546, %v2526
          %v2548 = vsub.f32 %v2356, %v2547
          %v2549 = vmul.f32 %v2546, %v2531
          %v2550 = vsub.f32 %v2361, %v2549
          %v2551 = vmul.f32 %v2546, %v2537
          %v2552 = vsub.f32 %v2366, %v2551
          %v2553 = vmul.f32 %v2548, %v2548
          %v2554 = vmul.f32 %v2550, %v2550
          %v2555 = vadd.f32 %v2553, %v2554
          %v2556 = vmul.f32 %v2552, %v2552
          %v2557 = vadd.f32 %v2555, %v2556
          %v2558 = vmin.f32 %v2522, %v2557
          %v2559 = vmin.f32 %v2487, %v2558
          %v2560 = vsel %vm2452, %v2389, %v2559
          %2562 = vrot.lane.b32.xlu0 %v2560, 80
          %v2563 = vpop.permute.xlu0 %2562
          %v2565 = vmin.f32 %v2560, %v2563
          %v2566 = vrsqrt.pop %v2565
          %v2567 = vmul.f32 %v2565, %v2566
          %vm2568 = vcmp.eq.f32.partialorder %v2565, inf
          %v2569 = vsel %vm2568, %v2565, %v2567
          %vm2570 = vcmp.eq.f32.partialorder %v2565, 0.0
          %v2571 = vand.u32 %v2565, 2147483648
          %v2572 = vsel %vm2570, %v2571, %v2569
          %2574 = vset.pattern.permute.xlu0 3
          %2575 = vperm.xlu0 %2574, %v2308
          %v2576 = vpop.permute.xlu0 %2575
          %v2578 = vmul.f32 %v2572, %v2576
          %v2579 = vadd.f32 %v2301, %v2578
        $region83: #{point_triangle_distance.1} parent=35 // loop_footer
          %s2300 = sadd.s32 1, %s2296
        $region84: #{point_triangle_distance.1} parent=35 // loop_footer_branch
          %2295 = sbr.rel target = $region80
        $region85: #{point_triangle_distance.1} parent=35 // loop_exit
          _
        %v2580 = vld [vmem:[%s245 + $0x6] sm:$0x1]
        %v2581 = vsel %vm581, %v2301, 0.0
        %v2582 = vrot.slane %v2581, 4
        %v2583 = vadd.f32 %v2581, %v2582
        %v2584 = vrot.slane %v2583, 2
        %v2585 = vadd.f32 %v2583, %v2584
        %v2586 = vrot.slane %v2585, 1
        %v2587 = vadd.f32 %v2585, %v2586
        %v2588 = vadd.f32 %v2580, %v2587
        %2589 = vst.msk [vmem:[%s245 + $0x6] sm:$0x1] %vm590, %v2588
        %v2590 = vld [vmem:[%s218 + $0xf5] sm:$0x1]
        %v2591 = vld [vmem:[%s218 + $0xf6] sm:$0x1]
        %v2592 = vld [vmem:[%s218 + $0xf7] sm:$0x1]
        %v2593 = vld [vmem:[%s218 + $0xf8] sm:$0x1]
        %v2594 = vld [vmem:[%s218 + $0xf9] sm:$0x1]
        %v2595 = vld [vmem:[%s218 + $0xfa] sm:$0x1]
        %v2596 = vld [vmem:[%s218 + $0xfb] sm:$0x1]
        %v2597 = vld [vmem:[%s218 + $0xfc] sm:$0x1]
        %v2598 = vld [vmem:[%s218 + $0xfd] sm:$0x1]
        %v2599 = vld [vmem:[%s218 + $0xfe] sm:$0x1]
        %v2600 = vld [vmem:[%s218 + $0xff] sm:$0x1]
        %v2601 = vld [vmem:[%s218 + $0x100] sm:$0x1]
        %v2602 = vld [vmem:[%s218 + $0x101] sm:$0x1]
        %v2603 = vld [vmem:[%s218 + $0x102] sm:$0x1]
        %v2604 = vld [vmem:[%s218 + $0x103] sm:$0x1]
        %v2605 = vld [vmem:[%s218 + $0x104] sm:$0x1]
        %v2606 = vld [vmem:[%s218 + $0x105] sm:$0x1]
        %v2607 = vld [vmem:[%s218 + $0x106] sm:$0x1]
        %v2608 = vld [vmem:[%s218 + $0x107] sm:$0x1]
        %v2609 = vld [vmem:[%s218 + $0x108] sm:$0x1]
        %v2610 = vld [vmem:[%s218 + $0x109] sm:$0x1]
        %v2611 = vld [vmem:[%s218 + $0x10a] sm:$0x1]
        %v2612 = vld [vmem:[%s218 + $0x10b] sm:$0x1]
        %v2613 = vld [vmem:[%s218 + $0x10c] sm:$0x1]
        %v2614 = vld [vmem:[%s218 + $0x10d] sm:$0x1]
        %v2615 = vld [vmem:[%s218 + $0x10e] sm:$0x1]
        %v2616 = vld [vmem:[%s218 + $0x10f] sm:$0x1]
        %v2617 = vld [vmem:[%s218 + $0x110] sm:$0x1]
        %v2618 = vld [vmem:[%s218 + $0x111] sm:$0x1]
        %v2619 = vld [vmem:[%s218 + $0x112] sm:$0x1]
        %v2620 = vld [vmem:[%s218 + $0x113] sm:$0x1]
        %v2621 = vld [vmem:[%s218 + $0x114] sm:$0x1]
        %v2622 = vld [vmem:[%s218 + $0x115] sm:$0x1]
        %v2623 = vld [vmem:[%s218 + $0x116] sm:$0x1]
        %v2624 = vld [vmem:[%s218 + $0x117] sm:$0x1]
        %vm2625 = vcmp.gt.f32.partialorder %v2624, 0.5
        %s2626 = sadd.s32 %s293, 7
        %s2627 = scvt.s32.f32 %s2626
        loop: start=0, step=1, limit=16
        $region86: #{point_triangle_distance.1} parent=35 // loop_pre_header
          _
        $region87: #{point_triangle_distance.1} parent=35 // loop_header
          %s2629 = sphi 0, %s2633
          %p2630 = scmp.ge.s32.totalorder %s2629, 16
          %v2634 = vphi 0.0, %v2912
        $region88: #{point_triangle_distance.1} parent=35 // loop_header_branch
          %2632 = sbr.rel (%p2630) target = $region92
        $region89: #{point_triangle_distance.1} parent=35 // loop_body
          %s2635 = smul.u32 %s2629, 8
          %s2636 = scalar_lea.vmem %s232, %s2635
          %v2637 = vld [vmem:[%s2636] sm:$0xff]
          %v2638 = vstv %s2627
          %vm2639 = vcmp.eq.f32.partialorder %v2637, %v2638
          %v2640 = vsel %vm2639, 1, 0
          %v2641 = vcvt.s32.f32 %v2640
          %2643 = vset.pattern.permute.xlu0 0
          %2644 = vperm.xlu0 %2643, %v2637
          %v2645 = vpop.permute.xlu0 %2644
          %v2647 = vlaneseq
          %v2648 = vshrl.u32 %v2647, 7
          %v2649 = vsub.s32 0, %v2648
          %v2650 = vrot.slane %v2590, %v2649
          %v2651 = vsub.f32 %v2645, %v2650
          %2652 = vset.pattern.permute.xlu0 1
          %2653 = vperm.xlu0 %2652, %v2637
          %v2654 = vpop.permute.xlu0 %2653
          %v2656 = vlaneseq
          %v2657 = vshrl.u32 %v2656, 7
          %v2658 = vsub.s32 0, %v2657
          %v2659 = vrot.slane %v2591, %v2658
          %v2660 = vsub.f32 %v2654, %v2659
          %2661 = vset.pattern.permute.xlu0 2
          %2662 = vperm.xlu0 %2661, %v2637
          %v2663 = vpop.permute.xlu0 %2662
          %v2665 = vlaneseq
          %v2666 = vshrl.u32 %v2665, 7
          %v2667 = vsub.s32 0, %v2666
          %v2668 = vrot.slane %v2592, %v2667
          %v2669 = vsub.f32 %v2663, %v2668
          %v2670 = vlaneseq
          %v2671 = vshrl.u32 %v2670, 7
          %v2672 = vsub.s32 0, %v2671
          %v2673 = vrot.slane %v2593, %v2672
          %v2674 = vsub.f32 %v2645, %v2673
          %v2675 = vlaneseq
          %v2676 = vshrl.u32 %v2675, 7
          %v2677 = vsub.s32 0, %v2676
          %v2678 = vrot.slane %v2594, %v2677
          %v2679 = vsub.f32 %v2654, %v2678
          %v2680 = vlaneseq
          %v2681 = vshrl.u32 %v2680, 7
          %v2682 = vsub.s32 0, %v2681
          %v2683 = vrot.slane %v2595, %v2682
          %v2684 = vsub.f32 %v2663, %v2683
          %v2685 = vlaneseq
          %v2686 = vshrl.u32 %v2685, 7
          %v2687 = vsub.s32 0, %v2686
          %v2688 = vrot.slane %v2596, %v2687
          %v2689 = vsub.f32 %v2645, %v2688
          %v2690 = vlaneseq
          %v2691 = vshrl.u32 %v2690, 7
          %v2692 = vsub.s32 0, %v2691
          %v2693 = vrot.slane %v2597, %v2692
          %v2694 = vsub.f32 %v2654, %v2693
          %v2695 = vlaneseq
          %v2696 = vshrl.u32 %v2695, 7
          %v2697 = vsub.s32 0, %v2696
          %v2698 = vrot.slane %v2598, %v2697
          %v2699 = vsub.f32 %v2663, %v2698
          %v2700 = vlaneseq
          %v2701 = vshrl.u32 %v2700, 7
          %v2702 = vsub.s32 0, %v2701
          %v2703 = vrot.slane %v2599, %v2702
          %v2704 = vmul.f32 %v2651, %v2703
          %v2705 = vlaneseq
          %v2706 = vshrl.u32 %v2705, 7
          %v2707 = vsub.s32 0, %v2706
          %v2708 = vrot.slane %v2600, %v2707
          %v2709 = vmul.f32 %v2660, %v2708
          %v2710 = vadd.f32 %v2704, %v2709
          %v2711 = vlaneseq
          %v2712 = vshrl.u32 %v2711, 7
          %v2713 = vsub.s32 0, %v2712
          %v2714 = vrot.slane %v2601, %v2713
          %v2715 = vmul.f32 %v2669, %v2714
          %v2716 = vadd.f32 %v2710, %v2715
          %v2717 = vmul.f32 %v2716, %v2716
          %v2718 = vlaneseq
          %v2719 = vshrl.u32 %v2718, 7
          %v2720 = vsub.s32 0, %v2719
          %v2721 = vrot.slane %v2602, %v2720
          %v2722 = vmul.f32 %v2717, %v2721
          %v2723 = vlaneseq
          %v2724 = vshrl.u32 %v2723, 7
          %v2725 = vsub.s32 0, %v2724
          %v2726 = vrot.slane %v2603, %v2725
          %v2727 = vmul.f32 %v2651, %v2726
          %v2728 = vlaneseq
          %v2729 = vshrl.u32 %v2728, 7
          %v2730 = vsub.s32 0, %v2729
          %v2731 = vrot.slane %v2604, %v2730
          %v2732 = vmul.f32 %v2660, %v2731
          %v2733 = vadd.f32 %v2727, %v2732
          %v2734 = vlaneseq
          %v2735 = vshrl.u32 %v2734, 7
          %v2736 = vsub.s32 0, %v2735
          %v2737 = vrot.slane %v2605, %v2736
          %v2738 = vmul.f32 %v2669, %v2737
          %v2739 = vadd.f32 %v2733, %v2738
          %v2740 = vlaneseq
          %v2741 = vshrl.u32 %v2740, 7
          %v2742 = vsub.s32 0, %v2741
          %v2743 = vrot.slane %v2606, %v2742
          %v2744 = vmul.f32 %v2674, %v2743
          %v2745 = vlaneseq
          %v2746 = vshrl.u32 %v2745, 7
          %v2747 = vsub.s32 0, %v2746
          %v2748 = vrot.slane %v2607, %v2747
          %v2749 = vmul.f32 %v2679, %v2748
          %v2750 = vadd.f32 %v2744, %v2749
          %v2751 = vlaneseq
          %v2752 = vshrl.u32 %v2751, 7
          %v2753 = vsub.s32 0, %v2752
          %v2754 = vrot.slane %v2608, %v2753
          %v2755 = vmul.f32 %v2684, %v2754
          %v2756 = vadd.f32 %v2750, %v2755
          %v2757 = vlaneseq
          %v2758 = vshrl.u32 %v2757, 7
          %v2759 = vsub.s32 0, %v2758
          %v2760 = vrot.slane %v2609, %v2759
          %v2761 = vmul.f32 %v2689, %v2760
          %v2762 = vlaneseq
          %v2763 = vshrl.u32 %v2762, 7
          %v2764 = vsub.s32 0, %v2763
          %v2765 = vrot.slane %v2610, %v2764
          %v2766 = vmul.f32 %v2694, %v2765
          %v2767 = vadd.f32 %v2761, %v2766
          %v2768 = vlaneseq
          %v2769 = vshrl.u32 %v2768, 7
          %v2770 = vsub.s32 0, %v2769
          %v2771 = vrot.slane %v2611, %v2770
          %v2772 = vmul.f32 %v2699, %v2771
          %v2773 = vadd.f32 %v2767, %v2772
          %vm2774 = vcmp.ge.f32.partialorder %v2739, 0.0
          %vm2775 = vcmp.ge.f32.partialorder %v2756, 0.0
          %vm2776 = vmand %vm2774, %vm2775
          %vm2777 = vcmp.ge.f32.partialorder %v2773, 0.0
          %vm2778 = vmand %vm2776, %vm2777
          %v2779 = vsel %vm2625, 1, 0
          %v2780 = vlaneseq
          %v2781 = vshrl.u32 %v2780, 7
          %v2782 = vsub.s32 0, %v2781
          %v2783 = vrot.slane %v2779, %v2782
          %vm2784 = vcmp.eq.s32.totalorder %v2783, 1
          %vm2785 = vmand %vm2778, %vm2784
          %v2786 = vlaneseq
          %v2787 = vshrl.u32 %v2786, 7
          %v2788 = vsub.s32 0, %v2787
          %v2789 = vrot.slane %v2612, %v2788
          %v2790 = vmul.f32 %v2651, %v2789
          %v2791 = vlaneseq
          %v2792 = vshrl.u32 %v2791, 7
          %v2793 = vsub.s32 0, %v2792
          %v2794 = vrot.slane %v2613, %v2793
          %v2795 = vmul.f32 %v2660, %v2794
          %v2796 = vadd.f32 %v2790, %v2795
          %v2797 = vlaneseq
          %v2798 = vshrl.u32 %v2797, 7
          %v2799 = vsub.s32 0, %v2798
          %v2800 = vrot.slane %v2614, %v2799
          %v2801 = vmul.f32 %v2669, %v2800
          %v2802 = vadd.f32 %v2796, %v2801
          %v2803 = vlaneseq
          %v2804 = vshrl.u32 %v2803, 7
          %v2805 = vsub.s32 0, %v2804
          %v2806 = vrot.slane %v2621, %v2805
          %v2807 = vmul.f32 %v2802, %v2806
          %v2808 = vmax.f32 %v2807, 0.0
          %v2809 = vmin.f32 %v2808, 1.0
          %v2810 = vmul.f32 %v2809, %v2789
          %v2811 = vsub.f32 %v2651, %v2810
          %v2812 = vmul.f32 %v2809, %v2794
          %v2813 = vsub.f32 %v2660, %v2812
          %v2814 = vmul.f32 %v2809, %v2800
          %v2815 = vsub.f32 %v2669, %v2814
          %v2816 = vmul.f32 %v2811, %v2811
          %v2817 = vmul.f32 %v2813, %v2813
          %v2818 = vadd.f32 %v2816, %v2817
          %v2819 = vmul.f32 %v2815, %v2815
          %v2820 = vadd.f32 %v2818, %v2819
          %v2821 = vlaneseq
          %v2822 = vshrl.u32 %v2821, 7
          %v2823 = vsub.s32 0, %v2822
          %v2824 = vrot.slane %v2615, %v2823
          %v2825 = vmul.f32 %v2674, %v2824
          %v2826 = vlaneseq
          %v2827 = vshrl.u32 %v2826, 7
          %v2828 = vsub.s32 0, %v2827
          %v2829 = vrot.slane %v2616, %v2828
          %v2830 = vmul.f32 %v2679, %v2829
          %v2831 = vadd.f32 %v2825, %v2830
          %v2832 = vlaneseq
          %v2833 = vshrl.u32 %v2832, 7
          %v2834 = vsub.s32 0, %v2833
          %v2835 = vrot.slane %v2617, %v2834
          %v2836 = vmul.f32 %v2684, %v2835
          %v2837 = vadd.f32 %v2831, %v2836
          %v2838 = vlaneseq
          %v2839 = vshrl.u32 %v2838, 7
          %v2840 = vsub.s32 0, %v2839
          %v2841 = vrot.slane %v2622, %v2840
          %v2842 = vmul.f32 %v2837, %v2841
          %v2843 = vmax.f32 %v2842, 0.0
          %v2844 = vmin.f32 %v2843, 1.0
          %v2845 = vmul.f32 %v2844, %v2824
          %v2846 = vsub.f32 %v2674, %v2845
          %v2847 = vmul.f32 %v2844, %v2829
          %v2848 = vsub.f32 %v2679, %v2847
          %v2849 = vmul.f32 %v2844, %v2835
          %v2850 = vsub.f32 %v2684, %v2849
          %v2851 = vmul.f32 %v2846, %v2846
          %v2852 = vmul.f32 %v2848, %v2848
          %v2853 = vadd.f32 %v2851, %v2852
          %v2854 = vmul.f32 %v2850, %v2850
          %v2855 = vadd.f32 %v2853, %v2854
          %v2856 = vlaneseq
          %v2857 = vshrl.u32 %v2856, 7
          %v2858 = vsub.s32 0, %v2857
          %v2859 = vrot.slane %v2618, %v2858
          %v2860 = vmul.f32 %v2689, %v2859
          %v2861 = vlaneseq
          %v2862 = vshrl.u32 %v2861, 7
          %v2863 = vsub.s32 0, %v2862
          %v2864 = vrot.slane %v2619, %v2863
          %v2865 = vmul.f32 %v2694, %v2864
          %v2866 = vadd.f32 %v2860, %v2865
          %v2867 = vlaneseq
          %v2868 = vshrl.u32 %v2867, 7
          %v2869 = vsub.s32 0, %v2868
          %v2870 = vrot.slane %v2620, %v2869
          %v2871 = vmul.f32 %v2699, %v2870
          %v2872 = vadd.f32 %v2866, %v2871
          %v2873 = vlaneseq
          %v2874 = vshrl.u32 %v2873, 7
          %v2875 = vsub.s32 0, %v2874
          %v2876 = vrot.slane %v2623, %v2875
          %v2877 = vmul.f32 %v2872, %v2876
          %v2878 = vmax.f32 %v2877, 0.0
          %v2879 = vmin.f32 %v2878, 1.0
          %v2880 = vmul.f32 %v2879, %v2859
          %v2881 = vsub.f32 %v2689, %v2880
          %v2882 = vmul.f32 %v2879, %v2864
          %v2883 = vsub.f32 %v2694, %v2882
          %v2884 = vmul.f32 %v2879, %v2870
          %v2885 = vsub.f32 %v2699, %v2884
          %v2886 = vmul.f32 %v2881, %v2881
          %v2887 = vmul.f32 %v2883, %v2883
          %v2888 = vadd.f32 %v2886, %v2887
          %v2889 = vmul.f32 %v2885, %v2885
          %v2890 = vadd.f32 %v2888, %v2889
          %v2891 = vmin.f32 %v2855, %v2890
          %v2892 = vmin.f32 %v2820, %v2891
          %v2893 = vsel %vm2785, %v2722, %v2892
          %2895 = vrot.lane.b32.xlu0 %v2893, 80
          %v2896 = vpop.permute.xlu0 %2895
          %v2898 = vmin.f32 %v2893, %v2896
          %v2899 = vrsqrt.pop %v2898
          %v2900 = vmul.f32 %v2898, %v2899
          %vm2901 = vcmp.eq.f32.partialorder %v2898, inf
          %v2902 = vsel %vm2901, %v2898, %v2900
          %vm2903 = vcmp.eq.f32.partialorder %v2898, 0.0
          %v2904 = vand.u32 %v2898, 2147483648
          %v2905 = vsel %vm2903, %v2904, %v2902
          %2907 = vset.pattern.permute.xlu0 3
          %2908 = vperm.xlu0 %2907, %v2641
          %v2909 = vpop.permute.xlu0 %2908
          %v2911 = vmul.f32 %v2905, %v2909
          %v2912 = vadd.f32 %v2634, %v2911
        $region90: #{point_triangle_distance.1} parent=35 // loop_footer
          %s2633 = sadd.s32 1, %s2629
        $region91: #{point_triangle_distance.1} parent=35 // loop_footer_branch
          %2628 = sbr.rel target = $region87
        $region92: #{point_triangle_distance.1} parent=35 // loop_exit
          _
        %v2913 = vld [vmem:[%s245 + $0x7] sm:$0x1]
        %v2914 = vsel %vm581, %v2634, 0.0
        %v2915 = vrot.slane %v2914, 4
        %v2916 = vadd.f32 %v2914, %v2915
        %v2917 = vrot.slane %v2916, 2
        %v2918 = vadd.f32 %v2916, %v2917
        %v2919 = vrot.slane %v2918, 1
        %v2920 = vadd.f32 %v2918, %v2919
        %v2921 = vadd.f32 %v2913, %v2920
        %2922 = vst.msk [vmem:[%s245 + $0x7] sm:$0x1] %vm590, %v2921
      $region36: #{point_triangle_distance.1} parent=27 // pred_fallthru
        _
      %p2923 = scmp.lt.s32.totalorder %s29, 7
      %s2924 = scalar_select %p2923, %s29, 7
      %s2925 = smul.addr %s2924, 8
      %s2926 = scalar_lea.vmem %s4, %s2925
      // Predicated region
      $region93: #{point_triangle_distance.1} parent=27 // pred_check
        %p2927 = pneg %p123
      $region94: #{point_triangle_distance.1} parent=27 // pred_check_branch
        %2929 = sbr.rel (%p2927) target = $region96
      $region95: #{point_triangle_distance.1} parent=27 // pred_region
        _
      $region96: #{point_triangle_distance.1} parent=27 // pred_fallthru
        _
    $region28: #{point_triangle_distance.1} parent=5 // pred_fallthru
      _
    %p2930 = scmp.le.s32.totalorder 2, %s20
    // Predicated region
    $region97: #{point_triangle_distance.1} parent=5 // pred_check
      %p2931 = pneg %p2930
    $region98: #{point_triangle_distance.1} parent=5 // pred_check_branch
      %2933 = sbr.rel (%p2931) target = $region100
    $region99: #{point_triangle_distance.1} parent=5 // pred_region
      %s2934 = ssub.s32 %s20, 2
      // Predicated region
      $region101: #{point_triangle_distance.1} parent=99 // pred_check
        %p2935 = pneg %p129
      $region102: #{point_triangle_distance.1} parent=99 // pred_check_branch
        %2937 = sbr.rel (%p2935) target = $region104
      $region103: #{point_triangle_distance.1} parent=99 // pred_region
        %p2938 = scmp.lt.s32.totalorder %s31, 7
        %s2939 = scalar_select %p2938, %s31, 7
        %s2940 = smul.addr %s2939, 8
        %s2941 = scalar_lea.vmem %s4, %s2940
      $region104: #{point_triangle_distance.1} parent=99 // pred_fallthru
        _
    $region100: #{point_triangle_distance.1} parent=5 // pred_fallthru
      _
  $region6: #{point_triangle_distance.1} parent=0 // loop_footer
    %s24 = sadd.s32 1, %s20
  $region7: #{point_triangle_distance.1} parent=0 // loop_footer_branch
    %19 = sbr.rel target = $region3
  $region8: #{point_triangle_distance.1} parent=0 // loop_exit
    _

</llo_original>
